<compile_context>
chip_gen: v7x
topology: tpu7x:2x2x1
jax: 0.10.0
libtpu: 0.0.40
codegen_flags: <defaults>
</compile_context>

<pallas_src>
import functools

import jax
import jax.numpy as jnp
from jax import lax
from jax.experimental import pallas as pl
from jax.experimental.pallas import tpu as pltpu

_EPS = 1e-5  # nn.BatchNorm2d default eps


def _bn_relu_conv3x3_kernel(x_ref, scale_ref, shift_ref, w_ref, cb_ref, *refs,
                            compute_stats):
    """Fused: o = conv3x3(relu(x * scale + shift), padding=1) + conv_bias.

    Optionally accumulates per-channel (sum, sum_of_squares) of o across the batch grid axis.

    x_ref    : (H, W, Cin)       input tile (batch dim squeezed by BlockSpec)
    scale_ref: (1, Cin)          folded BN scale = gamma / sqrt(var + eps)
    shift_ref: (1, Cin)          folded BN shift = beta - mean * scale
    w_ref    : (9, Cin, Cout)    conv taps (mxu_dtype), tap index = dy*3 + dx (HWIO flattened)
    cb_ref   : (1, Cout)         conv bias (f32)
    refs     : (o_ref, stats_ref, hpad_ref) if compute_stats else (o_ref, hpad_ref)
      o_ref    : (H, W, Cout)
      stats_ref: (2, Cout)       [sum(o), sum(o^2)] accumulator (resident across the grid)
      hpad_ref : (H+2, W+2, Cin) zero-padded activation scratch (VMEM, mxu_dtype)
    """
    if compute_stats:
        o_ref, stats_ref, hpad_ref = refs
    else:
        o_ref, hpad_ref = refs
        stats_ref = None

    H, W, Cin = x_ref.shape
    Cout = o_ref.shape[-1]

    # Zero the padded scratch (and stats accumulator) exactly once: the (H, W) interior of
    # hpad_ref is fully rewritten every grid step, only the 1-pixel zero border must persist
    # (scratch buffers persist across grid iterations; batch axis is "arbitrary").
    @pl.when(pl.program_id(0) == 0)
    def _init():
        hpad_ref[...] = jnp.zeros_like(hpad_ref)
        if compute_stats:
            stats_ref[...] = jnp.zeros_like(stats_ref)

    # Folded BatchNorm affine + ReLU in f32 (VPU); single cast to the MXU operand dtype,
    # written into the zero-padded interior.
    h = jnp.maximum(x_ref[...] * scale_ref[...] + shift_ref[...], 0.0)
    hpad_ref[1:H + 1, 1:W + 1, :] = h.astype(hpad_ref.dtype)

    # 3x3 SAME conv as 9 whole-plane matmuls: (H*W, Cin) @ (Cin, Cout) per tap.
    # Bias is folded into the accumulator init (one broadcast, hoisted out of the tap loop).
    acc = jnp.broadcast_to(cb_ref[...].astype(jnp.float32), (H * W, Cout))
    for dy in range(3):
        for dx in range(3):
            patch = hpad_ref[dy:dy + H, dx:dx + W, :].reshape(H * W, Cin)
            acc = acc + jnp.dot(patch, w_ref[dy * 3 + dx],
                                preferred_element_type=jnp.float32)

    o_ref[...] = acc.reshape(H, W, Cout).astype(o_ref.dtype)

    if compute_stats:
        # Per-channel statistics of the conv output (for the next BatchNorm), accumulated
        # across the batch so the wrapper never re-reads this output from HBM.
        s1 = jnp.sum(acc, axis=0, keepdims=True)            # (1, Cout)
        s2 = jnp.sum(acc * acc, axis=0, keepdims=True)       # (1, Cout)
        stats_ref[0:1, :] = stats_ref[0:1, :] + s1
        stats_ref[1:2, :] = stats_ref[1:2, :] + s2


def _fused_bn_relu_conv(x_nhwc, scale, shift, w_hwio, conv_bias, *,
                        mxu_dtype=jnp.float32, compute_stats=True):
    """One fused BN->ReLU->Conv3x3 stage.

    Returns (y_nhwc f32, stats (2, Cout) f32) if compute_stats else y_nhwc.
    """
    N, H, W, Cin = x_nhwc.shape
    Cout = w_hwio.shape[-1]
    w_taps = w_hwio.reshape(9, Cin, Cout).astype(mxu_dtype)  # tap = dy*3 + dx
    scale2d = scale.reshape(1, Cin).astype(jnp.float32)
    shift2d = shift.reshape(1, Cin).astype(jnp.float32)
    cb2d = conv_bias.reshape(1, Cout).astype(jnp.float32)

    # Raise the scoped VMEM limit so full-image blocks stay resident (clamped well below
    # every generation's physical VMEM).
    mxu_itemsize = jnp.dtype(mxu_dtype).itemsize
    in_tile = H * W * Cin * 4
    out_tile = H * W * Cout * 4
    hpad_bytes = (H + 2) * (W + 2) * Cin * mxu_itemsize
    w_bytes = 9 * Cin * Cout * mxu_itemsize
    need = 2 * (in_tile + out_tile) + hpad_bytes + w_bytes + (1 << 16)
    vmem_limit = int(min(max(2 * need, 16 * 2 ** 20), 48 * 2 ** 20))
    # TODO(synk): at large H/W/C (e.g. 128x128x256) this full-image-per-step blocking exceeds
    # v7x's 64 MiB VMEM; tile the grid over H with a 1-row halo in that regime.

    cost = pl.CostEstimate(
        flops=2 * N * H * W * 9 * Cin * Cout,
        transcendentals=0,
        bytes_accessed=N * (in_tile + out_tile) + w_bytes + (2 * Cin + 3 * Cout) * 4,
    )

    in_specs = [
        pl.BlockSpec((None, H, W, Cin), lambda n: (n, 0, 0, 0)),
        pl.BlockSpec((1, Cin), lambda n: (0, 0)),
        pl.BlockSpec((1, Cin), lambda n: (0, 0)),
        pl.BlockSpec((9, Cin, Cout), lambda n: (0, 0, 0)),
        pl.BlockSpec((1, Cout), lambda n: (0, 0)),
    ]
    y_spec = pl.BlockSpec((None, H, W, Cout), lambda n: (n, 0, 0, 0))
    y_shape = jax.ShapeDtypeStruct((N, H, W, Cout), jnp.float32)

    if compute_stats:
        out_specs = [y_spec,
                     pl.BlockSpec((2, Cout), lambda n: (0, 0))]   # resident accumulator
        out_shape = (y_shape, jax.ShapeDtypeStruct((2, Cout), jnp.float32))
    else:
        out_specs = y_spec
        out_shape = y_shape

    grid_spec = pltpu.PrefetchScalarGridSpec(
        num_scalar_prefetch=0,
        grid=(N,),  # one grid step per batch element
        in_specs=in_specs,
        out_specs=out_specs,
        scratch_shapes=[pltpu.VMEM((H + 2, W + 2, Cin), mxu_dtype)],
    )

    result = pl.pallas_call(
        functools.partial(_bn_relu_conv3x3_kernel, compute_stats=compute_stats),
        out_shape=out_shape,
        grid_spec=grid_spec,
        compiler_params=pltpu.CompilerParams(
            # batch axis carries scratch reuse (and the stats accumulation) -> "arbitrary"
            dimension_semantics=("arbitrary",),
            vmem_limit_bytes=vmem_limit),
        cost_estimate=cost,
    )(x_nhwc.astype(jnp.float32), scale2d, shift2d, w_taps, cb2d)
    return result


def seg_block_forward_nhwc(x_nhwc, params, *, mxu_dtype=jnp.float32):
    """SegBlock forward on NHWC input. Returns NHWC output (f32)."""
    N, H, W, _ = x_nhwc.shape
    count = N * H * W

    # Stage-1 train-mode BatchNorm statistics over (N, H, W) of the input (biased variance).
    # TODO(synk): running-stat (momentum) buffer updates are stateful and omitted; they do
    # not affect the forward output.
    mean1 = jnp.mean(x_nhwc, axis=(0, 1, 2))
    var1 = jnp.var(x_nhwc, axis=(0, 1, 2))
    s1 = params["bn1_gamma"] / jnp.sqrt(var1 + _EPS)
    b1 = params["bn1_beta"] - mean1 * s1
    y1, stats1 = _fused_bn_relu_conv(x_nhwc, s1, b1, params["w1"], params["b1"],
                                     mxu_dtype=mxu_dtype, compute_stats=True)

    # Stage-2 BatchNorm statistics from the per-channel sums emitted by stage 1
    # (no extra HBM pass over the intermediate activation y1).
    mean2 = stats1[0] / count
    var2 = jnp.maximum(stats1[1] / count - mean2 * mean2, 0.0)
    s2 = params["bn2_gamma"] / jnp.sqrt(var2 + _EPS)
    b2 = params["bn2_beta"] - mean2 * s2
    y2 = _fused_bn_relu_conv(y1, s2, b2, params["w2"], params["b2"],
                             mxu_dtype=mxu_dtype, compute_stats=False)
    return y2


def seg_block_forward(x_nchw, params, *, mxu_dtype=jnp.float32):
    """Pallas implementation of SegBlock.forward. NCHW in -> NCHW out (PyTorch boundary)."""
    x = jnp.transpose(x_nchw, (0, 2, 3, 1))            # NCHW -> NHWC
    y = seg_block_forward_nhwc(x, params, mxu_dtype=mxu_dtype)
    return jnp.transpose(y, (0, 3, 1, 2))              # NHWC -> NCHW


def _reference_forward(x_nchw, params, mxu_dtype=jnp.float32):
    """Pure-JAX reference (same semantics as the PyTorch module in train mode)."""
    x = jnp.transpose(x_nchw, (0, 2, 3, 1))

    def bn_relu(h, gamma, beta):
        mean = jnp.mean(h, axis=(0, 1, 2))
        var = jnp.var(h, axis=(0, 1, 2))
        return jax.nn.relu((h - mean) / jnp.sqrt(var + _EPS) * gamma + beta)

    def conv(h, w, b):
        return lax.conv_general_dilated(
            h.astype(mxu_dtype), w.astype(mxu_dtype), (1, 1), "SAME",
            dimension_numbers=("NHWC", "HWIO", "NHWC"),
            preferred_element_type=jnp.float32) + b

    h = conv(bn_relu(x, params["bn1_gamma"], params["bn1_beta"]), params["w1"], params["b1"])
    h = conv(bn_relu(h, params["bn2_gamma"], params["bn2_beta"]), params["w2"], params["b2"])
    return jnp.transpose(h, (0, 3, 1, 2))


if __name__ == "__main__":
    N, Cin, Cout, H, W = 2, 4, 8, 16, 16
    key = jax.random.PRNGKey(0)
    ks = jax.random.split(key, 9)
    params = {
        "bn1_gamma": 1.0 + 0.1 * jax.random.normal(ks[0], (Cin,), jnp.float32),
        "bn1_beta": 0.1 * jax.random.normal(ks[1], (Cin,), jnp.float32),
        "w1": 0.2 * jax.random.normal(ks[2], (3, 3, Cin, Cout), jnp.float32),   # HWIO
        "b1": 0.05 * jax.random.normal(ks[3], (Cout,), jnp.float32),
        "bn2_gamma": 1.0 + 0.1 * jax.random.normal(ks[4], (Cout,), jnp.float32),
        "bn2_beta": 0.1 * jax.random.normal(ks[5], (Cout,), jnp.float32),
        "w2": 0.2 * jax.random.normal(ks[6], (3, 3, Cout, Cout), jnp.float32),  # HWIO
        "b2": 0.05 * jax.random.normal(ks[7], (Cout,), jnp.float32),
    }
    x = jax.random.normal(ks[8], (N, Cin, H, W), jnp.float32)  # NCHW, like the PyTorch module

    # Exact-semantics path (f32 MXU operands) vs pure-JAX reference.
    out_f32 = jax.block_until_ready(seg_block_forward(x, params, mxu_dtype=jnp.float32))
    ref_f32 = jax.block_until_ready(_reference_forward(x, params, jnp.float32))
    assert out_f32.shape == (N, Cout, H, W), out_f32.shape
    err_f32 = float(jnp.max(jnp.abs(out_f32 - ref_f32)))
    assert jnp.allclose(out_f32, ref_f32, atol=1e-3, rtol=1e-3), f"f32 max abs err = {err_f32}"

    # bf16 MXU-operand fast path (v6e/v7x; f32 accumulate) vs a bf16-cast reference.
    out_bf16 = jax.block_until_ready(seg_block_forward(x, params, mxu_dtype=jnp.bfloat16))
    ref_bf16 = jax.block_until_ready(_reference_forward(x, params, jnp.bfloat16))
    err_bf16 = float(jnp.max(jnp.abs(out_bf16 - ref_bf16)))
    assert jnp.all(jnp.isfinite(out_bf16))
    assert jnp.allclose(out_bf16, ref_bf16, atol=1e-1, rtol=1e-1), f"bf16 max abs err = {err_bf16}"

    print("KERNEL_OK")
</pallas_src>

<mosaic_0001>
module attributes {stable_mosaic.version = 11 : i64} {
  func.func @_bn_relu_conv3x3_kernel(%arg0: i32, %arg1: memref<1x16x16x4xf32, #tpu.memory_space<vmem>>, %arg2: memref<1x4xf32, #tpu.memory_space<vmem>>, %arg3: memref<1x4xf32, #tpu.memory_space<vmem>>, %arg4: memref<9x4x8xf32, #tpu.memory_space<vmem>>, %arg5: memref<1x8xf32, #tpu.memory_space<vmem>>, %arg6: memref<1x16x16x8xf32, #tpu.memory_space<vmem>>, %arg7: memref<2x8xf32, #tpu.memory_space<vmem>>, %arg8: memref<18x18x4xf32, #tpu.memory_space<vmem>>) attributes {dimension_semantics = [#tpu.dimension_semantics<arbitrary>], iteration_bounds = array<i64: 2>, scalar_prefetch = 0 : i64, scratch_operands = 1 : i64, tpu.core_type = #tpu.core_type<tc>, window_params = [{transform_indices = @transform_0, window_bounds = array<i64: 1, 16, 16, 4>}, {pipeline_mode = #tpu.pipeline_mode<synchronous>, transform_indices = @transform_1, window_bounds = array<i64: 1, 4>}, {pipeline_mode = #tpu.pipeline_mode<synchronous>, transform_indices = @transform_2, window_bounds = array<i64: 1, 4>}, {pipeline_mode = #tpu.pipeline_mode<synchronous>, transform_indices = @transform_3, window_bounds = array<i64: 9, 4, 8>}, {pipeline_mode = #tpu.pipeline_mode<synchronous>, transform_indices = @transform_4, window_bounds = array<i64: 1, 8>}, {transform_indices = @transform_5, window_bounds = array<i64: 1, 16, 16, 8>}, {pipeline_mode = #tpu.pipeline_mode<synchronous>, transform_indices = @transform_6, window_bounds = array<i64: 2, 8>}]} {
    %c0_i32 = arith.constant 0 : i32
    %0 = arith.cmpi eq, %arg0, %c0_i32 : i32
    %1 = arith.extui %0 : i1 to i32
    %c0_i32_0 = arith.constant 0 : i32
    %2 = arith.cmpi ne, %1, %c0_i32_0 : i32
    scf.if %2 {
      %cst_82 = arith.constant 0.000000e+00 : f32
      %88 = vector.broadcast %cst_82 : f32 to vector<18x18x4xf32>
      %c0_83 = arith.constant 0 : index
      %c0_84 = arith.constant 0 : index
      %c0_85 = arith.constant 0 : index
      %89 = vector.load %arg8[%c0_83, %c0_84, %c0_85] : memref<18x18x4xf32, #tpu.memory_space<vmem>>, vector<18x18x4xf32>
      tpu.vector_store %arg8[%c0_83, %c0_84, %c0_85], %88 {strides = array<i32>} : memref<18x18x4xf32, #tpu.memory_space<vmem>>, vector<18x18x4xf32>,
      %cst_86 = arith.constant 0.000000e+00 : f32
      %90 = vector.broadcast %cst_86 : f32 to vector<2x8xf32>
      %c0_87 = arith.constant 0 : index
      %c0_88 = arith.constant 0 : index
      %91 = vector.load %arg7[%c0_87, %c0_88] : memref<2x8xf32, #tpu.memory_space<vmem>>, vector<2x8xf32>
      tpu.vector_store %arg7[%c0_87, %c0_88], %90 {strides = array<i32>} : memref<2x8xf32, #tpu.memory_space<vmem>>, vector<2x8xf32>,
    } else {
    }
    %c0 = arith.constant 0 : index
    %c0_1 = arith.constant 0 : index
    %c0_2 = arith.constant 0 : index
    %c0_3 = arith.constant 0 : index
    %3 = vector.load %arg1[%c0, %c0_1, %c0_2, %c0_3] : memref<1x16x16x4xf32, #tpu.memory_space<vmem>>, vector<1x16x16x4xf32>
    %4 = vector.shape_cast %3 : vector<1x16x16x4xf32> to vector<16x16x4xf32>
    %c0_4 = arith.constant 0 : index
    %c0_5 = arith.constant 0 : index
    %5 = vector.load %arg2[%c0_4, %c0_5] : memref<1x4xf32, #tpu.memory_space<vmem>>, vector<1x4xf32>
    %6 = vector.shape_cast %5 : vector<1x4xf32> to vector<1x1x4xf32>
    %7 = vector.broadcast %6 : vector<1x1x4xf32> to vector<16x16x4xf32>
    %8 = arith.mulf %4, %7 : vector<16x16x4xf32>
    %c0_6 = arith.constant 0 : index
    %c0_7 = arith.constant 0 : index
    %9 = vector.load %arg3[%c0_6, %c0_7] : memref<1x4xf32, #tpu.memory_space<vmem>>, vector<1x4xf32>
    %10 = vector.shape_cast %9 : vector<1x4xf32> to vector<1x1x4xf32>
    %11 = vector.broadcast %10 : vector<1x1x4xf32> to vector<16x16x4xf32>
    %12 = arith.addf %8, %11 : vector<16x16x4xf32>
    %cst = arith.constant 0.000000e+00 : f32
    %13 = vector.broadcast %cst : f32 to vector<16x16x4xf32>
    %14 = arith.maximumf %12, %13 : vector<16x16x4xf32>
    %c1 = arith.constant 1 : index
    %c1_8 = arith.constant 1 : index
    %c0_9 = arith.constant 0 : index
    %15 = vector.load %arg8[%c1, %c1_8, %c0_9] : memref<18x18x4xf32, #tpu.memory_space<vmem>>, vector<16x16x4xf32>
    tpu.vector_store %arg8[%c1, %c1_8, %c0_9], %14 {strides = array<i32>} : memref<18x18x4xf32, #tpu.memory_space<vmem>>, vector<16x16x4xf32>,
    %c0_10 = arith.constant 0 : index
    %c0_11 = arith.constant 0 : index
    %16 = vector.load %arg5[%c0_10, %c0_11] : memref<1x8xf32, #tpu.memory_space<vmem>>, vector<1x8xf32>
    %17 = vector.shape_cast %16 : vector<1x8xf32> to vector<1x8xf32>
    %18 = vector.broadcast %17 : vector<1x8xf32> to vector<256x8xf32>
    %c0_12 = arith.constant 0 : index
    %c0_13 = arith.constant 0 : index
    %c0_14 = arith.constant 0 : index
    %19 = vector.load %arg8[%c0_12, %c0_13, %c0_14] : memref<18x18x4xf32, #tpu.memory_space<vmem>>, vector<16x16x4xf32>
    %20 = vector.shape_cast %19 : vector<16x16x4xf32> to vector<256x4xf32>
    %c0_15 = arith.constant 0 : index
    %c0_16 = arith.constant 0 : index
    %c0_17 = arith.constant 0 : index
    %21 = vector.load %arg4[%c0_15, %c0_16, %c0_17] : memref<9x4x8xf32, #tpu.memory_space<vmem>>, vector<1x4x8xf32>
    %22 = vector.shape_cast %21 : vector<1x4x8xf32> to vector<4x8xf32>
    %cst_18 = arith.constant dense<0.000000e+00> : vector<256x8xf32>
    %23 = tpu.matmul %20, %22, %cst_18 {dimension_numbers = #tpu.dot_dimension_numbers<[1], [0], [0], [1], [0, 0, 1, 1], [], []>} : vector<256x4xf32>, vector<4x8xf32>, vector<256x8xf32> -> vector<256x8xf32>
    %24 = arith.addf %18, %23 : vector<256x8xf32>
    %c0_19 = arith.constant 0 : index
    %c1_20 = arith.constant 1 : index
    %c0_21 = arith.constant 0 : index
    %25 = vector.load %arg8[%c0_19, %c1_20, %c0_21] : memref<18x18x4xf32, #tpu.memory_space<vmem>>, vector<16x16x4xf32>
    %26 = vector.shape_cast %25 : vector<16x16x4xf32> to vector<256x4xf32>
    %c1_22 = arith.constant 1 : index
    %c0_23 = arith.constant 0 : index
    %c0_24 = arith.constant 0 : index
    %27 = vector.load %arg4[%c1_22, %c0_23, %c0_24] : memref<9x4x8xf32, #tpu.memory_space<vmem>>, vector<1x4x8xf32>
    %28 = vector.shape_cast %27 : vector<1x4x8xf32> to vector<4x8xf32>
    %cst_25 = arith.constant dense<0.000000e+00> : vector<256x8xf32>
    %29 = tpu.matmul %26, %28, %cst_25 {dimension_numbers = #tpu.dot_dimension_numbers<[1], [0], [0], [1], [0, 0, 1, 1], [], []>} : vector<256x4xf32>, vector<4x8xf32>, vector<256x8xf32> -> vector<256x8xf32>
    %30 = arith.addf %24, %29 : vector<256x8xf32>
    %c0_26 = arith.constant 0 : index
    %c2 = arith.constant 2 : index
    %c0_27 = arith.constant 0 : index
    %31 = vector.load %arg8[%c0_26, %c2, %c0_27] : memref<18x18x4xf32, #tpu.memory_space<vmem>>, vector<16x16x4xf32>
    %32 = vector.shape_cast %31 : vector<16x16x4xf32> to vector<256x4xf32>
    %c2_28 = arith.constant 2 : index
    %c0_29 = arith.constant 0 : index
    %c0_30 = arith.constant 0 : index
    %33 = vector.load %arg4[%c2_28, %c0_29, %c0_30] : memref<9x4x8xf32, #tpu.memory_space<vmem>>, vector<1x4x8xf32>
    %34 = vector.shape_cast %33 : vector<1x4x8xf32> to vector<4x8xf32>
    %cst_31 = arith.constant dense<0.000000e+00> : vector<256x8xf32>
    %35 = tpu.matmul %32, %34, %cst_31 {dimension_numbers = #tpu.dot_dimension_numbers<[1], [0], [0], [1], [0, 0, 1, 1], [], []>} : vector<256x4xf32>, vector<4x8xf32>, vector<256x8xf32> -> vector<256x8xf32>
    %36 = arith.addf %30, %35 : vector<256x8xf32>
    %c1_32 = arith.constant 1 : index
    %c0_33 = arith.constant 0 : index
    %c0_34 = arith.constant 0 : index
    %37 = vector.load %arg8[%c1_32, %c0_33, %c0_34] : memref<18x18x4xf32, #tpu.memory_space<vmem>>, vector<16x16x4xf32>
    %38 = vector.shape_cast %37 : vector<16x16x4xf32> to vector<256x4xf32>
    %c3 = arith.constant 3 : index
    %c0_35 = arith.constant 0 : index
    %c0_36 = arith.constant 0 : index
    %39 = vector.load %arg4[%c3, %c0_35, %c0_36] : memref<9x4x8xf32, #tpu.memory_space<vmem>>, vector<1x4x8xf32>
    %40 = vector.shape_cast %39 : vector<1x4x8xf32> to vector<4x8xf32>
    %cst_37 = arith.constant dense<0.000000e+00> : vector<256x8xf32>
    %41 = tpu.matmul %38, %40, %cst_37 {dimension_numbers = #tpu.dot_dimension_numbers<[1], [0], [0], [1], [0, 0, 1, 1], [], []>} : vector<256x4xf32>, vector<4x8xf32>, vector<256x8xf32> -> vector<256x8xf32>
    %42 = arith.addf %36, %41 : vector<256x8xf32>
    %c1_38 = arith.constant 1 : index
    %c1_39 = arith.constant 1 : index
    %c0_40 = arith.constant 0 : index
    %43 = vector.load %arg8[%c1_38, %c1_39, %c0_40] : memref<18x18x4xf32, #tpu.memory_space<vmem>>, vector<16x16x4xf32>
    %44 = vector.shape_cast %43 : vector<16x16x4xf32> to vector<256x4xf32>
    %c4 = arith.constant 4 : index
    %c0_41 = arith.constant 0 : index
    %c0_42 = arith.constant 0 : index
    %45 = vector.load %arg4[%c4, %c0_41, %c0_42] : memref<9x4x8xf32, #tpu.memory_space<vmem>>, vector<1x4x8xf32>
    %46 = vector.shape_cast %45 : vector<1x4x8xf32> to vector<4x8xf32>
    %cst_43 = arith.constant dense<0.000000e+00> : vector<256x8xf32>
    %47 = tpu.matmul %44, %46, %cst_43 {dimension_numbers = #tpu.dot_dimension_numbers<[1], [0], [0], [1], [0, 0, 1, 1], [], []>} : vector<256x4xf32>, vector<4x8xf32>, vector<256x8xf32> -> vector<256x8xf32>
    %48 = arith.addf %42, %47 : vector<256x8xf32>
    %c1_44 = arith.constant 1 : index
    %c2_45 = arith.constant 2 : index
    %c0_46 = arith.constant 0 : index
    %49 = vector.load %arg8[%c1_44, %c2_45, %c0_46] : memref<18x18x4xf32, #tpu.memory_space<vmem>>, vector<16x16x4xf32>
    %50 = vector.shape_cast %49 : vector<16x16x4xf32> to vector<256x4xf32>
    %c5 = arith.constant 5 : index
    %c0_47 = arith.constant 0 : index
    %c0_48 = arith.constant 0 : index
    %51 = vector.load %arg4[%c5, %c0_47, %c0_48] : memref<9x4x8xf32, #tpu.memory_space<vmem>>, vector<1x4x8xf32>
    %52 = vector.shape_cast %51 : vector<1x4x8xf32> to vector<4x8xf32>
    %cst_49 = arith.constant dense<0.000000e+00> : vector<256x8xf32>
    %53 = tpu.matmul %50, %52, %cst_49 {dimension_numbers = #tpu.dot_dimension_numbers<[1], [0], [0], [1], [0, 0, 1, 1], [], []>} : vector<256x4xf32>, vector<4x8xf32>, vector<256x8xf32> -> vector<256x8xf32>
    %54 = arith.addf %48, %53 : vector<256x8xf32>
    %c2_50 = arith.constant 2 : index
    %c0_51 = arith.constant 0 : index
    %c0_52 = arith.constant 0 : index
    %55 = vector.load %arg8[%c2_50, %c0_51, %c0_52] : memref<18x18x4xf32, #tpu.memory_space<vmem>>, vector<16x16x4xf32>
    %56 = vector.shape_cast %55 : vector<16x16x4xf32> to vector<256x4xf32>
    %c6 = arith.constant 6 : index
    %c0_53 = arith.constant 0 : index
    %c0_54 = arith.constant 0 : index
    %57 = vector.load %arg4[%c6, %c0_53, %c0_54] : memref<9x4x8xf32, #tpu.memory_space<vmem>>, vector<1x4x8xf32>
    %58 = vector.shape_cast %57 : vector<1x4x8xf32> to vector<4x8xf32>
    %cst_55 = arith.constant dense<0.000000e+00> : vector<256x8xf32>
    %59 = tpu.matmul %56, %58, %cst_55 {dimension_numbers = #tpu.dot_dimension_numbers<[1], [0], [0], [1], [0, 0, 1, 1], [], []>} : vector<256x4xf32>, vector<4x8xf32>, vector<256x8xf32> -> vector<256x8xf32>
    %60 = arith.addf %54, %59 : vector<256x8xf32>
    %c2_56 = arith.constant 2 : index
    %c1_57 = arith.constant 1 : index
    %c0_58 = arith.constant 0 : index
    %61 = vector.load %arg8[%c2_56, %c1_57, %c0_58] : memref<18x18x4xf32, #tpu.memory_space<vmem>>, vector<16x16x4xf32>
    %62 = vector.shape_cast %61 : vector<16x16x4xf32> to vector<256x4xf32>
    %c7 = arith.constant 7 : index
    %c0_59 = arith.constant 0 : index
    %c0_60 = arith.constant 0 : index
    %63 = vector.load %arg4[%c7, %c0_59, %c0_60] : memref<9x4x8xf32, #tpu.memory_space<vmem>>, vector<1x4x8xf32>
    %64 = vector.shape_cast %63 : vector<1x4x8xf32> to vector<4x8xf32>
    %cst_61 = arith.constant dense<0.000000e+00> : vector<256x8xf32>
    %65 = tpu.matmul %62, %64, %cst_61 {dimension_numbers = #tpu.dot_dimension_numbers<[1], [0], [0], [1], [0, 0, 1, 1], [], []>} : vector<256x4xf32>, vector<4x8xf32>, vector<256x8xf32> -> vector<256x8xf32>
    %66 = arith.addf %60, %65 : vector<256x8xf32>
    %c2_62 = arith.constant 2 : index
    %c2_63 = arith.constant 2 : index
    %c0_64 = arith.constant 0 : index
    %67 = vector.load %arg8[%c2_62, %c2_63, %c0_64] : memref<18x18x4xf32, #tpu.memory_space<vmem>>, vector<16x16x4xf32>
    %68 = vector.shape_cast %67 : vector<16x16x4xf32> to vector<256x4xf32>
    %c8 = arith.constant 8 : index
    %c0_65 = arith.constant 0 : index
    %c0_66 = arith.constant 0 : index
    %69 = vector.load %arg4[%c8, %c0_65, %c0_66] : memref<9x4x8xf32, #tpu.memory_space<vmem>>, vector<1x4x8xf32>
    %70 = vector.shape_cast %69 : vector<1x4x8xf32> to vector<4x8xf32>
    %cst_67 = arith.constant dense<0.000000e+00> : vector<256x8xf32>
    %71 = tpu.matmul %68, %70, %cst_67 {dimension_numbers = #tpu.dot_dimension_numbers<[1], [0], [0], [1], [0, 0, 1, 1], [], []>} : vector<256x4xf32>, vector<4x8xf32>, vector<256x8xf32> -> vector<256x8xf32>
    %72 = arith.addf %66, %71 : vector<256x8xf32>
    %73 = vector.shape_cast %72 : vector<256x8xf32> to vector<16x16x8xf32>
    %c0_68 = arith.constant 0 : index
    %c0_69 = arith.constant 0 : index
    %c0_70 = arith.constant 0 : index
    %c0_71 = arith.constant 0 : index
    %74 = vector.load %arg6[%c0_68, %c0_69, %c0_70, %c0_71] : memref<1x16x16x8xf32, #tpu.memory_space<vmem>>, vector<1x16x16x8xf32>
    %75 = vector.shape_cast %74 : vector<1x16x16x8xf32> to vector<16x16x8xf32>
    %76 = vector.shape_cast %73 : vector<16x16x8xf32> to vector<1x16x16x8xf32>
    tpu.vector_store %arg6[%c0_68, %c0_69, %c0_70, %c0_71], %76 {strides = array<i32>} : memref<1x16x16x8xf32, #tpu.memory_space<vmem>>, vector<1x16x16x8xf32>,
    %cst_72 = arith.constant dense<0.000000e+00> : vector<8xf32>
    %77 = vector.multi_reduction <add>, %72, %cst_72 [0] : vector<256x8xf32> to vector<8xf32>
    %78 = vector.shape_cast %77 : vector<8xf32> to vector<1x8xf32>
    %79 = arith.mulf %72, %72 : vector<256x8xf32>
    %cst_73 = arith.constant dense<0.000000e+00> : vector<8xf32>
    %80 = vector.multi_reduction <add>, %79, %cst_73 [0] : vector<256x8xf32> to vector<8xf32>
    %81 = vector.shape_cast %80 : vector<8xf32> to vector<1x8xf32>
    %c0_74 = arith.constant 0 : index
    %c0_75 = arith.constant 0 : index
    %82 = vector.load %arg7[%c0_74, %c0_75] : memref<2x8xf32, #tpu.memory_space<vmem>>, vector<1x8xf32>
    %83 = arith.addf %82, %78 : vector<1x8xf32>
    %c0_76 = arith.constant 0 : index
    %c0_77 = arith.constant 0 : index
    %84 = vector.load %arg7[%c0_76, %c0_77] : memref<2x8xf32, #tpu.memory_space<vmem>>, vector<1x8xf32>
    tpu.vector_store %arg7[%c0_76, %c0_77], %83 {strides = array<i32>} : memref<2x8xf32, #tpu.memory_space<vmem>>, vector<1x8xf32>,
    %c1_78 = arith.constant 1 : index
    %c0_79 = arith.constant 0 : index
    %85 = vector.load %arg7[%c1_78, %c0_79] : memref<2x8xf32, #tpu.memory_space<vmem>>, vector<1x8xf32>
    %86 = arith.addf %85, %81 : vector<1x8xf32>
    %c1_80 = arith.constant 1 : index
    %c0_81 = arith.constant 0 : index
    %87 = vector.load %arg7[%c1_80, %c0_81] : memref<2x8xf32, #tpu.memory_space<vmem>>, vector<1x8xf32>
    tpu.vector_store %arg7[%c1_80, %c0_81], %86 {strides = array<i32>} : memref<2x8xf32, #tpu.memory_space<vmem>>, vector<1x8xf32>,
    return
  }
  func.func @transform_0(%arg0: i32) -> (i32, i32, i32, i32) {
    %c0_i32 = arith.constant 0 : i32
    %c0_i32_0 = arith.constant 0 : i32
    %c0_i32_1 = arith.constant 0 : i32
    %c0_i32_2 = arith.constant 0 : i32
    return %arg0, %c0_i32, %c0_i32_0, %c0_i32_1 : i32, i32, i32, i32
  }
  func.func @transform_1(%arg0: i32) -> (i32, i32) {
    %c0_i32 = arith.constant 0 : i32
    %c0_i32_0 = arith.constant 0 : i32
    %c0_i32_1 = arith.constant 0 : i32
    return %c0_i32, %c0_i32_0 : i32, i32
  }
  func.func @transform_2(%arg0: i32) -> (i32, i32) {
    %c0_i32 = arith.constant 0 : i32
    %c0_i32_0 = arith.constant 0 : i32
    %c0_i32_1 = arith.constant 0 : i32
    return %c0_i32, %c0_i32_0 : i32, i32
  }
  func.func @transform_3(%arg0: i32) -> (i32, i32, i32) {
    %c0_i32 = arith.constant 0 : i32
    %c0_i32_0 = arith.constant 0 : i32
    %c0_i32_1 = arith.constant 0 : i32
    %c0_i32_2 = arith.constant 0 : i32
    return %c0_i32, %c0_i32_0, %c0_i32_1 : i32, i32, i32
  }
  func.func @transform_4(%arg0: i32) -> (i32, i32) {
    %c0_i32 = arith.constant 0 : i32
    %c0_i32_0 = arith.constant 0 : i32
    %c0_i32_1 = arith.constant 0 : i32
    return %c0_i32, %c0_i32_0 : i32, i32
  }
  func.func @transform_5(%arg0: i32) -> (i32, i32, i32, i32) {
    %c0_i32 = arith.constant 0 : i32
    %c0_i32_0 = arith.constant 0 : i32
    %c0_i32_1 = arith.constant 0 : i32
    %c0_i32_2 = arith.constant 0 : i32
    return %arg0, %c0_i32, %c0_i32_0, %c0_i32_1 : i32, i32, i32, i32
  }
  func.func @transform_6(%arg0: i32) -> (i32, i32) {
    %c0_i32 = arith.constant 0 : i32
    %c0_i32_0 = arith.constant 0 : i32
    %c0_i32_1 = arith.constant 0 : i32
    return %c0_i32, %c0_i32_0 : i32, i32
  }
}

</mosaic_0001>

<llo_original>
// kernel: tpu_custom_call.1
$region0: #{tpu_custom_call.1}
  #allocation0 [shape = 'u32[]', space=smem, size = 0x4, offset = 0x4, fixed_abs, tag = 'smem constant byte address 0x4 - core index']
  #allocation1 [shape = 'u32[144,128]{1,0:T(1,128)}', space=vmem, size = 0x12000, scoped, tag = 'internal scratch']
  #allocation2 [shape = 'f32[18,18,4]{2,1,0:T(8,128)}', space=vmem, size = 0x36000, scoped, tag = 'scratch operand']
  %s0 = inlined_call_operand.vmem [shape: f32[2,16,16,4], index: 0, kind: input, shape index: {}]
  %s1 = inlined_call_operand.vmem [shape: f32[1,4], index: 1, kind: input, shape index: {}]
  %s2 = inlined_call_operand.vmem [shape: f32[1,4], index: 2, kind: input, shape index: {}]
  %s3 = inlined_call_operand.vmem [shape: f32[9,4,8], index: 3, kind: input, shape index: {}]
  %s4 = inlined_call_operand.vmem [shape: f32[1,8], index: 4, kind: input, shape index: {}]
  %s5 = inlined_call_operand.vmem [shape: f32[2,16,16,8], index: 5, kind: output, shape index: {0}]
  %s6 = inlined_call_operand.hbm [shape: f32[2,8], index: 6, kind: output, shape index: {1}]
  %7 = xla_tuple %s5, %s6
  %s8 = sld [smem:[#allocation0]]
  $region65: #{tpu_custom_call.1} parent=0
    _
  %s10 = ssub.s32 1, %s8
  %s11 = scalar_select 0, %s10, %s8
  $region1: #{tpu_custom_call.1} parent=0
    #allocation3 [shape = 'u8[1024]{0}', space=vmem, size = 0x400, scoped, tag = 'output window, operand 1, single buffered']
    #allocation4 [shape = 's32[2]{0}', space=sflag, size = 0x8, scoped, tag = 'scoped memory for tpu_custom_call.1']
    %12 = vsyncpa [#allocation4], 0
    loop: start=0, step=1, limit=4
    $region2: #{tpu_custom_call.1} parent=1 // loop_pre_header
      _
    $region3: #{tpu_custom_call.1} parent=1 // loop_header
      %s14 = sphi 0, %s18
      %p15 = scmp.ge.s32.totalorder %s14, 4
      %s24 = sphi 0, %s26
      %s27 = sphi 0, %s24
      %s28 = sphi 0, %s27
      %s44 = sphi 0, %s28
      %s48 = sphi 0, %s48
      %s50 = sphi 0, %s48
      %s51 = sphi 0, %s50
      %s65 = sphi 0, %s51
      %s69 = sphi 0, %s69
      %s71 = sphi 0, %s69
      %s72 = sphi 0, %s71
      %s86 = sphi 0, %s72
      %s90 = sphi 0, %s90
      %s92 = sphi 0, %s90
      %s93 = sphi 0, %s92
      %s107 = sphi 0, %s93
      %s111 = sphi 0, %s111
      %s113 = sphi 0, %s111
      %s114 = sphi 0, %s113
      %s128 = sphi 0, %s114
      %s134 = sphi 0, %s136
      %s137 = sphi 0, %s134
      %s138 = sphi 0, %s137
      %s154 = sphi 0, %s138
      %s158 = sphi 0, %s158
      %s160 = sphi 0, %s158
      %s161 = sphi 0, %s160
      %s175 = sphi 0, %s161
    $region4: #{tpu_custom_call.1} parent=1 // loop_header_branch
      %17 = sbr.rel (%p15) target = $region8
    $region5: #{tpu_custom_call.1} parent=1 // loop_body
      %s19 = ssub.s32 %s14, 1
      %s20 = ssub.s32 %s14, 2
      %s21 = sadd.s32 %s14, 1
      %s22 = ssub.s32 %s14, %s21
      %p23 = scmp.eq.s32.totalorder %s22, 0
      %s25 = sadd.s32 %s24, 1
      %s26 = scalar_select %p23, %s24, %s25
      %p29 = pneg %p23
      %p30 = scmp.eq.s32.totalorder %s14, 1
      %p31 = por %p29, %p30
      %p32 = scmp.ne.s32.totalorder %s24, %s27
      %p33 = scmp.eq.s32.totalorder %s14, 0
      %p34 = por %p32, %p33
      %p35 = scmp.ne.s32.totalorder %s24, %s27
      %p36 = scmp.eq.s32.totalorder %s19, 1
      %p37 = por %p35, %p36
      %p38 = scmp.ne.s32.totalorder %s27, %s28
      %p39 = scmp.eq.s32.totalorder %s19, 0
      %p40 = por %p38, %p39
      %p41 = scmp.ne.s32.totalorder %s27, %s28
      %p42 = scmp.eq.s32.totalorder %s20, 1
      %p43 = por %p41, %p42
      %p45 = scmp.ne.s32.totalorder %s28, %s44
      %p46 = scmp.eq.s32.totalorder %s20, 0
      %p47 = por %p45, %p46
      %s49 = sadd.s32 %s48, 1
      %p52 = scmp.eq.s32.totalorder %s14, 1
      %p53 = scmp.ne.s32.totalorder %s48, %s50
      %p54 = scmp.eq.s32.totalorder %s14, 0
      %p55 = por %p53, %p54
      %p56 = scmp.ne.s32.totalorder %s48, %s50
      %p57 = scmp.eq.s32.totalorder %s19, 1
      %p58 = por %p56, %p57
      %p59 = scmp.ne.s32.totalorder %s50, %s51
      %p60 = scmp.eq.s32.totalorder %s19, 0
      %p61 = por %p59, %p60
      %p62 = scmp.ne.s32.totalorder %s50, %s51
      %p63 = scmp.eq.s32.totalorder %s20, 1
      %p64 = por %p62, %p63
      %p66 = scmp.ne.s32.totalorder %s51, %s65
      %p67 = scmp.eq.s32.totalorder %s20, 0
      %p68 = por %p66, %p67
      %s70 = sadd.s32 %s69, 1
      %p73 = scmp.eq.s32.totalorder %s14, 1
      %p74 = scmp.ne.s32.totalorder %s69, %s71
      %p75 = scmp.eq.s32.totalorder %s14, 0
      %p76 = por %p74, %p75
      %p77 = scmp.ne.s32.totalorder %s69, %s71
      %p78 = scmp.eq.s32.totalorder %s19, 1
      %p79 = por %p77, %p78
      %p80 = scmp.ne.s32.totalorder %s71, %s72
      %p81 = scmp.eq.s32.totalorder %s19, 0
      %p82 = por %p80, %p81
      %p83 = scmp.ne.s32.totalorder %s71, %s72
      %p84 = scmp.eq.s32.totalorder %s20, 1
      %p85 = por %p83, %p84
      %p87 = scmp.ne.s32.totalorder %s72, %s86
      %p88 = scmp.eq.s32.totalorder %s20, 0
      %p89 = por %p87, %p88
      %s91 = sadd.s32 %s90, 1
      %p94 = scmp.eq.s32.totalorder %s14, 1
      %p95 = scmp.ne.s32.totalorder %s90, %s92
      %p96 = scmp.eq.s32.totalorder %s14, 0
      %p97 = por %p95, %p96
      %p98 = scmp.ne.s32.totalorder %s90, %s92
      %p99 = scmp.eq.s32.totalorder %s19, 1
      %p100 = por %p98, %p99
      %p101 = scmp.ne.s32.totalorder %s92, %s93
      %p102 = scmp.eq.s32.totalorder %s19, 0
      %p103 = por %p101, %p102
      %p104 = scmp.ne.s32.totalorder %s92, %s93
      %p105 = scmp.eq.s32.totalorder %s20, 1
      %p106 = por %p104, %p105
      %p108 = scmp.ne.s32.totalorder %s93, %s107
      %p109 = scmp.eq.s32.totalorder %s20, 0
      %p110 = por %p108, %p109
      %s112 = sadd.s32 %s111, 1
      %p115 = scmp.eq.s32.totalorder %s14, 1
      %p116 = scmp.ne.s32.totalorder %s111, %s113
      %p117 = scmp.eq.s32.totalorder %s14, 0
      %p118 = por %p116, %p117
      %p119 = scmp.ne.s32.totalorder %s111, %s113
      %p120 = scmp.eq.s32.totalorder %s19, 1
      %p121 = por %p119, %p120
      %p122 = scmp.ne.s32.totalorder %s113, %s114
      %p123 = scmp.eq.s32.totalorder %s19, 0
      %p124 = por %p122, %p123
      %p125 = scmp.ne.s32.totalorder %s113, %s114
      %p126 = scmp.eq.s32.totalorder %s20, 1
      %p127 = por %p125, %p126
      %p129 = scmp.ne.s32.totalorder %s114, %s128
      %p130 = scmp.eq.s32.totalorder %s20, 0
      %p131 = por %p129, %p130
      %s132 = ssub.s32 %s14, %s21
      %p133 = scmp.eq.s32.totalorder %s132, 0
      %s135 = sadd.s32 %s134, 1
      %s136 = scalar_select %p133, %s134, %s135
      %p139 = pneg %p133
      %p140 = scmp.eq.s32.totalorder %s14, 1
      %p141 = por %p139, %p140
      %p142 = scmp.ne.s32.totalorder %s134, %s137
      %p143 = scmp.eq.s32.totalorder %s14, 0
      %p144 = por %p142, %p143
      %p145 = scmp.ne.s32.totalorder %s134, %s137
      %p146 = scmp.eq.s32.totalorder %s19, 1
      %p147 = por %p145, %p146
      %p148 = scmp.ne.s32.totalorder %s137, %s138
      %p149 = scmp.eq.s32.totalorder %s19, 0
      %p150 = por %p148, %p149
      %p151 = scmp.ne.s32.totalorder %s137, %s138
      %p152 = scmp.eq.s32.totalorder %s20, 1
      %p153 = por %p151, %p152
      %p155 = scmp.ne.s32.totalorder %s138, %s154
      %p156 = scmp.eq.s32.totalorder %s20, 0
      %p157 = por %p155, %p156
      %s159 = sadd.s32 %s158, 1
      %p162 = scmp.eq.s32.totalorder %s14, 1
      %p163 = scmp.ne.s32.totalorder %s158, %s160
      %p164 = scmp.eq.s32.totalorder %s14, 0
      %p165 = por %p163, %p164
      %p166 = scmp.ne.s32.totalorder %s158, %s160
      %p167 = scmp.eq.s32.totalorder %s19, 1
      %p168 = por %p166, %p167
      %p169 = scmp.ne.s32.totalorder %s160, %s161
      %p170 = scmp.eq.s32.totalorder %s19, 0
      %p171 = por %p169, %p170
      %p172 = scmp.ne.s32.totalorder %s160, %s161
      %p173 = scmp.eq.s32.totalorder %s20, 1
      %p174 = por %p172, %p173
      %p176 = scmp.ne.s32.totalorder %s161, %s175
      %p177 = scmp.eq.s32.totalorder %s20, 0
      %p178 = por %p176, %p177
      %p179 = scmp.le.s32.totalorder 1, %s14
      %p180 = scmp.lt.s32.totalorder %s14, 3
      %p181 = pnand %p179, %p180
      %p182 = pneg %p181
      // Predicated region
      $region9: #{tpu_custom_call.1} parent=5 // pred_check
        _
      $region10: #{tpu_custom_call.1} parent=5 // pred_check_branch
        %184 = sbr.rel (%p181) target = $region12
      $region11: #{tpu_custom_call.1} parent=5 // pred_region
        %s185 = ssub.s32 %s14, 1
        // Predicated region
        $region13: #{tpu_custom_call.1} parent=11 // pred_check
          %p186 = pneg %p61
        $region14: #{tpu_custom_call.1} parent=11 // pred_check_branch
          %188 = sbr.rel (%p186) target = $region16
        $region15: #{tpu_custom_call.1} parent=11 // pred_region
          _
        $region16: #{tpu_custom_call.1} parent=11 // pred_fallthru
          _
        // Predicated region
        $region17: #{tpu_custom_call.1} parent=11 // pred_check
          %p189 = pneg %p82
        $region18: #{tpu_custom_call.1} parent=11 // pred_check_branch
          %191 = sbr.rel (%p189) target = $region20
        $region19: #{tpu_custom_call.1} parent=11 // pred_region
          _
        $region20: #{tpu_custom_call.1} parent=11 // pred_fallthru
          _
        // Predicated region
        $region21: #{tpu_custom_call.1} parent=11 // pred_check
          %p192 = pneg %p103
        $region22: #{tpu_custom_call.1} parent=11 // pred_check_branch
          %194 = sbr.rel (%p192) target = $region24
        $region23: #{tpu_custom_call.1} parent=11 // pred_region
          _
        $region24: #{tpu_custom_call.1} parent=11 // pred_fallthru
          _
        // Predicated region
        $region25: #{tpu_custom_call.1} parent=11 // pred_check
          %p195 = pneg %p124
        $region26: #{tpu_custom_call.1} parent=11 // pred_check_branch
          %197 = sbr.rel (%p195) target = $region28
        $region27: #{tpu_custom_call.1} parent=11 // pred_region
          _
        $region28: #{tpu_custom_call.1} parent=11 // pred_fallthru
          _
      $region12: #{tpu_custom_call.1} parent=5 // pred_fallthru
        _
      %p198 = scmp.lt.s32.totalorder %s14, 2
      // Predicated region
      $region29: #{tpu_custom_call.1} parent=5 // pred_check
        %p199 = pneg %p198
      $region30: #{tpu_custom_call.1} parent=5 // pred_check_branch
        %201 = sbr.rel (%p199) target = $region32
      $region31: #{tpu_custom_call.1} parent=5 // pred_region
        // Predicated region
        $region33: #{tpu_custom_call.1} parent=31 // pred_check
          %p202 = pneg %p34
        $region34: #{tpu_custom_call.1} parent=31 // pred_check_branch
          %204 = sbr.rel (%p202) target = $region36
        $region35: #{tpu_custom_call.1} parent=31 // pred_region
          %p205 = scmp.lt.s32.totalorder %s14, 1
          %s206 = scalar_select %p205, %s14, 1
          %s207 = smul.addr %s206, 32
          %s208 = smul.addr %s207, 8
          %s209 = scalar_lea.vmem %s0, %s208
        $region36: #{tpu_custom_call.1} parent=31 // pred_fallthru
          _
      $region32: #{tpu_custom_call.1} parent=5 // pred_fallthru
        _
      %p210 = scmp.le.s32.totalorder 1, %s14
      %p211 = scmp.lt.s32.totalorder %s14, 3
      %p212 = pnand %p210, %p211
      %p213 = pneg %p212
      // Predicated region
      $region37: #{tpu_custom_call.1} parent=5 // pred_check
        _
      $region38: #{tpu_custom_call.1} parent=5 // pred_check_branch
        %215 = sbr.rel (%p212) target = $region40
      $region39: #{tpu_custom_call.1} parent=5 // pred_region
        %s216 = ssub.s32 %s14, 1
        %p217 = scmp.lt.s32.totalorder %s19, 1
        %s218 = scalar_select %p217, %s19, 1
        %s219 = smul.addr %s218, 32
        %s220 = smul.addr %s219, 8
        %s221 = scalar_lea.vmem %s0, %s220
        %p222 = pneg %p40
        %p223 = pneg %p37
        %p224 = pneg %p61
        %p225 = pneg %p58
        %p226 = pneg %p82
        %p227 = pneg %p79
        %p228 = pneg %p103
        %p229 = pneg %p100
        %p230 = pneg %p124
        %p231 = pneg %p121
        %p232 = pneg %p150
        %p233 = pneg %p147
        %p234 = scmp.lt.s32.totalorder %s19, 1
        %s235 = scalar_select %p234, %s19, 1
        %s236 = smul.addr %s235, 32
        %s237 = smul.addr %s236, 8
        %s238 = scalar_lea.vmem %s5, %s237
        %p239 = pneg %p171
        %p240 = pneg %p168
        %p241 = scmp.lt.s32.totalorder %s19, 1
        %s242 = scalar_select %p241, %s19, 1
        %s243 = smul.addr %s242, 32
        %s244 = smul.addr %s243, 8
        %s245 = scalar_lea.vmem %s0, %s244
        %p246 = scmp.lt.s32.totalorder %s19, 1
        %s247 = scalar_select %p246, %s19, 1
        %s248 = smul.addr %s247, 32
        %s249 = smul.addr %s248, 8
        %s250 = scalar_lea.vmem %s5, %s249
        %p251 = scmp.eq.s32.totalorder %s19, 0
        // Predicated region
        $region41: #{tpu_custom_call.1} parent=39 // pred_check
          %p252 = pneg %p251
        $region42: #{tpu_custom_call.1} parent=39 // pred_check_branch
          %254 = sbr.rel (%p252) target = $region44
        $region43: #{tpu_custom_call.1} parent=39 // pred_region
          %vm255 = vcmask 31744
          %256 = vst.msk [vmem:[#allocation2] sm:$0xff] %vm255, 0.0
          %257 = vst.msk [vmem:[#allocation2 + $0x8] sm:$0xff] %vm255, 0.0
          %vm258 = vcmask 25600
          %259 = vst.msk [vmem:[#allocation2 + $0x10] sm:$0x3] %vm258, 0.0
          %260 = vst.msk [vmem:[#allocation2 + $0x18] sm:$0xff] %vm255, 0.0
          %261 = vst.msk [vmem:[#allocation2 + $0x20] sm:$0xff] %vm255, 0.0
          %262 = vst.msk [vmem:[#allocation2 + $0x28] sm:$0x3] %vm258, 0.0
          %263 = vst.msk [vmem:[#allocation2 + $0x30] sm:$0xff] %vm255, 0.0
          %264 = vst.msk [vmem:[#allocation2 + $0x38] sm:$0xff] %vm255, 0.0
          %265 = vst.msk [vmem:[#allocation2 + $0x40] sm:$0x3] %vm258, 0.0
          %266 = vst.msk [vmem:[#allocation2 + $0x48] sm:$0xff] %vm255, 0.0
          %267 = vst.msk [vmem:[#allocation2 + $0x50] sm:$0xff] %vm255, 0.0
          %268 = vst.msk [vmem:[#allocation2 + $0x58] sm:$0x3] %vm258, 0.0
          %269 = vst.msk [vmem:[#allocation2 + $0x60] sm:$0xff] %vm255, 0.0
          %270 = vst.msk [vmem:[#allocation2 + $0x68] sm:$0xff] %vm255, 0.0
          %271 = vst.msk [vmem:[#allocation2 + $0x70] sm:$0x3] %vm258, 0.0
          %272 = vst.msk [vmem:[#allocation2 + $0x78] sm:$0xff] %vm255, 0.0
          %273 = vst.msk [vmem:[#allocation2 + $0x80] sm:$0xff] %vm255, 0.0
          %274 = vst.msk [vmem:[#allocation2 + $0x88] sm:$0x3] %vm258, 0.0
          %275 = vst.msk [vmem:[#allocation2 + $0x90] sm:$0xff] %vm255, 0.0
          %276 = vst.msk [vmem:[#allocation2 + $0x98] sm:$0xff] %vm255, 0.0
          %277 = vst.msk [vmem:[#allocation2 + $0xa0] sm:$0x3] %vm258, 0.0
          %278 = vst.msk [vmem:[#allocation2 + $0xa8] sm:$0xff] %vm255, 0.0
          %279 = vst.msk [vmem:[#allocation2 + $0xb0] sm:$0xff] %vm255, 0.0
          %280 = vst.msk [vmem:[#allocation2 + $0xb8] sm:$0x3] %vm258, 0.0
          %281 = vst.msk [vmem:[#allocation2 + $0xc0] sm:$0xff] %vm255, 0.0
          %282 = vst.msk [vmem:[#allocation2 + $0xc8] sm:$0xff] %vm255, 0.0
          %283 = vst.msk [vmem:[#allocation2 + $0xd0] sm:$0x3] %vm258, 0.0
          %284 = vst.msk [vmem:[#allocation2 + $0xd8] sm:$0xff] %vm255, 0.0
          %285 = vst.msk [vmem:[#allocation2 + $0xe0] sm:$0xff] %vm255, 0.0
          %286 = vst.msk [vmem:[#allocation2 + $0xe8] sm:$0x3] %vm258, 0.0
          %287 = vst.msk [vmem:[#allocation2 + $0xf0] sm:$0xff] %vm255, 0.0
          %288 = vst.msk [vmem:[#allocation2 + $0xf8] sm:$0xff] %vm255, 0.0
          %289 = vst.msk [vmem:[#allocation2 + $0x100] sm:$0x3] %vm258, 0.0
          %290 = vst.msk [vmem:[#allocation2 + $0x108] sm:$0xff] %vm255, 0.0
          %291 = vst.msk [vmem:[#allocation2 + $0x110] sm:$0xff] %vm255, 0.0
          %292 = vst.msk [vmem:[#allocation2 + $0x118] sm:$0x3] %vm258, 0.0
          %293 = vst.msk [vmem:[#allocation2 + $0x120] sm:$0xff] %vm255, 0.0
          %294 = vst.msk [vmem:[#allocation2 + $0x128] sm:$0xff] %vm255, 0.0
          %295 = vst.msk [vmem:[#allocation2 + $0x130] sm:$0x3] %vm258, 0.0
          %296 = vst.msk [vmem:[#allocation2 + $0x138] sm:$0xff] %vm255, 0.0
          %297 = vst.msk [vmem:[#allocation2 + $0x140] sm:$0xff] %vm255, 0.0
          %298 = vst.msk [vmem:[#allocation2 + $0x148] sm:$0x3] %vm258, 0.0
          %299 = vst.msk [vmem:[#allocation2 + $0x150] sm:$0xff] %vm255, 0.0
          %300 = vst.msk [vmem:[#allocation2 + $0x158] sm:$0xff] %vm255, 0.0
          %301 = vst.msk [vmem:[#allocation2 + $0x160] sm:$0x3] %vm258, 0.0
          %302 = vst.msk [vmem:[#allocation2 + $0x168] sm:$0xff] %vm255, 0.0
          %303 = vst.msk [vmem:[#allocation2 + $0x170] sm:$0xff] %vm255, 0.0
          %304 = vst.msk [vmem:[#allocation2 + $0x178] sm:$0x3] %vm258, 0.0
          %305 = vst.msk [vmem:[#allocation2 + $0x180] sm:$0xff] %vm255, 0.0
          %306 = vst.msk [vmem:[#allocation2 + $0x188] sm:$0xff] %vm255, 0.0
          %307 = vst.msk [vmem:[#allocation2 + $0x190] sm:$0x3] %vm258, 0.0
          %308 = vst.msk [vmem:[#allocation2 + $0x198] sm:$0xff] %vm255, 0.0
          %309 = vst.msk [vmem:[#allocation2 + $0x1a0] sm:$0xff] %vm255, 0.0
          %310 = vst.msk [vmem:[#allocation2 + $0x1a8] sm:$0x3] %vm258, 0.0
          %vm311 = vcmask 58368
          %312 = vst.msk [vmem:[#allocation3] sm:$0x3] %vm311, 0.0
        $region44: #{tpu_custom_call.1} parent=39 // pred_fallthru
          _
        %v313 = vld [vmem:[%s245] sm:$0xff]
        %v314 = vld [vmem:[%s245 + $0x8] sm:$0xff]
        %v315 = vld [vmem:[%s245 + $0x10] sm:$0xff]
        %v316 = vld [vmem:[%s245 + $0x18] sm:$0xff]
        %v317 = vld [vmem:[%s245 + $0x20] sm:$0xff]
        %v318 = vld [vmem:[%s245 + $0x28] sm:$0xff]
        %v319 = vld [vmem:[%s245 + $0x30] sm:$0xff]
        %v320 = vld [vmem:[%s245 + $0x38] sm:$0xff]
        %v321 = vld [vmem:[%s245 + $0x40] sm:$0xff]
        %v322 = vld [vmem:[%s245 + $0x48] sm:$0xff]
        %v323 = vld [vmem:[%s245 + $0x50] sm:$0xff]
        %v324 = vld [vmem:[%s245 + $0x58] sm:$0xff]
        %v325 = vld [vmem:[%s245 + $0x60] sm:$0xff]
        %v326 = vld [vmem:[%s245 + $0x68] sm:$0xff]
        %v327 = vld [vmem:[%s245 + $0x70] sm:$0xff]
        %v328 = vld [vmem:[%s245 + $0x78] sm:$0xff]
        %v329 = vld [vmem:[%s245 + $0x80] sm:$0xff]
        %v330 = vld [vmem:[%s245 + $0x88] sm:$0xff]
        %v331 = vld [vmem:[%s245 + $0x90] sm:$0xff]
        %v332 = vld [vmem:[%s245 + $0x98] sm:$0xff]
        %v333 = vld [vmem:[%s245 + $0xa0] sm:$0xff]
        %v334 = vld [vmem:[%s245 + $0xa8] sm:$0xff]
        %v335 = vld [vmem:[%s245 + $0xb0] sm:$0xff]
        %v336 = vld [vmem:[%s245 + $0xb8] sm:$0xff]
        %v337 = vld [vmem:[%s245 + $0xc0] sm:$0xff]
        %v338 = vld [vmem:[%s245 + $0xc8] sm:$0xff]
        %v339 = vld [vmem:[%s245 + $0xd0] sm:$0xff]
        %v340 = vld [vmem:[%s245 + $0xd8] sm:$0xff]
        %v341 = vld [vmem:[%s245 + $0xe0] sm:$0xff]
        %v342 = vld [vmem:[%s245 + $0xe8] sm:$0xff]
        %v343 = vld [vmem:[%s245 + $0xf0] sm:$0xff]
        %v344 = vld [vmem:[%s245 + $0xf8] sm:$0xff]
        %v345 = vld [vmem:[%s1] sm:$0x1]
        %v347 = vlaneseq
        %v348 = vshrl.u32 %v347, 7
        %v349 = vsub.s32 0, %v348
        %v350 = vrot.slane %v345, %v349
        %v352 = vmul.f32 %v313, %v350
        %v353 = vmul.f32 %v314, %v350
        %v354 = vmul.f32 %v315, %v350
        %v355 = vmul.f32 %v316, %v350
        %v356 = vmul.f32 %v317, %v350
        %v357 = vmul.f32 %v318, %v350
        %v358 = vmul.f32 %v319, %v350
        %v359 = vmul.f32 %v320, %v350
        %v360 = vmul.f32 %v321, %v350
        %v361 = vmul.f32 %v322, %v350
        %v362 = vmul.f32 %v323, %v350
        %v363 = vmul.f32 %v324, %v350
        %v364 = vmul.f32 %v325, %v350
        %v365 = vmul.f32 %v326, %v350
        %v366 = vmul.f32 %v327, %v350
        %v367 = vmul.f32 %v328, %v350
        %v368 = vmul.f32 %v329, %v350
        %v369 = vmul.f32 %v330, %v350
        %v370 = vmul.f32 %v331, %v350
        %v371 = vmul.f32 %v332, %v350
        %v372 = vmul.f32 %v333, %v350
        %v373 = vmul.f32 %v334, %v350
        %v374 = vmul.f32 %v335, %v350
        %v375 = vmul.f32 %v336, %v350
        %v376 = vmul.f32 %v337, %v350
        %v377 = vmul.f32 %v338, %v350
        %v378 = vmul.f32 %v339, %v350
        %v379 = vmul.f32 %v340, %v350
        %v380 = vmul.f32 %v341, %v350
        %v381 = vmul.f32 %v342, %v350
        %v382 = vmul.f32 %v343, %v350
        %v383 = vmul.f32 %v344, %v350
        %v384 = vld [vmem:[%s2] sm:$0x1]
        %v386 = vlaneseq
        %v387 = vshrl.u32 %v386, 7
        %v388 = vsub.s32 0, %v387
        %v389 = vrot.slane %v384, %v388
        %v391 = vadd.f32 %v352, %v389
        %v392 = vadd.f32 %v353, %v389
        %v393 = vadd.f32 %v354, %v389
        %v394 = vadd.f32 %v355, %v389
        %v395 = vadd.f32 %v356, %v389
        %v396 = vadd.f32 %v357, %v389
        %v397 = vadd.f32 %v358, %v389
        %v398 = vadd.f32 %v359, %v389
        %v399 = vadd.f32 %v360, %v389
        %v400 = vadd.f32 %v361, %v389
        %v401 = vadd.f32 %v362, %v389
        %v402 = vadd.f32 %v363, %v389
        %v403 = vadd.f32 %v364, %v389
        %v404 = vadd.f32 %v365, %v389
        %v405 = vadd.f32 %v366, %v389
        %v406 = vadd.f32 %v367, %v389
        %v407 = vadd.f32 %v368, %v389
        %v408 = vadd.f32 %v369, %v389
        %v409 = vadd.f32 %v370, %v389
        %v410 = vadd.f32 %v371, %v389
        %v411 = vadd.f32 %v372, %v389
        %v412 = vadd.f32 %v373, %v389
        %v413 = vadd.f32 %v374, %v389
        %v414 = vadd.f32 %v375, %v389
        %v415 = vadd.f32 %v376, %v389
        %v416 = vadd.f32 %v377, %v389
        %v417 = vadd.f32 %v378, %v389
        %v418 = vadd.f32 %v379, %v389
        %v419 = vadd.f32 %v380, %v389
        %v420 = vadd.f32 %v381, %v389
        %v421 = vadd.f32 %v382, %v389
        %v422 = vadd.f32 %v383, %v389
        %v423 = vmax.f32 %v391, 0.0
        %v424 = vmax.f32 %v392, 0.0
        %v425 = vmax.f32 %v393, 0.0
        %v426 = vmax.f32 %v394, 0.0
        %v427 = vmax.f32 %v395, 0.0
        %v428 = vmax.f32 %v396, 0.0
        %v429 = vmax.f32 %v397, 0.0
        %v430 = vmax.f32 %v398, 0.0
        %v431 = vmax.f32 %v399, 0.0
        %v432 = vmax.f32 %v400, 0.0
        %v433 = vmax.f32 %v401, 0.0
        %v434 = vmax.f32 %v402, 0.0
        %v435 = vmax.f32 %v403, 0.0
        %v436 = vmax.f32 %v404, 0.0
        %v437 = vmax.f32 %v405, 0.0
        %v438 = vmax.f32 %v406, 0.0
        %v439 = vmax.f32 %v407, 0.0
        %v440 = vmax.f32 %v408, 0.0
        %v441 = vmax.f32 %v409, 0.0
        %v442 = vmax.f32 %v410, 0.0
        %v443 = vmax.f32 %v411, 0.0
        %v444 = vmax.f32 %v412, 0.0
        %v445 = vmax.f32 %v413, 0.0
        %v446 = vmax.f32 %v414, 0.0
        %v447 = vmax.f32 %v415, 0.0
        %v448 = vmax.f32 %v416, 0.0
        %v449 = vmax.f32 %v417, 0.0
        %v450 = vmax.f32 %v418, 0.0
        %v451 = vmax.f32 %v419, 0.0
        %v452 = vmax.f32 %v420, 0.0
        %v453 = vmax.f32 %v421, 0.0
        %v454 = vmax.f32 %v422, 0.0
        %s455 = scalar_lea.vmem [#allocation2], 24
        %vm456 = vcmask 31744
        %457 = vst.msk [vmem:[%s455 + $0x1] sm:$0xff] %vm456, %v423
        %458 = vst.msk [vmem:[%s455 + $0x9] sm:$0xff] %vm456, %v424
        %459 = vst.msk [vmem:[%s455 + $0x19] sm:$0xff] %vm456, %v425
        %460 = vst.msk [vmem:[%s455 + $0x21] sm:$0xff] %vm456, %v426
        %461 = vst.msk [vmem:[%s455 + $0x31] sm:$0xff] %vm456, %v427
        %462 = vst.msk [vmem:[%s455 + $0x39] sm:$0xff] %vm456, %v428
        %463 = vst.msk [vmem:[%s455 + $0x49] sm:$0xff] %vm456, %v429
        %464 = vst.msk [vmem:[%s455 + $0x51] sm:$0xff] %vm456, %v430
        %465 = vst.msk [vmem:[%s455 + $0x61] sm:$0xff] %vm456, %v431
        %466 = vst.msk [vmem:[%s455 + $0x69] sm:$0xff] %vm456, %v432
        %467 = vst.msk [vmem:[%s455 + $0x79] sm:$0xff] %vm456, %v433
        %468 = vst.msk [vmem:[%s455 + $0x81] sm:$0xff] %vm456, %v434
        %469 = vst.msk [vmem:[%s455 + $0x91] sm:$0xff] %vm456, %v435
        %470 = vst.msk [vmem:[%s455 + $0x99] sm:$0xff] %vm456, %v436
        %471 = vst.msk [vmem:[%s455 + $0xa9] sm:$0xff] %vm456, %v437
        %472 = vst.msk [vmem:[%s455 + $0xb1] sm:$0xff] %vm456, %v438
        %473 = vst.msk [vmem:[%s455 + $0xc1] sm:$0xff] %vm456, %v439
        %474 = vst.msk [vmem:[%s455 + $0xc9] sm:$0xff] %vm456, %v440
        %475 = vst.msk [vmem:[%s455 + $0xd9] sm:$0xff] %vm456, %v441
        %476 = vst.msk [vmem:[%s455 + $0xe1] sm:$0xff] %vm456, %v442
        %477 = vst.msk [vmem:[%s455 + $0xf1] sm:$0xff] %vm456, %v443
        %478 = vst.msk [vmem:[%s455 + $0xf9] sm:$0xff] %vm456, %v444
        %479 = vst.msk [vmem:[%s455 + $0x109] sm:$0xff] %vm456, %v445
        %480 = vst.msk [vmem:[%s455 + $0x111] sm:$0xff] %vm456, %v446
        %481 = vst.msk [vmem:[%s455 + $0x121] sm:$0xff] %vm456, %v447
        %482 = vst.msk [vmem:[%s455 + $0x129] sm:$0xff] %vm456, %v448
        %483 = vst.msk [vmem:[%s455 + $0x139] sm:$0xff] %vm456, %v449
        %484 = vst.msk [vmem:[%s455 + $0x141] sm:$0xff] %vm456, %v450
        %485 = vst.msk [vmem:[%s455 + $0x151] sm:$0xff] %vm456, %v451
        %486 = vst.msk [vmem:[%s455 + $0x159] sm:$0xff] %vm456, %v452
        %487 = vst.msk [vmem:[%s455 + $0x169] sm:$0xff] %vm456, %v453
        %488 = vst.msk [vmem:[%s455 + $0x171] sm:$0xff] %vm456, %v454
        %v489 = vld [vmem:[%s4] sm:$0x1]
        %v491 = vlaneseq
        %v492 = vshrl.u32 %v491, 7
        %v493 = vsub.s32 0, %v492
        %v494 = vrot.slane %v489, %v493
        %v496 = vld [vmem:[#allocation2] sm:$0xff]
        %v497 = vld [vmem:[#allocation2 + $0x8] sm:$0xff]
        %v498 = vld [vmem:[#allocation2 + $0x18] sm:$0xff]
        %v499 = vld [vmem:[#allocation2 + $0x20] sm:$0xff]
        %v500 = vld [vmem:[#allocation2 + $0x30] sm:$0xff]
        %v501 = vld [vmem:[#allocation2 + $0x38] sm:$0xff]
        %v502 = vld [vmem:[#allocation2 + $0x48] sm:$0xff]
        %v503 = vld [vmem:[#allocation2 + $0x50] sm:$0xff]
        %v504 = vld [vmem:[#allocation2 + $0x60] sm:$0xff]
        %v505 = vld [vmem:[#allocation2 + $0x68] sm:$0xff]
        %v506 = vld [vmem:[#allocation2 + $0x78] sm:$0xff]
        %v507 = vld [vmem:[#allocation2 + $0x80] sm:$0xff]
        %v508 = vld [vmem:[#allocation2 + $0x90] sm:$0xff]
        %v509 = vld [vmem:[#allocation2 + $0x98] sm:$0xff]
        %v510 = vld [vmem:[#allocation2 + $0xa8] sm:$0xff]
        %v511 = vld [vmem:[#allocation2 + $0xb0] sm:$0xff]
        %v512 = vld [vmem:[#allocation2 + $0xc0] sm:$0xff]
        %v513 = vld [vmem:[#allocation2 + $0xc8] sm:$0xff]
        %v514 = vld [vmem:[#allocation2 + $0xd8] sm:$0xff]
        %v515 = vld [vmem:[#allocation2 + $0xe0] sm:$0xff]
        %v516 = vld [vmem:[#allocation2 + $0xf0] sm:$0xff]
        %v517 = vld [vmem:[#allocation2 + $0xf8] sm:$0xff]
        %v518 = vld [vmem:[#allocation2 + $0x108] sm:$0xff]
        %v519 = vld [vmem:[#allocation2 + $0x110] sm:$0xff]
        %v520 = vld [vmem:[#allocation2 + $0x120] sm:$0xff]
        %v521 = vld [vmem:[#allocation2 + $0x128] sm:$0xff]
        %v522 = vld [vmem:[#allocation2 + $0x138] sm:$0xff]
        %v523 = vld [vmem:[#allocation2 + $0x140] sm:$0xff]
        %v524 = vld [vmem:[#allocation2 + $0x150] sm:$0xff]
        %v525 = vld [vmem:[#allocation2 + $0x158] sm:$0xff]
        %v526 = vld [vmem:[#allocation2 + $0x168] sm:$0xff]
        %v527 = vld [vmem:[#allocation2 + $0x170] sm:$0xff]
        %v528 = vld [vmem:[%s3] sm:$0xf]
        %v530 = vsel %vm456, %v496, 0
        %v533 = vsel %vm456, %v497, 0
        %v536 = vsel %vm456, %v498, 0
        %v539 = vsel %vm456, %v499, 0
        %v542 = vsel %vm456, %v500, 0
        %v545 = vsel %vm456, %v501, 0
        %v548 = vsel %vm456, %v502, 0
        %v551 = vsel %vm456, %v503, 0
        %v554 = vsel %vm456, %v504, 0
        %v557 = vsel %vm456, %v505, 0
        %v560 = vsel %vm456, %v506, 0
        %v563 = vsel %vm456, %v507, 0
        %v566 = vsel %vm456, %v508, 0
        %v569 = vsel %vm456, %v509, 0
        %v572 = vsel %vm456, %v510, 0
        %v575 = vsel %vm456, %v511, 0
        %v578 = vsel %vm456, %v512, 0
        %v581 = vsel %vm456, %v513, 0
        %v584 = vsel %vm456, %v514, 0
        %v587 = vsel %vm456, %v515, 0
        %v590 = vsel %vm456, %v516, 0
        %v593 = vsel %vm456, %v517, 0
        %v596 = vsel %vm456, %v518, 0
        %v599 = vsel %vm456, %v519, 0
        %v602 = vsel %vm456, %v520, 0
        %v605 = vsel %vm456, %v521, 0
        %v608 = vsel %vm456, %v522, 0
        %v611 = vsel %vm456, %v523, 0
        %v614 = vsel %vm456, %v524, 0
        %v617 = vsel %vm456, %v525, 0
        %v620 = vsel %vm456, %v526, 0
        %v623 = vsel %vm456, %v527, 0
        %vm625 = vcmask 1043456
        %v627 = vsel %vm625, %v528, 0
        %629 = vmatprep.subr.mxu0 0.0
        %630 = vmatpush1.msra.mxu0 %v627
        %631 = vmatprep.subr.mxu0 0.0
        %632 = vmatpush1.msra.mxu0 0.0
        %633 = vmatprep.subr.mxu0 0.0
        %634 = vmatpush1.msra.mxu0 0.0
        %635 = vmatprep.subr.mxu0 0.0
        %636 = vmatpush1.msra.mxu0 0.0
        %637 = vmatprep.subr.mxu0 0.0
        %638 = vmatpush1.msra.mxu0 0.0
        %639 = vmatprep.subr.mxu0 0.0
        %640 = vmatpush1.msra.mxu0 0.0
        %641 = vmatprep.subr.mxu0 0.0
        %642 = vmatpush1.msra.mxu0 0.0
        %643 = vmatprep.subr.mxu0 0.0
        %644 = vmatpush1.msra.mxu0 0.0
        %645 = vmatprep.subr.mxu0 0.0
        %646 = vmatpush1.msra.mxu0 0.0
        %647 = vmatprep.subr.mxu0 0.0
        %648 = vmatpush1.msra.mxu0 0.0
        %649 = vmatprep.subr.mxu0 0.0
        %650 = vmatpush1.msra.mxu0 0.0
        %651 = vmatprep.subr.mxu0 0.0
        %652 = vmatpush1.msra.mxu0 0.0
        %653 = vmatprep.subr.mxu0 0.0
        %654 = vmatpush1.msra.mxu0 0.0
        %655 = vmatprep.subr.mxu0 0.0
        %656 = vmatpush1.msra.mxu0 0.0
        %657 = vmatprep.subr.mxu0 0.0
        %658 = vmatpush1.msra.mxu0 0.0
        %659 = vmatprep.subr.mxu0 0.0
        %660 = vmatpush1.msra.mxu0 0.0
        %661 = vmatprep.subr.mxu0 0.0
        %662 = vmatpush1.msra.mxu0 0.0
        %663 = vmatprep.subr.mxu0 0.0
        %664 = vmatpush1.msra.mxu0 0.0
        %665 = vmatprep.subr.mxu0 0.0
        %666 = vmatpush1.msra.mxu0 0.0
        %667 = vmatprep.subr.mxu0 0.0
        %668 = vmatpush1.msra.mxu0 0.0
        %669 = vmatprep.subr.mxu0 0.0
        %670 = vmatpush1.msra.mxu0 0.0
        %671 = vmatprep.subr.mxu0 0.0
        %672 = vmatpush1.msra.mxu0 0.0
        %673 = vmatprep.subr.mxu0 0.0
        %674 = vmatpush1.msra.mxu0 0.0
        %675 = vmatprep.subr.mxu0 0.0
        %676 = vmatpush1.msra.mxu0 0.0
        %677 = vmatprep.subr.mxu0 0.0
        %678 = vmatpush1.msra.mxu0 0.0
        %679 = vmatprep.subr.mxu0 0.0
        %680 = vmatpush1.msra.mxu0 0.0
        %681 = vmatprep.subr.mxu0 0.0
        %682 = vmatpush1.msra.mxu0 0.0
        %683 = vmatprep.subr.mxu0 0.0
        %684 = vmatpush1.msra.mxu0 0.0
        %685 = vmatprep.subr.mxu0 0.0
        %686 = vmatpush1.msra.mxu0 0.0
        %687 = vmatprep.subr.mxu0 0.0
        %688 = vmatpush1.msra.mxu0 0.0
        %689 = vmatprep.subr.mxu0 0.0
        %690 = vmatpush1.msra.mxu0 0.0
        %691 = vmatprep.subr.mxu0 0.0
        %692 = vmatpush1.msra.mxu0 0.0
        %693 = vmatprep.mubr.f32.mxu0 0.0
        %694 = vmatmul.mubr.f32.gmra.mrb[0].mxu0 %v530
        %v695 = vpop.f32.mrb[0].mxu0
        %v696 = vadd.f32 0.0, %v695
        %v697 = vpop.f32.mrb[0].mxu0
        %698 = vmatprep.mubr.f32.mxu0 0.0
        %699 = vmatmul.mubr.f32.gmra.mrb[0].mxu0 %v533
        %v700 = vpop.f32.mrb[0].mxu0
        %v701 = vadd.f32 0.0, %v700
        %v702 = vpop.f32.mrb[0].mxu0
        %703 = vmatprep.mubr.f32.mxu0 0.0
        %704 = vmatmul.mubr.f32.gmra.mrb[0].mxu0 %v536
        %v705 = vpop.f32.mrb[0].mxu0
        %v706 = vadd.f32 0.0, %v705
        %v707 = vpop.f32.mrb[0].mxu0
        %708 = vmatprep.mubr.f32.mxu0 0.0
        %709 = vmatmul.mubr.f32.gmra.mrb[0].mxu0 %v539
        %v710 = vpop.f32.mrb[0].mxu0
        %v711 = vadd.f32 0.0, %v710
        %v712 = vpop.f32.mrb[0].mxu0
        %713 = vmatprep.mubr.f32.mxu0 0.0
        %714 = vmatmul.mubr.f32.gmra.mrb[0].mxu0 %v542
        %v715 = vpop.f32.mrb[0].mxu0
        %v716 = vadd.f32 0.0, %v715
        %v717 = vpop.f32.mrb[0].mxu0
        %718 = vmatprep.mubr.f32.mxu0 0.0
        %719 = vmatmul.mubr.f32.gmra.mrb[0].mxu0 %v545
        %v720 = vpop.f32.mrb[0].mxu0
        %v721 = vadd.f32 0.0, %v720
        %v722 = vpop.f32.mrb[0].mxu0
        %723 = vmatprep.mubr.f32.mxu0 0.0
        %724 = vmatmul.mubr.f32.gmra.mrb[0].mxu0 %v548
        %v725 = vpop.f32.mrb[0].mxu0
        %v726 = vadd.f32 0.0, %v725
        %v727 = vpop.f32.mrb[0].mxu0
        %728 = vmatprep.mubr.f32.mxu0 0.0
        %729 = vmatmul.mubr.f32.gmra.mrb[0].mxu0 %v551
        %v730 = vpop.f32.mrb[0].mxu0
        %v731 = vadd.f32 0.0, %v730
        %v732 = vpop.f32.mrb[0].mxu0
        %733 = vmatprep.mubr.f32.mxu0 0.0
        %734 = vmatmul.mubr.f32.gmra.mrb[0].mxu0 %v554
        %v735 = vpop.f32.mrb[0].mxu0
        %v736 = vadd.f32 0.0, %v735
        %v737 = vpop.f32.mrb[0].mxu0
        %738 = vmatprep.mubr.f32.mxu0 0.0
        %739 = vmatmul.mubr.f32.gmra.mrb[0].mxu0 %v557
        %v740 = vpop.f32.mrb[0].mxu0
        %v741 = vadd.f32 0.0, %v740
        %v742 = vpop.f32.mrb[0].mxu0
        %743 = vmatprep.mubr.f32.mxu0 0.0
        %744 = vmatmul.mubr.f32.gmra.mrb[0].mxu0 %v560
        %v745 = vpop.f32.mrb[0].mxu0
        %v746 = vadd.f32 0.0, %v745
        %v747 = vpop.f32.mrb[0].mxu0
        %748 = vmatprep.mubr.f32.mxu0 0.0
        %749 = vmatmul.mubr.f32.gmra.mrb[0].mxu0 %v563
        %v750 = vpop.f32.mrb[0].mxu0
        %v751 = vadd.f32 0.0, %v750
        %v752 = vpop.f32.mrb[0].mxu0
        %753 = vmatprep.mubr.f32.mxu0 0.0
        %754 = vmatmul.mubr.f32.gmra.mrb[0].mxu0 %v566
        %v755 = vpop.f32.mrb[0].mxu0
        %v756 = vadd.f32 0.0, %v755
        %v757 = vpop.f32.mrb[0].mxu0
        %758 = vmatprep.mubr.f32.mxu0 0.0
        %759 = vmatmul.mubr.f32.gmra.mrb[0].mxu0 %v569
        %v760 = vpop.f32.mrb[0].mxu0
        %v761 = vadd.f32 0.0, %v760
        %v762 = vpop.f32.mrb[0].mxu0
        %763 = vmatprep.mubr.f32.mxu0 0.0
        %764 = vmatmul.mubr.f32.gmra.mrb[0].mxu0 %v572
        %v765 = vpop.f32.mrb[0].mxu0
        %v766 = vadd.f32 0.0, %v765
        %v767 = vpop.f32.mrb[0].mxu0
        %768 = vmatprep.mubr.f32.mxu0 0.0
        %769 = vmatmul.mubr.f32.gmra.mrb[0].mxu0 %v575
        %v770 = vpop.f32.mrb[0].mxu0
        %v771 = vadd.f32 0.0, %v770
        %v772 = vpop.f32.mrb[0].mxu0
        %773 = vmatprep.mubr.f32.mxu0 0.0
        %774 = vmatmul.mubr.f32.gmra.mrb[0].mxu0 %v578
        %v775 = vpop.f32.mrb[0].mxu0
        %v776 = vadd.f32 0.0, %v775
        %v777 = vpop.f32.mrb[0].mxu0
        %778 = vmatprep.mubr.f32.mxu0 0.0
        %779 = vmatmul.mubr.f32.gmra.mrb[0].mxu0 %v581
        %v780 = vpop.f32.mrb[0].mxu0
        %v781 = vadd.f32 0.0, %v780
        %v782 = vpop.f32.mrb[0].mxu0
        %783 = vmatprep.mubr.f32.mxu0 0.0
        %784 = vmatmul.mubr.f32.gmra.mrb[0].mxu0 %v584
        %v785 = vpop.f32.mrb[0].mxu0
        %v786 = vadd.f32 0.0, %v785
        %v787 = vpop.f32.mrb[0].mxu0
        %788 = vmatprep.mubr.f32.mxu0 0.0
        %789 = vmatmul.mubr.f32.gmra.mrb[0].mxu0 %v587
        %v790 = vpop.f32.mrb[0].mxu0
        %v791 = vadd.f32 0.0, %v790
        %v792 = vpop.f32.mrb[0].mxu0
        %793 = vmatprep.mubr.f32.mxu0 0.0
        %794 = vmatmul.mubr.f32.gmra.mrb[0].mxu0 %v590
        %v795 = vpop.f32.mrb[0].mxu0
        %v796 = vadd.f32 0.0, %v795
        %v797 = vpop.f32.mrb[0].mxu0
        %798 = vmatprep.mubr.f32.mxu0 0.0
        %799 = vmatmul.mubr.f32.gmra.mrb[0].mxu0 %v593
        %v800 = vpop.f32.mrb[0].mxu0
        %v801 = vadd.f32 0.0, %v800
        %v802 = vpop.f32.mrb[0].mxu0
        %803 = vmatprep.mubr.f32.mxu0 0.0
        %804 = vmatmul.mubr.f32.gmra.mrb[0].mxu0 %v596
        %v805 = vpop.f32.mrb[0].mxu0
        %v806 = vadd.f32 0.0, %v805
        %v807 = vpop.f32.mrb[0].mxu0
        %808 = vmatprep.mubr.f32.mxu0 0.0
        %809 = vmatmul.mubr.f32.gmra.mrb[0].mxu0 %v599
        %v810 = vpop.f32.mrb[0].mxu0
        %v811 = vadd.f32 0.0, %v810
        %v812 = vpop.f32.mrb[0].mxu0
        %813 = vmatprep.mubr.f32.mxu0 0.0
        %814 = vmatmul.mubr.f32.gmra.mrb[0].mxu0 %v602
        %v815 = vpop.f32.mrb[0].mxu0
        %v816 = vadd.f32 0.0, %v815
        %v817 = vpop.f32.mrb[0].mxu0
        %818 = vmatprep.mubr.f32.mxu0 0.0
        %819 = vmatmul.mubr.f32.gmra.mrb[0].mxu0 %v605
        %v820 = vpop.f32.mrb[0].mxu0
        %v821 = vadd.f32 0.0, %v820
        %v822 = vpop.f32.mrb[0].mxu0
        %823 = vmatprep.mubr.f32.mxu0 0.0
        %824 = vmatmul.mubr.f32.gmra.mrb[0].mxu0 %v608
        %v825 = vpop.f32.mrb[0].mxu0
        %v826 = vadd.f32 0.0, %v825
        %v827 = vpop.f32.mrb[0].mxu0
        %828 = vmatprep.mubr.f32.mxu0 0.0
        %829 = vmatmul.mubr.f32.gmra.mrb[0].mxu0 %v611
        %v830 = vpop.f32.mrb[0].mxu0
        %v831 = vadd.f32 0.0, %v830
        %v832 = vpop.f32.mrb[0].mxu0
        %833 = vmatprep.mubr.f32.mxu0 0.0
        %834 = vmatmul.mubr.f32.gmra.mrb[0].mxu0 %v614
        %v835 = vpop.f32.mrb[0].mxu0
        %v836 = vadd.f32 0.0, %v835
        %v837 = vpop.f32.mrb[0].mxu0
        %838 = vmatprep.mubr.f32.mxu0 0.0
        %839 = vmatmul.mubr.f32.gmra.mrb[0].mxu0 %v617
        %v840 = vpop.f32.mrb[0].mxu0
        %v841 = vadd.f32 0.0, %v840
        %v842 = vpop.f32.mrb[0].mxu0
        %843 = vmatprep.mubr.f32.mxu0 0.0
        %844 = vmatmul.mubr.f32.gmra.mrb[0].mxu0 %v620
        %v845 = vpop.f32.mrb[0].mxu0
        %v846 = vadd.f32 0.0, %v845
        %v847 = vpop.f32.mrb[0].mxu0
        %848 = vmatprep.mubr.f32.mxu0 0.0
        %849 = vmatmul.mubr.f32.gmra.mrb[0].mxu0 %v623
        %v850 = vpop.f32.mrb[0].mxu0
        %v851 = vadd.f32 0.0, %v850
        %v852 = vpop.f32.mrb[0].mxu0
        %853 = vdwg.mxu0
        %v854 = vadd.f32 %v494, %v696
        %v855 = vadd.f32 %v494, %v701
        %v856 = vadd.f32 %v494, %v706
        %v857 = vadd.f32 %v494, %v711
        %v858 = vadd.f32 %v494, %v716
        %v859 = vadd.f32 %v494, %v721
        %v860 = vadd.f32 %v494, %v726
        %v861 = vadd.f32 %v494, %v731
        %v862 = vadd.f32 %v494, %v736
        %v863 = vadd.f32 %v494, %v741
        %v864 = vadd.f32 %v494, %v746
        %v865 = vadd.f32 %v494, %v751
        %v866 = vadd.f32 %v494, %v756
        %v867 = vadd.f32 %v494, %v761
        %v868 = vadd.f32 %v494, %v766
        %v869 = vadd.f32 %v494, %v771
        %v870 = vadd.f32 %v494, %v776
        %v871 = vadd.f32 %v494, %v781
        %v872 = vadd.f32 %v494, %v786
        %v873 = vadd.f32 %v494, %v791
        %v874 = vadd.f32 %v494, %v796
        %v875 = vadd.f32 %v494, %v801
        %v876 = vadd.f32 %v494, %v806
        %v877 = vadd.f32 %v494, %v811
        %v878 = vadd.f32 %v494, %v816
        %v879 = vadd.f32 %v494, %v821
        %v880 = vadd.f32 %v494, %v826
        %v881 = vadd.f32 %v494, %v831
        %v882 = vadd.f32 %v494, %v836
        %v883 = vadd.f32 %v494, %v841
        %v884 = vadd.f32 %v494, %v846
        %v885 = vadd.f32 %v494, %v851
        %v886 = vld [vmem:[#allocation2 + $0x1] sm:$0xff]
        %v887 = vld [vmem:[#allocation2 + $0x9] sm:$0xff]
        %v888 = vld [vmem:[#allocation2 + $0x19] sm:$0xff]
        %v889 = vld [vmem:[#allocation2 + $0x21] sm:$0xff]
        %v890 = vld [vmem:[#allocation2 + $0x31] sm:$0xff]
        %v891 = vld [vmem:[#allocation2 + $0x39] sm:$0xff]
        %v892 = vld [vmem:[#allocation2 + $0x49] sm:$0xff]
        %v893 = vld [vmem:[#allocation2 + $0x51] sm:$0xff]
        %v894 = vld [vmem:[#allocation2 + $0x61] sm:$0xff]
        %v895 = vld [vmem:[#allocation2 + $0x69] sm:$0xff]
        %v896 = vld [vmem:[#allocation2 + $0x79] sm:$0xff]
        %v897 = vld [vmem:[#allocation2 + $0x81] sm:$0xff]
        %v898 = vld [vmem:[#allocation2 + $0x91] sm:$0xff]
        %v899 = vld [vmem:[#allocation2 + $0x99] sm:$0xff]
        %v900 = vld [vmem:[#allocation2 + $0xa9] sm:$0xff]
        %v901 = vld [vmem:[#allocation2 + $0xb1] sm:$0xff]
        %v902 = vld [vmem:[#allocation2 + $0xc1] sm:$0xff]
        %v903 = vld [vmem:[#allocation2 + $0xc9] sm:$0xff]
        %v904 = vld [vmem:[#allocation2 + $0xd9] sm:$0xff]
        %v905 = vld [vmem:[#allocation2 + $0xe1] sm:$0xff]
        %v906 = vld [vmem:[#allocation2 + $0xf1] sm:$0xff]
        %v907 = vld [vmem:[#allocation2 + $0xf9] sm:$0xff]
        %v908 = vld [vmem:[#allocation2 + $0x109] sm:$0xff]
        %v909 = vld [vmem:[#allocation2 + $0x111] sm:$0xff]
        %v910 = vld [vmem:[#allocation2 + $0x121] sm:$0xff]
        %v911 = vld [vmem:[#allocation2 + $0x129] sm:$0xff]
        %v912 = vld [vmem:[#allocation2 + $0x139] sm:$0xff]
        %v913 = vld [vmem:[#allocation2 + $0x141] sm:$0xff]
        %v914 = vld [vmem:[#allocation2 + $0x151] sm:$0xff]
        %v915 = vld [vmem:[#allocation2 + $0x159] sm:$0xff]
        %v916 = vld [vmem:[#allocation2 + $0x169] sm:$0xff]
        %v917 = vld [vmem:[#allocation2 + $0x171] sm:$0xff]
        %s918 = scalar_lea.vmem %s3, 4
        %v919 = vld [vmem:[%s918] sm:$0xf]
        %v921 = vsel %vm456, %v886, 0
        %v924 = vsel %vm456, %v887, 0
        %v927 = vsel %vm456, %v888, 0
        %v930 = vsel %vm456, %v889, 0
        %v933 = vsel %vm456, %v890, 0
        %v936 = vsel %vm456, %v891, 0
        %v939 = vsel %vm456, %v892, 0
        %v942 = vsel %vm456, %v893, 0
        %v945 = vsel %vm456, %v894, 0
        %v948 = vsel %vm456, %v895, 0
        %v951 = vsel %vm456, %v896, 0
        %v954 = vsel %vm456, %v897, 0
        %v957 = vsel %vm456, %v898, 0
        %v960 = vsel %vm456, %v899, 0
        %v963 = vsel %vm456, %v900, 0
        %v966 = vsel %vm456, %v901, 0
        %v969 = vsel %vm456, %v902, 0
        %v972 = vsel %vm456, %v903, 0
        %v975 = vsel %vm456, %v904, 0
        %v978 = vsel %vm456, %v905, 0
        %v981 = vsel %vm456, %v906, 0
        %v984 = vsel %vm456, %v907, 0
        %v987 = vsel %vm456, %v908, 0
        %v990 = vsel %vm456, %v909, 0
        %v993 = vsel %vm456, %v910, 0
        %v996 = vsel %vm456, %v911, 0
        %v999 = vsel %vm456, %v912, 0
        %v1002 = vsel %vm456, %v913, 0
        %v1005 = vsel %vm456, %v914, 0
        %v1008 = vsel %vm456, %v915, 0
        %v1011 = vsel %vm456, %v916, 0
        %v1014 = vsel %vm456, %v917, 0
        %v1017 = vsel %vm625, %v919, 0
        %1019 = vmatprep.subr.mxu0 0.0
        %1020 = vmatpush1.msra.mxu0 %v1017
        %1021 = vmatprep.subr.mxu0 0.0
        %1022 = vmatpush1.msra.mxu0 0.0
        %1023 = vmatprep.subr.mxu0 0.0
        %1024 = vmatpush1.msra.mxu0 0.0
        %1025 = vmatprep.subr.mxu0 0.0
        %1026 = vmatpush1.msra.mxu0 0.0
        %1027 = vmatprep.subr.mxu0 0.0
        %1028 = vmatpush1.msra.mxu0 0.0
        %1029 = vmatprep.subr.mxu0 0.0
        %1030 = vmatpush1.msra.mxu0 0.0
        %1031 = vmatprep.subr.mxu0 0.0
        %1032 = vmatpush1.msra.mxu0 0.0
        %1033 = vmatprep.subr.mxu0 0.0
        %1034 = vmatpush1.msra.mxu0 0.0
        %1035 = vmatprep.subr.mxu0 0.0
        %1036 = vmatpush1.msra.mxu0 0.0
        %1037 = vmatprep.subr.mxu0 0.0
        %1038 = vmatpush1.msra.mxu0 0.0
        %1039 = vmatprep.subr.mxu0 0.0
        %1040 = vmatpush1.msra.mxu0 0.0
        %1041 = vmatprep.subr.mxu0 0.0
        %1042 = vmatpush1.msra.mxu0 0.0
        %1043 = vmatprep.subr.mxu0 0.0
        %1044 = vmatpush1.msra.mxu0 0.0
        %1045 = vmatprep.subr.mxu0 0.0
        %1046 = vmatpush1.msra.mxu0 0.0
        %1047 = vmatprep.subr.mxu0 0.0
        %1048 = vmatpush1.msra.mxu0 0.0
        %1049 = vmatprep.subr.mxu0 0.0
        %1050 = vmatpush1.msra.mxu0 0.0
        %1051 = vmatprep.subr.mxu0 0.0
        %1052 = vmatpush1.msra.mxu0 0.0
        %1053 = vmatprep.subr.mxu0 0.0
        %1054 = vmatpush1.msra.mxu0 0.0
        %1055 = vmatprep.subr.mxu0 0.0
        %1056 = vmatpush1.msra.mxu0 0.0
        %1057 = vmatprep.subr.mxu0 0.0
        %1058 = vmatpush1.msra.mxu0 0.0
        %1059 = vmatprep.subr.mxu0 0.0
        %1060 = vmatpush1.msra.mxu0 0.0
        %1061 = vmatprep.subr.mxu0 0.0
        %1062 = vmatpush1.msra.mxu0 0.0
        %1063 = vmatprep.subr.mxu0 0.0
        %1064 = vmatpush1.msra.mxu0 0.0
        %1065 = vmatprep.subr.mxu0 0.0
        %1066 = vmatpush1.msra.mxu0 0.0
        %1067 = vmatprep.subr.mxu0 0.0
        %1068 = vmatpush1.msra.mxu0 0.0
        %1069 = vmatprep.subr.mxu0 0.0
        %1070 = vmatpush1.msra.mxu0 0.0
        %1071 = vmatprep.subr.mxu0 0.0
        %1072 = vmatpush1.msra.mxu0 0.0
        %1073 = vmatprep.subr.mxu0 0.0
        %1074 = vmatpush1.msra.mxu0 0.0
        %1075 = vmatprep.subr.mxu0 0.0
        %1076 = vmatpush1.msra.mxu0 0.0
        %1077 = vmatprep.subr.mxu0 0.0
        %1078 = vmatpush1.msra.mxu0 0.0
        %1079 = vmatprep.subr.mxu0 0.0
        %1080 = vmatpush1.msra.mxu0 0.0
        %1081 = vmatprep.subr.mxu0 0.0
        %1082 = vmatpush1.msra.mxu0 0.0
        %1083 = vmatprep.mubr.f32.mxu0 0.0
        %1084 = vmatmul.mubr.f32.gmra.mrb[0].mxu0 %v921
        %v1085 = vpop.f32.mrb[0].mxu0
        %v1086 = vadd.f32 0.0, %v1085
        %v1087 = vpop.f32.mrb[0].mxu0
        %1088 = vmatprep.mubr.f32.mxu0 0.0
        %1089 = vmatmul.mubr.f32.gmra.mrb[0].mxu0 %v924
        %v1090 = vpop.f32.mrb[0].mxu0
        %v1091 = vadd.f32 0.0, %v1090
        %v1092 = vpop.f32.mrb[0].mxu0
        %1093 = vmatprep.mubr.f32.mxu0 0.0
        %1094 = vmatmul.mubr.f32.gmra.mrb[0].mxu0 %v927
        %v1095 = vpop.f32.mrb[0].mxu0
        %v1096 = vadd.f32 0.0, %v1095
        %v1097 = vpop.f32.mrb[0].mxu0
        %1098 = vmatprep.mubr.f32.mxu0 0.0
        %1099 = vmatmul.mubr.f32.gmra.mrb[0].mxu0 %v930
        %v1100 = vpop.f32.mrb[0].mxu0
        %v1101 = vadd.f32 0.0, %v1100
        %v1102 = vpop.f32.mrb[0].mxu0
        %1103 = vmatprep.mubr.f32.mxu0 0.0
        %1104 = vmatmul.mubr.f32.gmra.mrb[0].mxu0 %v933
        %v1105 = vpop.f32.mrb[0].mxu0
        %v1106 = vadd.f32 0.0, %v1105
        %v1107 = vpop.f32.mrb[0].mxu0
        %1108 = vmatprep.mubr.f32.mxu0 0.0
        %1109 = vmatmul.mubr.f32.gmra.mrb[0].mxu0 %v936
        %v1110 = vpop.f32.mrb[0].mxu0
        %v1111 = vadd.f32 0.0, %v1110
        %v1112 = vpop.f32.mrb[0].mxu0
        %1113 = vmatprep.mubr.f32.mxu0 0.0
        %1114 = vmatmul.mubr.f32.gmra.mrb[0].mxu0 %v939
        %v1115 = vpop.f32.mrb[0].mxu0
        %v1116 = vadd.f32 0.0, %v1115
        %v1117 = vpop.f32.mrb[0].mxu0
        %1118 = vmatprep.mubr.f32.mxu0 0.0
        %1119 = vmatmul.mubr.f32.gmra.mrb[0].mxu0 %v942
        %v1120 = vpop.f32.mrb[0].mxu0
        %v1121 = vadd.f32 0.0, %v1120
        %v1122 = vpop.f32.mrb[0].mxu0
        %1123 = vmatprep.mubr.f32.mxu0 0.0
        %1124 = vmatmul.mubr.f32.gmra.mrb[0].mxu0 %v945
        %v1125 = vpop.f32.mrb[0].mxu0
        %v1126 = vadd.f32 0.0, %v1125
        %v1127 = vpop.f32.mrb[0].mxu0
        %1128 = vmatprep.mubr.f32.mxu0 0.0
        %1129 = vmatmul.mubr.f32.gmra.mrb[0].mxu0 %v948
        %v1130 = vpop.f32.mrb[0].mxu0
        %v1131 = vadd.f32 0.0, %v1130
        %v1132 = vpop.f32.mrb[0].mxu0
        %1133 = vmatprep.mubr.f32.mxu0 0.0
        %1134 = vmatmul.mubr.f32.gmra.mrb[0].mxu0 %v951
        %v1135 = vpop.f32.mrb[0].mxu0
        %v1136 = vadd.f32 0.0, %v1135
        %v1137 = vpop.f32.mrb[0].mxu0
        %1138 = vmatprep.mubr.f32.mxu0 0.0
        %1139 = vmatmul.mubr.f32.gmra.mrb[0].mxu0 %v954
        %v1140 = vpop.f32.mrb[0].mxu0
        %v1141 = vadd.f32 0.0, %v1140
        %v1142 = vpop.f32.mrb[0].mxu0
        %1143 = vmatprep.mubr.f32.mxu0 0.0
        %1144 = vmatmul.mubr.f32.gmra.mrb[0].mxu0 %v957
        %v1145 = vpop.f32.mrb[0].mxu0
        %v1146 = vadd.f32 0.0, %v1145
        %v1147 = vpop.f32.mrb[0].mxu0
        %1148 = vmatprep.mubr.f32.mxu0 0.0
        %1149 = vmatmul.mubr.f32.gmra.mrb[0].mxu0 %v960
        %v1150 = vpop.f32.mrb[0].mxu0
        %v1151 = vadd.f32 0.0, %v1150
        %v1152 = vpop.f32.mrb[0].mxu0
        %1153 = vmatprep.mubr.f32.mxu0 0.0
        %1154 = vmatmul.mubr.f32.gmra.mrb[0].mxu0 %v963
        %v1155 = vpop.f32.mrb[0].mxu0
        %v1156 = vadd.f32 0.0, %v1155
        %v1157 = vpop.f32.mrb[0].mxu0
        %1158 = vmatprep.mubr.f32.mxu0 0.0
        %1159 = vmatmul.mubr.f32.gmra.mrb[0].mxu0 %v966
        %v1160 = vpop.f32.mrb[0].mxu0
        %v1161 = vadd.f32 0.0, %v1160
        %v1162 = vpop.f32.mrb[0].mxu0
        %1163 = vmatprep.mubr.f32.mxu0 0.0
        %1164 = vmatmul.mubr.f32.gmra.mrb[0].mxu0 %v969
        %v1165 = vpop.f32.mrb[0].mxu0
        %v1166 = vadd.f32 0.0, %v1165
        %v1167 = vpop.f32.mrb[0].mxu0
        %1168 = vmatprep.mubr.f32.mxu0 0.0
        %1169 = vmatmul.mubr.f32.gmra.mrb[0].mxu0 %v972
        %v1170 = vpop.f32.mrb[0].mxu0
        %v1171 = vadd.f32 0.0, %v1170
        %v1172 = vpop.f32.mrb[0].mxu0
        %1173 = vmatprep.mubr.f32.mxu0 0.0
        %1174 = vmatmul.mubr.f32.gmra.mrb[0].mxu0 %v975
        %v1175 = vpop.f32.mrb[0].mxu0
        %v1176 = vadd.f32 0.0, %v1175
        %v1177 = vpop.f32.mrb[0].mxu0
        %1178 = vmatprep.mubr.f32.mxu0 0.0
        %1179 = vmatmul.mubr.f32.gmra.mrb[0].mxu0 %v978
        %v1180 = vpop.f32.mrb[0].mxu0
        %v1181 = vadd.f32 0.0, %v1180
        %v1182 = vpop.f32.mrb[0].mxu0
        %1183 = vmatprep.mubr.f32.mxu0 0.0
        %1184 = vmatmul.mubr.f32.gmra.mrb[0].mxu0 %v981
        %v1185 = vpop.f32.mrb[0].mxu0
        %v1186 = vadd.f32 0.0, %v1185
        %v1187 = vpop.f32.mrb[0].mxu0
        %1188 = vmatprep.mubr.f32.mxu0 0.0
        %1189 = vmatmul.mubr.f32.gmra.mrb[0].mxu0 %v984
        %v1190 = vpop.f32.mrb[0].mxu0
        %v1191 = vadd.f32 0.0, %v1190
        %v1192 = vpop.f32.mrb[0].mxu0
        %1193 = vmatprep.mubr.f32.mxu0 0.0
        %1194 = vmatmul.mubr.f32.gmra.mrb[0].mxu0 %v987
        %v1195 = vpop.f32.mrb[0].mxu0
        %v1196 = vadd.f32 0.0, %v1195
        %v1197 = vpop.f32.mrb[0].mxu0
        %1198 = vmatprep.mubr.f32.mxu0 0.0
        %1199 = vmatmul.mubr.f32.gmra.mrb[0].mxu0 %v990
        %v1200 = vpop.f32.mrb[0].mxu0
        %v1201 = vadd.f32 0.0, %v1200
        %v1202 = vpop.f32.mrb[0].mxu0
        %1203 = vmatprep.mubr.f32.mxu0 0.0
        %1204 = vmatmul.mubr.f32.gmra.mrb[0].mxu0 %v993
        %v1205 = vpop.f32.mrb[0].mxu0
        %v1206 = vadd.f32 0.0, %v1205
        %v1207 = vpop.f32.mrb[0].mxu0
        %1208 = vmatprep.mubr.f32.mxu0 0.0
        %1209 = vmatmul.mubr.f32.gmra.mrb[0].mxu0 %v996
        %v1210 = vpop.f32.mrb[0].mxu0
        %v1211 = vadd.f32 0.0, %v1210
        %v1212 = vpop.f32.mrb[0].mxu0
        %1213 = vmatprep.mubr.f32.mxu0 0.0
        %1214 = vmatmul.mubr.f32.gmra.mrb[0].mxu0 %v999
        %v1215 = vpop.f32.mrb[0].mxu0
        %v1216 = vadd.f32 0.0, %v1215
        %v1217 = vpop.f32.mrb[0].mxu0
        %1218 = vmatprep.mubr.f32.mxu0 0.0
        %1219 = vmatmul.mubr.f32.gmra.mrb[0].mxu0 %v1002
        %v1220 = vpop.f32.mrb[0].mxu0
        %v1221 = vadd.f32 0.0, %v1220
        %v1222 = vpop.f32.mrb[0].mxu0
        %1223 = vmatprep.mubr.f32.mxu0 0.0
        %1224 = vmatmul.mubr.f32.gmra.mrb[0].mxu0 %v1005
        %v1225 = vpop.f32.mrb[0].mxu0
        %v1226 = vadd.f32 0.0, %v1225
        %v1227 = vpop.f32.mrb[0].mxu0
        %1228 = vmatprep.mubr.f32.mxu0 0.0
        %1229 = vmatmul.mubr.f32.gmra.mrb[0].mxu0 %v1008
        %v1230 = vpop.f32.mrb[0].mxu0
        %v1231 = vadd.f32 0.0, %v1230
        %v1232 = vpop.f32.mrb[0].mxu0
        %1233 = vmatprep.mubr.f32.mxu0 0.0
        %1234 = vmatmul.mubr.f32.gmra.mrb[0].mxu0 %v1011
        %v1235 = vpop.f32.mrb[0].mxu0
        %v1236 = vadd.f32 0.0, %v1235
        %v1237 = vpop.f32.mrb[0].mxu0
        %1238 = vmatprep.mubr.f32.mxu0 0.0
        %1239 = vmatmul.mubr.f32.gmra.mrb[0].mxu0 %v1014
        %v1240 = vpop.f32.mrb[0].mxu0
        %v1241 = vadd.f32 0.0, %v1240
        %v1242 = vpop.f32.mrb[0].mxu0
        %1243 = vdwg.mxu0
        %v1244 = vadd.f32 %v854, %v1086
        %v1245 = vadd.f32 %v855, %v1091
        %v1246 = vadd.f32 %v856, %v1096
        %v1247 = vadd.f32 %v857, %v1101
        %v1248 = vadd.f32 %v858, %v1106
        %v1249 = vadd.f32 %v859, %v1111
        %v1250 = vadd.f32 %v860, %v1116
        %v1251 = vadd.f32 %v861, %v1121
        %v1252 = vadd.f32 %v862, %v1126
        %v1253 = vadd.f32 %v863, %v1131
        %v1254 = vadd.f32 %v864, %v1136
        %v1255 = vadd.f32 %v865, %v1141
        %v1256 = vadd.f32 %v866, %v1146
        %v1257 = vadd.f32 %v867, %v1151
        %v1258 = vadd.f32 %v868, %v1156
        %v1259 = vadd.f32 %v869, %v1161
        %v1260 = vadd.f32 %v870, %v1166
        %v1261 = vadd.f32 %v871, %v1171
        %v1262 = vadd.f32 %v872, %v1176
        %v1263 = vadd.f32 %v873, %v1181
        %v1264 = vadd.f32 %v874, %v1186
        %v1265 = vadd.f32 %v875, %v1191
        %v1266 = vadd.f32 %v876, %v1196
        %v1267 = vadd.f32 %v877, %v1201
        %v1268 = vadd.f32 %v878, %v1206
        %v1269 = vadd.f32 %v879, %v1211
        %v1270 = vadd.f32 %v880, %v1216
        %v1271 = vadd.f32 %v881, %v1221
        %v1272 = vadd.f32 %v882, %v1226
        %v1273 = vadd.f32 %v883, %v1231
        %v1274 = vadd.f32 %v884, %v1236
        %v1275 = vadd.f32 %v885, %v1241
        %v1276 = vld [vmem:[#allocation2 + $0x2] sm:$0xff]
        %v1277 = vld [vmem:[#allocation2 + $0xa] sm:$0xff]
        %v1278 = vld [vmem:[#allocation2 + $0x1a] sm:$0xff]
        %v1279 = vld [vmem:[#allocation2 + $0x22] sm:$0xff]
        %v1280 = vld [vmem:[#allocation2 + $0x32] sm:$0xff]
        %v1281 = vld [vmem:[#allocation2 + $0x3a] sm:$0xff]
        %v1282 = vld [vmem:[#allocation2 + $0x4a] sm:$0xff]
        %v1283 = vld [vmem:[#allocation2 + $0x52] sm:$0xff]
        %v1284 = vld [vmem:[#allocation2 + $0x62] sm:$0xff]
        %v1285 = vld [vmem:[#allocation2 + $0x6a] sm:$0xff]
        %v1286 = vld [vmem:[#allocation2 + $0x7a] sm:$0xff]
        %v1287 = vld [vmem:[#allocation2 + $0x82] sm:$0xff]
        %v1288 = vld [vmem:[#allocation2 + $0x92] sm:$0xff]
        %v1289 = vld [vmem:[#allocation2 + $0x9a] sm:$0xff]
        %v1290 = vld [vmem:[#allocation2 + $0xaa] sm:$0xff]
        %v1291 = vld [vmem:[#allocation2 + $0xb2] sm:$0xff]
        %v1292 = vld [vmem:[#allocation2 + $0xc2] sm:$0xff]
        %v1293 = vld [vmem:[#allocation2 + $0xca] sm:$0xff]
        %v1294 = vld [vmem:[#allocation2 + $0xda] sm:$0xff]
        %v1295 = vld [vmem:[#allocation2 + $0xe2] sm:$0xff]
        %v1296 = vld [vmem:[#allocation2 + $0xf2] sm:$0xff]
        %v1297 = vld [vmem:[#allocation2 + $0xfa] sm:$0xff]
        %v1298 = vld [vmem:[#allocation2 + $0x10a] sm:$0xff]
        %v1299 = vld [vmem:[#allocation2 + $0x112] sm:$0xff]
        %v1300 = vld [vmem:[#allocation2 + $0x122] sm:$0xff]
        %v1301 = vld [vmem:[#allocation2 + $0x12a] sm:$0xff]
        %v1302 = vld [vmem:[#allocation2 + $0x13a] sm:$0xff]
        %v1303 = vld [vmem:[#allocation2 + $0x142] sm:$0xff]
        %v1304 = vld [vmem:[#allocation2 + $0x152] sm:$0xff]
        %v1305 = vld [vmem:[#allocation2 + $0x15a] sm:$0xff]
        %v1306 = vld [vmem:[#allocation2 + $0x16a] sm:$0xff]
        %v1307 = vld [vmem:[#allocation2 + $0x172] sm:$0xff]
        %s1308 = scalar_lea.vmem %s3, 8
        %v1309 = vld [vmem:[%s1308] sm:$0xf]
        %v1311 = vsel %vm456, %v1276, 0
        %v1314 = vsel %vm456, %v1277, 0
        %v1317 = vsel %vm456, %v1278, 0
        %v1320 = vsel %vm456, %v1279, 0
        %v1323 = vsel %vm456, %v1280, 0
        %v1326 = vsel %vm456, %v1281, 0
        %v1329 = vsel %vm456, %v1282, 0
        %v1332 = vsel %vm456, %v1283, 0
        %v1335 = vsel %vm456, %v1284, 0
        %v1338 = vsel %vm456, %v1285, 0
        %v1341 = vsel %vm456, %v1286, 0
        %v1344 = vsel %vm456, %v1287, 0
        %v1347 = vsel %vm456, %v1288, 0
        %v1350 = vsel %vm456, %v1289, 0
        %v1353 = vsel %vm456, %v1290, 0
        %v1356 = vsel %vm456, %v1291, 0
        %v1359 = vsel %vm456, %v1292, 0
        %v1362 = vsel %vm456, %v1293, 0
        %v1365 = vsel %vm456, %v1294, 0
        %v1368 = vsel %vm456, %v1295, 0
        %v1371 = vsel %vm456, %v1296, 0
        %v1374 = vsel %vm456, %v1297, 0
        %v1377 = vsel %vm456, %v1298, 0
        %v1380 = vsel %vm456, %v1299, 0
        %v1383 = vsel %vm456, %v1300, 0
        %v1386 = vsel %vm456, %v1301, 0
        %v1389 = vsel %vm456, %v1302, 0
        %v1392 = vsel %vm456, %v1303, 0
        %v1395 = vsel %vm456, %v1304, 0
        %v1398 = vsel %vm456, %v1305, 0
        %v1401 = vsel %vm456, %v1306, 0
        %v1404 = vsel %vm456, %v1307, 0
        %v1407 = vsel %vm625, %v1309, 0
        %1409 = vmatprep.subr.mxu0 0.0
        %1410 = vmatpush1.msra.mxu0 %v1407
        %1411 = vmatprep.subr.mxu0 0.0
        %1412 = vmatpush1.msra.mxu0 0.0
        %1413 = vmatprep.subr.mxu0 0.0
        %1414 = vmatpush1.msra.mxu0 0.0
        %1415 = vmatprep.subr.mxu0 0.0
        %1416 = vmatpush1.msra.mxu0 0.0
        %1417 = vmatprep.subr.mxu0 0.0
        %1418 = vmatpush1.msra.mxu0 0.0
        %1419 = vmatprep.subr.mxu0 0.0
        %1420 = vmatpush1.msra.mxu0 0.0
        %1421 = vmatprep.subr.mxu0 0.0
        %1422 = vmatpush1.msra.mxu0 0.0
        %1423 = vmatprep.subr.mxu0 0.0
        %1424 = vmatpush1.msra.mxu0 0.0
        %1425 = vmatprep.subr.mxu0 0.0
        %1426 = vmatpush1.msra.mxu0 0.0
        %1427 = vmatprep.subr.mxu0 0.0
        %1428 = vmatpush1.msra.mxu0 0.0
        %1429 = vmatprep.subr.mxu0 0.0
        %1430 = vmatpush1.msra.mxu0 0.0
        %1431 = vmatprep.subr.mxu0 0.0
        %1432 = vmatpush1.msra.mxu0 0.0
        %1433 = vmatprep.subr.mxu0 0.0
        %1434 = vmatpush1.msra.mxu0 0.0
        %1435 = vmatprep.subr.mxu0 0.0
        %1436 = vmatpush1.msra.mxu0 0.0
        %1437 = vmatprep.subr.mxu0 0.0
        %1438 = vmatpush1.msra.mxu0 0.0
        %1439 = vmatprep.subr.mxu0 0.0
        %1440 = vmatpush1.msra.mxu0 0.0
        %1441 = vmatprep.subr.mxu0 0.0
        %1442 = vmatpush1.msra.mxu0 0.0
        %1443 = vmatprep.subr.mxu0 0.0
        %1444 = vmatpush1.msra.mxu0 0.0
        %1445 = vmatprep.subr.mxu0 0.0
        %1446 = vmatpush1.msra.mxu0 0.0
        %1447 = vmatprep.subr.mxu0 0.0
        %1448 = vmatpush1.msra.mxu0 0.0
        %1449 = vmatprep.subr.mxu0 0.0
        %1450 = vmatpush1.msra.mxu0 0.0
        %1451 = vmatprep.subr.mxu0 0.0
        %1452 = vmatpush1.msra.mxu0 0.0
        %1453 = vmatprep.subr.mxu0 0.0
        %1454 = vmatpush1.msra.mxu0 0.0
        %1455 = vmatprep.subr.mxu0 0.0
        %1456 = vmatpush1.msra.mxu0 0.0
        %1457 = vmatprep.subr.mxu0 0.0
        %1458 = vmatpush1.msra.mxu0 0.0
        %1459 = vmatprep.subr.mxu0 0.0
        %1460 = vmatpush1.msra.mxu0 0.0
        %1461 = vmatprep.subr.mxu0 0.0
        %1462 = vmatpush1.msra.mxu0 0.0
        %1463 = vmatprep.subr.mxu0 0.0
        %1464 = vmatpush1.msra.mxu0 0.0
        %1465 = vmatprep.subr.mxu0 0.0
        %1466 = vmatpush1.msra.mxu0 0.0
        %1467 = vmatprep.subr.mxu0 0.0
        %1468 = vmatpush1.msra.mxu0 0.0
        %1469 = vmatprep.subr.mxu0 0.0
        %1470 = vmatpush1.msra.mxu0 0.0
        %1471 = vmatprep.subr.mxu0 0.0
        %1472 = vmatpush1.msra.mxu0 0.0
        %1473 = vmatprep.mubr.f32.mxu0 0.0
        %1474 = vmatmul.mubr.f32.gmra.mrb[0].mxu0 %v1311
        %v1475 = vpop.f32.mrb[0].mxu0
        %v1476 = vadd.f32 0.0, %v1475
        %v1477 = vpop.f32.mrb[0].mxu0
        %1478 = vmatprep.mubr.f32.mxu0 0.0
        %1479 = vmatmul.mubr.f32.gmra.mrb[0].mxu0 %v1314
        %v1480 = vpop.f32.mrb[0].mxu0
        %v1481 = vadd.f32 0.0, %v1480
        %v1482 = vpop.f32.mrb[0].mxu0
        %1483 = vmatprep.mubr.f32.mxu0 0.0
        %1484 = vmatmul.mubr.f32.gmra.mrb[0].mxu0 %v1317
        %v1485 = vpop.f32.mrb[0].mxu0
        %v1486 = vadd.f32 0.0, %v1485
        %v1487 = vpop.f32.mrb[0].mxu0
        %1488 = vmatprep.mubr.f32.mxu0 0.0
        %1489 = vmatmul.mubr.f32.gmra.mrb[0].mxu0 %v1320
        %v1490 = vpop.f32.mrb[0].mxu0
        %v1491 = vadd.f32 0.0, %v1490
        %v1492 = vpop.f32.mrb[0].mxu0
        %1493 = vmatprep.mubr.f32.mxu0 0.0
        %1494 = vmatmul.mubr.f32.gmra.mrb[0].mxu0 %v1323
        %v1495 = vpop.f32.mrb[0].mxu0
        %v1496 = vadd.f32 0.0, %v1495
        %v1497 = vpop.f32.mrb[0].mxu0
        %1498 = vmatprep.mubr.f32.mxu0 0.0
        %1499 = vmatmul.mubr.f32.gmra.mrb[0].mxu0 %v1326
        %v1500 = vpop.f32.mrb[0].mxu0
        %v1501 = vadd.f32 0.0, %v1500
        %v1502 = vpop.f32.mrb[0].mxu0
        %1503 = vmatprep.mubr.f32.mxu0 0.0
        %1504 = vmatmul.mubr.f32.gmra.mrb[0].mxu0 %v1329
        %v1505 = vpop.f32.mrb[0].mxu0
        %v1506 = vadd.f32 0.0, %v1505
        %v1507 = vpop.f32.mrb[0].mxu0
        %1508 = vmatprep.mubr.f32.mxu0 0.0
        %1509 = vmatmul.mubr.f32.gmra.mrb[0].mxu0 %v1332
        %v1510 = vpop.f32.mrb[0].mxu0
        %v1511 = vadd.f32 0.0, %v1510
        %v1512 = vpop.f32.mrb[0].mxu0
        %1513 = vmatprep.mubr.f32.mxu0 0.0
        %1514 = vmatmul.mubr.f32.gmra.mrb[0].mxu0 %v1335
        %v1515 = vpop.f32.mrb[0].mxu0
        %v1516 = vadd.f32 0.0, %v1515
        %v1517 = vpop.f32.mrb[0].mxu0
        %1518 = vmatprep.mubr.f32.mxu0 0.0
        %1519 = vmatmul.mubr.f32.gmra.mrb[0].mxu0 %v1338
        %v1520 = vpop.f32.mrb[0].mxu0
        %v1521 = vadd.f32 0.0, %v1520
        %v1522 = vpop.f32.mrb[0].mxu0
        %1523 = vmatprep.mubr.f32.mxu0 0.0
        %1524 = vmatmul.mubr.f32.gmra.mrb[0].mxu0 %v1341
        %v1525 = vpop.f32.mrb[0].mxu0
        %v1526 = vadd.f32 0.0, %v1525
        %v1527 = vpop.f32.mrb[0].mxu0
        %1528 = vmatprep.mubr.f32.mxu0 0.0
        %1529 = vmatmul.mubr.f32.gmra.mrb[0].mxu0 %v1344
        %v1530 = vpop.f32.mrb[0].mxu0
        %v1531 = vadd.f32 0.0, %v1530
        %v1532 = vpop.f32.mrb[0].mxu0
        %1533 = vmatprep.mubr.f32.mxu0 0.0
        %1534 = vmatmul.mubr.f32.gmra.mrb[0].mxu0 %v1347
        %v1535 = vpop.f32.mrb[0].mxu0
        %v1536 = vadd.f32 0.0, %v1535
        %v1537 = vpop.f32.mrb[0].mxu0
        %1538 = vmatprep.mubr.f32.mxu0 0.0
        %1539 = vmatmul.mubr.f32.gmra.mrb[0].mxu0 %v1350
        %v1540 = vpop.f32.mrb[0].mxu0
        %v1541 = vadd.f32 0.0, %v1540
        %v1542 = vpop.f32.mrb[0].mxu0
        %1543 = vmatprep.mubr.f32.mxu0 0.0
        %1544 = vmatmul.mubr.f32.gmra.mrb[0].mxu0 %v1353
        %v1545 = vpop.f32.mrb[0].mxu0
        %v1546 = vadd.f32 0.0, %v1545
        %v1547 = vpop.f32.mrb[0].mxu0
        %1548 = vmatprep.mubr.f32.mxu0 0.0
        %1549 = vmatmul.mubr.f32.gmra.mrb[0].mxu0 %v1356
        %v1550 = vpop.f32.mrb[0].mxu0
        %v1551 = vadd.f32 0.0, %v1550
        %v1552 = vpop.f32.mrb[0].mxu0
        %1553 = vmatprep.mubr.f32.mxu0 0.0
        %1554 = vmatmul.mubr.f32.gmra.mrb[0].mxu0 %v1359
        %v1555 = vpop.f32.mrb[0].mxu0
        %v1556 = vadd.f32 0.0, %v1555
        %v1557 = vpop.f32.mrb[0].mxu0
        %1558 = vmatprep.mubr.f32.mxu0 0.0
        %1559 = vmatmul.mubr.f32.gmra.mrb[0].mxu0 %v1362
        %v1560 = vpop.f32.mrb[0].mxu0
        %v1561 = vadd.f32 0.0, %v1560
        %v1562 = vpop.f32.mrb[0].mxu0
        %1563 = vmatprep.mubr.f32.mxu0 0.0
        %1564 = vmatmul.mubr.f32.gmra.mrb[0].mxu0 %v1365
        %v1565 = vpop.f32.mrb[0].mxu0
        %v1566 = vadd.f32 0.0, %v1565
        %v1567 = vpop.f32.mrb[0].mxu0
        %1568 = vmatprep.mubr.f32.mxu0 0.0
        %1569 = vmatmul.mubr.f32.gmra.mrb[0].mxu0 %v1368
        %v1570 = vpop.f32.mrb[0].mxu0
        %v1571 = vadd.f32 0.0, %v1570
        %v1572 = vpop.f32.mrb[0].mxu0
        %1573 = vmatprep.mubr.f32.mxu0 0.0
        %1574 = vmatmul.mubr.f32.gmra.mrb[0].mxu0 %v1371
        %v1575 = vpop.f32.mrb[0].mxu0
        %v1576 = vadd.f32 0.0, %v1575
        %v1577 = vpop.f32.mrb[0].mxu0
        %1578 = vmatprep.mubr.f32.mxu0 0.0
        %1579 = vmatmul.mubr.f32.gmra.mrb[0].mxu0 %v1374
        %v1580 = vpop.f32.mrb[0].mxu0
        %v1581 = vadd.f32 0.0, %v1580
        %v1582 = vpop.f32.mrb[0].mxu0
        %1583 = vmatprep.mubr.f32.mxu0 0.0
        %1584 = vmatmul.mubr.f32.gmra.mrb[0].mxu0 %v1377
        %v1585 = vpop.f32.mrb[0].mxu0
        %v1586 = vadd.f32 0.0, %v1585
        %v1587 = vpop.f32.mrb[0].mxu0
        %1588 = vmatprep.mubr.f32.mxu0 0.0
        %1589 = vmatmul.mubr.f32.gmra.mrb[0].mxu0 %v1380
        %v1590 = vpop.f32.mrb[0].mxu0
        %v1591 = vadd.f32 0.0, %v1590
        %v1592 = vpop.f32.mrb[0].mxu0
        %1593 = vmatprep.mubr.f32.mxu0 0.0
        %1594 = vmatmul.mubr.f32.gmra.mrb[0].mxu0 %v1383
        %v1595 = vpop.f32.mrb[0].mxu0
        %v1596 = vadd.f32 0.0, %v1595
        %v1597 = vpop.f32.mrb[0].mxu0
        %1598 = vmatprep.mubr.f32.mxu0 0.0
        %1599 = vmatmul.mubr.f32.gmra.mrb[0].mxu0 %v1386
        %v1600 = vpop.f32.mrb[0].mxu0
        %v1601 = vadd.f32 0.0, %v1600
        %v1602 = vpop.f32.mrb[0].mxu0
        %1603 = vmatprep.mubr.f32.mxu0 0.0
        %1604 = vmatmul.mubr.f32.gmra.mrb[0].mxu0 %v1389
        %v1605 = vpop.f32.mrb[0].mxu0
        %v1606 = vadd.f32 0.0, %v1605
        %v1607 = vpop.f32.mrb[0].mxu0
        %1608 = vmatprep.mubr.f32.mxu0 0.0
        %1609 = vmatmul.mubr.f32.gmra.mrb[0].mxu0 %v1392
        %v1610 = vpop.f32.mrb[0].mxu0
        %v1611 = vadd.f32 0.0, %v1610
        %v1612 = vpop.f32.mrb[0].mxu0
        %1613 = vmatprep.mubr.f32.mxu0 0.0
        %1614 = vmatmul.mubr.f32.gmra.mrb[0].mxu0 %v1395
        %v1615 = vpop.f32.mrb[0].mxu0
        %v1616 = vadd.f32 0.0, %v1615
        %v1617 = vpop.f32.mrb[0].mxu0
        %1618 = vmatprep.mubr.f32.mxu0 0.0
        %1619 = vmatmul.mubr.f32.gmra.mrb[0].mxu0 %v1398
        %v1620 = vpop.f32.mrb[0].mxu0
        %v1621 = vadd.f32 0.0, %v1620
        %v1622 = vpop.f32.mrb[0].mxu0
        %1623 = vmatprep.mubr.f32.mxu0 0.0
        %1624 = vmatmul.mubr.f32.gmra.mrb[0].mxu0 %v1401
        %v1625 = vpop.f32.mrb[0].mxu0
        %v1626 = vadd.f32 0.0, %v1625
        %v1627 = vpop.f32.mrb[0].mxu0
        %1628 = vmatprep.mubr.f32.mxu0 0.0
        %1629 = vmatmul.mubr.f32.gmra.mrb[0].mxu0 %v1404
        %v1630 = vpop.f32.mrb[0].mxu0
        %v1631 = vadd.f32 0.0, %v1630
        %v1632 = vpop.f32.mrb[0].mxu0
        %1633 = vdwg.mxu0
        %v1634 = vadd.f32 %v1244, %v1476
        %v1635 = vadd.f32 %v1245, %v1481
        %v1636 = vadd.f32 %v1246, %v1486
        %v1637 = vadd.f32 %v1247, %v1491
        %v1638 = vadd.f32 %v1248, %v1496
        %v1639 = vadd.f32 %v1249, %v1501
        %v1640 = vadd.f32 %v1250, %v1506
        %v1641 = vadd.f32 %v1251, %v1511
        %v1642 = vadd.f32 %v1252, %v1516
        %v1643 = vadd.f32 %v1253, %v1521
        %v1644 = vadd.f32 %v1254, %v1526
        %v1645 = vadd.f32 %v1255, %v1531
        %v1646 = vadd.f32 %v1256, %v1536
        %v1647 = vadd.f32 %v1257, %v1541
        %v1648 = vadd.f32 %v1258, %v1546
        %v1649 = vadd.f32 %v1259, %v1551
        %v1650 = vadd.f32 %v1260, %v1556
        %v1651 = vadd.f32 %v1261, %v1561
        %v1652 = vadd.f32 %v1262, %v1566
        %v1653 = vadd.f32 %v1263, %v1571
        %v1654 = vadd.f32 %v1264, %v1576
        %v1655 = vadd.f32 %v1265, %v1581
        %v1656 = vadd.f32 %v1266, %v1586
        %v1657 = vadd.f32 %v1267, %v1591
        %v1658 = vadd.f32 %v1268, %v1596
        %v1659 = vadd.f32 %v1269, %v1601
        %v1660 = vadd.f32 %v1270, %v1606
        %v1661 = vadd.f32 %v1271, %v1611
        %v1662 = vadd.f32 %v1272, %v1616
        %v1663 = vadd.f32 %v1273, %v1621
        %v1664 = vadd.f32 %v1274, %v1626
        %v1665 = vadd.f32 %v1275, %v1631
        %v1666 = vld [vmem:[%s455] sm:$0xff]
        %v1667 = vld [vmem:[%s455 + $0x8] sm:$0xff]
        %v1668 = vld [vmem:[%s455 + $0x18] sm:$0xff]
        %v1669 = vld [vmem:[%s455 + $0x20] sm:$0xff]
        %v1670 = vld [vmem:[%s455 + $0x30] sm:$0xff]
        %v1671 = vld [vmem:[%s455 + $0x38] sm:$0xff]
        %v1672 = vld [vmem:[%s455 + $0x48] sm:$0xff]
        %v1673 = vld [vmem:[%s455 + $0x50] sm:$0xff]
        %v1674 = vld [vmem:[%s455 + $0x60] sm:$0xff]
        %v1675 = vld [vmem:[%s455 + $0x68] sm:$0xff]
        %v1676 = vld [vmem:[%s455 + $0x78] sm:$0xff]
        %v1677 = vld [vmem:[%s455 + $0x80] sm:$0xff]
        %v1678 = vld [vmem:[%s455 + $0x90] sm:$0xff]
        %v1679 = vld [vmem:[%s455 + $0x98] sm:$0xff]
        %v1680 = vld [vmem:[%s455 + $0xa8] sm:$0xff]
        %v1681 = vld [vmem:[%s455 + $0xb0] sm:$0xff]
        %v1682 = vld [vmem:[%s455 + $0xc0] sm:$0xff]
        %v1683 = vld [vmem:[%s455 + $0xc8] sm:$0xff]
        %v1684 = vld [vmem:[%s455 + $0xd8] sm:$0xff]
        %v1685 = vld [vmem:[%s455 + $0xe0] sm:$0xff]
        %v1686 = vld [vmem:[%s455 + $0xf0] sm:$0xff]
        %v1687 = vld [vmem:[%s455 + $0xf8] sm:$0xff]
        %v1688 = vld [vmem:[%s455 + $0x108] sm:$0xff]
        %v1689 = vld [vmem:[%s455 + $0x110] sm:$0xff]
        %v1690 = vld [vmem:[%s455 + $0x120] sm:$0xff]
        %v1691 = vld [vmem:[%s455 + $0x128] sm:$0xff]
        %v1692 = vld [vmem:[%s455 + $0x138] sm:$0xff]
        %v1693 = vld [vmem:[%s455 + $0x140] sm:$0xff]
        %v1694 = vld [vmem:[%s455 + $0x150] sm:$0xff]
        %v1695 = vld [vmem:[%s455 + $0x158] sm:$0xff]
        %v1696 = vld [vmem:[%s455 + $0x168] sm:$0xff]
        %v1697 = vld [vmem:[%s455 + $0x170] sm:$0xff]
        %s1698 = scalar_lea.vmem %s3, 12
        %v1699 = vld [vmem:[%s1698] sm:$0xf]
        %v1701 = vsel %vm456, %v1666, 0
        %v1704 = vsel %vm456, %v1667, 0
        %v1707 = vsel %vm456, %v1668, 0
        %v1710 = vsel %vm456, %v1669, 0
        %v1713 = vsel %vm456, %v1670, 0
        %v1716 = vsel %vm456, %v1671, 0
        %v1719 = vsel %vm456, %v1672, 0
        %v1722 = vsel %vm456, %v1673, 0
        %v1725 = vsel %vm456, %v1674, 0
        %v1728 = vsel %vm456, %v1675, 0
        %v1731 = vsel %vm456, %v1676, 0
        %v1734 = vsel %vm456, %v1677, 0
        %v1737 = vsel %vm456, %v1678, 0
        %v1740 = vsel %vm456, %v1679, 0
        %v1743 = vsel %vm456, %v1680, 0
        %v1746 = vsel %vm456, %v1681, 0
        %v1749 = vsel %vm456, %v1682, 0
        %v1752 = vsel %vm456, %v1683, 0
        %v1755 = vsel %vm456, %v1684, 0
        %v1758 = vsel %vm456, %v1685, 0
        %v1761 = vsel %vm456, %v1686, 0
        %v1764 = vsel %vm456, %v1687, 0
        %v1767 = vsel %vm456, %v1688, 0
        %v1770 = vsel %vm456, %v1689, 0
        %v1773 = vsel %vm456, %v1690, 0
        %v1776 = vsel %vm456, %v1691, 0
        %v1779 = vsel %vm456, %v1692, 0
        %v1782 = vsel %vm456, %v1693, 0
        %v1785 = vsel %vm456, %v1694, 0
        %v1788 = vsel %vm456, %v1695, 0
        %v1791 = vsel %vm456, %v1696, 0
        %v1794 = vsel %vm456, %v1697, 0
        %v1797 = vsel %vm625, %v1699, 0
        %1799 = vmatprep.subr.mxu0 0.0
        %1800 = vmatpush1.msra.mxu0 %v1797
        %1801 = vmatprep.subr.mxu0 0.0
        %1802 = vmatpush1.msra.mxu0 0.0
        %1803 = vmatprep.subr.mxu0 0.0
        %1804 = vmatpush1.msra.mxu0 0.0
        %1805 = vmatprep.subr.mxu0 0.0
        %1806 = vmatpush1.msra.mxu0 0.0
        %1807 = vmatprep.subr.mxu0 0.0
        %1808 = vmatpush1.msra.mxu0 0.0
        %1809 = vmatprep.subr.mxu0 0.0
        %1810 = vmatpush1.msra.mxu0 0.0
        %1811 = vmatprep.subr.mxu0 0.0
        %1812 = vmatpush1.msra.mxu0 0.0
        %1813 = vmatprep.subr.mxu0 0.0
        %1814 = vmatpush1.msra.mxu0 0.0
        %1815 = vmatprep.subr.mxu0 0.0
        %1816 = vmatpush1.msra.mxu0 0.0
        %1817 = vmatprep.subr.mxu0 0.0
        %1818 = vmatpush1.msra.mxu0 0.0
        %1819 = vmatprep.subr.mxu0 0.0
        %1820 = vmatpush1.msra.mxu0 0.0
        %1821 = vmatprep.subr.mxu0 0.0
        %1822 = vmatpush1.msra.mxu0 0.0
        %1823 = vmatprep.subr.mxu0 0.0
        %1824 = vmatpush1.msra.mxu0 0.0
        %1825 = vmatprep.subr.mxu0 0.0
        %1826 = vmatpush1.msra.mxu0 0.0
        %1827 = vmatprep.subr.mxu0 0.0
        %1828 = vmatpush1.msra.mxu0 0.0
        %1829 = vmatprep.subr.mxu0 0.0
        %1830 = vmatpush1.msra.mxu0 0.0
        %1831 = vmatprep.subr.mxu0 0.0
        %1832 = vmatpush1.msra.mxu0 0.0
        %1833 = vmatprep.subr.mxu0 0.0
        %1834 = vmatpush1.msra.mxu0 0.0
        %1835 = vmatprep.subr.mxu0 0.0
        %1836 = vmatpush1.msra.mxu0 0.0
        %1837 = vmatprep.subr.mxu0 0.0
        %1838 = vmatpush1.msra.mxu0 0.0
        %1839 = vmatprep.subr.mxu0 0.0
        %1840 = vmatpush1.msra.mxu0 0.0
        %1841 = vmatprep.subr.mxu0 0.0
        %1842 = vmatpush1.msra.mxu0 0.0
        %1843 = vmatprep.subr.mxu0 0.0
        %1844 = vmatpush1.msra.mxu0 0.0
        %1845 = vmatprep.subr.mxu0 0.0
        %1846 = vmatpush1.msra.mxu0 0.0
        %1847 = vmatprep.subr.mxu0 0.0
        %1848 = vmatpush1.msra.mxu0 0.0
        %1849 = vmatprep.subr.mxu0 0.0
        %1850 = vmatpush1.msra.mxu0 0.0
        %1851 = vmatprep.subr.mxu0 0.0
        %1852 = vmatpush1.msra.mxu0 0.0
        %1853 = vmatprep.subr.mxu0 0.0
        %1854 = vmatpush1.msra.mxu0 0.0
        %1855 = vmatprep.subr.mxu0 0.0
        %1856 = vmatpush1.msra.mxu0 0.0
        %1857 = vmatprep.subr.mxu0 0.0
        %1858 = vmatpush1.msra.mxu0 0.0
        %1859 = vmatprep.subr.mxu0 0.0
        %1860 = vmatpush1.msra.mxu0 0.0
        %1861 = vmatprep.subr.mxu0 0.0
        %1862 = vmatpush1.msra.mxu0 0.0
        %1863 = vmatprep.mubr.f32.mxu0 0.0
        %1864 = vmatmul.mubr.f32.gmra.mrb[0].mxu0 %v1701
        %v1865 = vpop.f32.mrb[0].mxu0
        %v1866 = vadd.f32 0.0, %v1865
        %v1867 = vpop.f32.mrb[0].mxu0
        %1868 = vmatprep.mubr.f32.mxu0 0.0
        %1869 = vmatmul.mubr.f32.gmra.mrb[0].mxu0 %v1704
        %v1870 = vpop.f32.mrb[0].mxu0
        %v1871 = vadd.f32 0.0, %v1870
        %v1872 = vpop.f32.mrb[0].mxu0
        %1873 = vmatprep.mubr.f32.mxu0 0.0
        %1874 = vmatmul.mubr.f32.gmra.mrb[0].mxu0 %v1707
        %v1875 = vpop.f32.mrb[0].mxu0
        %v1876 = vadd.f32 0.0, %v1875
        %v1877 = vpop.f32.mrb[0].mxu0
        %1878 = vmatprep.mubr.f32.mxu0 0.0
        %1879 = vmatmul.mubr.f32.gmra.mrb[0].mxu0 %v1710
        %v1880 = vpop.f32.mrb[0].mxu0
        %v1881 = vadd.f32 0.0, %v1880
        %v1882 = vpop.f32.mrb[0].mxu0
        %1883 = vmatprep.mubr.f32.mxu0 0.0
        %1884 = vmatmul.mubr.f32.gmra.mrb[0].mxu0 %v1713
        %v1885 = vpop.f32.mrb[0].mxu0
        %v1886 = vadd.f32 0.0, %v1885
        %v1887 = vpop.f32.mrb[0].mxu0
        %1888 = vmatprep.mubr.f32.mxu0 0.0
        %1889 = vmatmul.mubr.f32.gmra.mrb[0].mxu0 %v1716
        %v1890 = vpop.f32.mrb[0].mxu0
        %v1891 = vadd.f32 0.0, %v1890
        %v1892 = vpop.f32.mrb[0].mxu0
        %1893 = vmatprep.mubr.f32.mxu0 0.0
        %1894 = vmatmul.mubr.f32.gmra.mrb[0].mxu0 %v1719
        %v1895 = vpop.f32.mrb[0].mxu0
        %v1896 = vadd.f32 0.0, %v1895
        %v1897 = vpop.f32.mrb[0].mxu0
        %1898 = vmatprep.mubr.f32.mxu0 0.0
        %1899 = vmatmul.mubr.f32.gmra.mrb[0].mxu0 %v1722
        %v1900 = vpop.f32.mrb[0].mxu0
        %v1901 = vadd.f32 0.0, %v1900
        %v1902 = vpop.f32.mrb[0].mxu0
        %1903 = vmatprep.mubr.f32.mxu0 0.0
        %1904 = vmatmul.mubr.f32.gmra.mrb[0].mxu0 %v1725
        %v1905 = vpop.f32.mrb[0].mxu0
        %v1906 = vadd.f32 0.0, %v1905
        %v1907 = vpop.f32.mrb[0].mxu0
        %1908 = vmatprep.mubr.f32.mxu0 0.0
        %1909 = vmatmul.mubr.f32.gmra.mrb[0].mxu0 %v1728
        %v1910 = vpop.f32.mrb[0].mxu0
        %v1911 = vadd.f32 0.0, %v1910
        %v1912 = vpop.f32.mrb[0].mxu0
        %1913 = vmatprep.mubr.f32.mxu0 0.0
        %1914 = vmatmul.mubr.f32.gmra.mrb[0].mxu0 %v1731
        %v1915 = vpop.f32.mrb[0].mxu0
        %v1916 = vadd.f32 0.0, %v1915
        %v1917 = vpop.f32.mrb[0].mxu0
        %1918 = vmatprep.mubr.f32.mxu0 0.0
        %1919 = vmatmul.mubr.f32.gmra.mrb[0].mxu0 %v1734
        %v1920 = vpop.f32.mrb[0].mxu0
        %v1921 = vadd.f32 0.0, %v1920
        %v1922 = vpop.f32.mrb[0].mxu0
        %1923 = vmatprep.mubr.f32.mxu0 0.0
        %1924 = vmatmul.mubr.f32.gmra.mrb[0].mxu0 %v1737
        %v1925 = vpop.f32.mrb[0].mxu0
        %v1926 = vadd.f32 0.0, %v1925
        %v1927 = vpop.f32.mrb[0].mxu0
        %1928 = vmatprep.mubr.f32.mxu0 0.0
        %1929 = vmatmul.mubr.f32.gmra.mrb[0].mxu0 %v1740
        %v1930 = vpop.f32.mrb[0].mxu0
        %v1931 = vadd.f32 0.0, %v1930
        %v1932 = vpop.f32.mrb[0].mxu0
        %1933 = vmatprep.mubr.f32.mxu0 0.0
        %1934 = vmatmul.mubr.f32.gmra.mrb[0].mxu0 %v1743
        %v1935 = vpop.f32.mrb[0].mxu0
        %v1936 = vadd.f32 0.0, %v1935
        %v1937 = vpop.f32.mrb[0].mxu0
        %1938 = vmatprep.mubr.f32.mxu0 0.0
        %1939 = vmatmul.mubr.f32.gmra.mrb[0].mxu0 %v1746
        %v1940 = vpop.f32.mrb[0].mxu0
        %v1941 = vadd.f32 0.0, %v1940
        %v1942 = vpop.f32.mrb[0].mxu0
        %1943 = vmatprep.mubr.f32.mxu0 0.0
        %1944 = vmatmul.mubr.f32.gmra.mrb[0].mxu0 %v1749
        %v1945 = vpop.f32.mrb[0].mxu0
        %v1946 = vadd.f32 0.0, %v1945
        %v1947 = vpop.f32.mrb[0].mxu0
        %1948 = vmatprep.mubr.f32.mxu0 0.0
        %1949 = vmatmul.mubr.f32.gmra.mrb[0].mxu0 %v1752
        %v1950 = vpop.f32.mrb[0].mxu0
        %v1951 = vadd.f32 0.0, %v1950
        %v1952 = vpop.f32.mrb[0].mxu0
        %1953 = vmatprep.mubr.f32.mxu0 0.0
        %1954 = vmatmul.mubr.f32.gmra.mrb[0].mxu0 %v1755
        %v1955 = vpop.f32.mrb[0].mxu0
        %v1956 = vadd.f32 0.0, %v1955
        %v1957 = vpop.f32.mrb[0].mxu0
        %1958 = vmatprep.mubr.f32.mxu0 0.0
        %1959 = vmatmul.mubr.f32.gmra.mrb[0].mxu0 %v1758
        %v1960 = vpop.f32.mrb[0].mxu0
        %v1961 = vadd.f32 0.0, %v1960
        %v1962 = vpop.f32.mrb[0].mxu0
        %1963 = vmatprep.mubr.f32.mxu0 0.0
        %1964 = vmatmul.mubr.f32.gmra.mrb[0].mxu0 %v1761
        %v1965 = vpop.f32.mrb[0].mxu0
        %v1966 = vadd.f32 0.0, %v1965
        %v1967 = vpop.f32.mrb[0].mxu0
        %1968 = vmatprep.mubr.f32.mxu0 0.0
        %1969 = vmatmul.mubr.f32.gmra.mrb[0].mxu0 %v1764
        %v1970 = vpop.f32.mrb[0].mxu0
        %v1971 = vadd.f32 0.0, %v1970
        %v1972 = vpop.f32.mrb[0].mxu0
        %1973 = vmatprep.mubr.f32.mxu0 0.0
        %1974 = vmatmul.mubr.f32.gmra.mrb[0].mxu0 %v1767
        %v1975 = vpop.f32.mrb[0].mxu0
        %v1976 = vadd.f32 0.0, %v1975
        %v1977 = vpop.f32.mrb[0].mxu0
        %1978 = vmatprep.mubr.f32.mxu0 0.0
        %1979 = vmatmul.mubr.f32.gmra.mrb[0].mxu0 %v1770
        %v1980 = vpop.f32.mrb[0].mxu0
        %v1981 = vadd.f32 0.0, %v1980
        %v1982 = vpop.f32.mrb[0].mxu0
        %1983 = vmatprep.mubr.f32.mxu0 0.0
        %1984 = vmatmul.mubr.f32.gmra.mrb[0].mxu0 %v1773
        %v1985 = vpop.f32.mrb[0].mxu0
        %v1986 = vadd.f32 0.0, %v1985
        %v1987 = vpop.f32.mrb[0].mxu0
        %1988 = vmatprep.mubr.f32.mxu0 0.0
        %1989 = vmatmul.mubr.f32.gmra.mrb[0].mxu0 %v1776
        %v1990 = vpop.f32.mrb[0].mxu0
        %v1991 = vadd.f32 0.0, %v1990
        %v1992 = vpop.f32.mrb[0].mxu0
        %1993 = vmatprep.mubr.f32.mxu0 0.0
        %1994 = vmatmul.mubr.f32.gmra.mrb[0].mxu0 %v1779
        %v1995 = vpop.f32.mrb[0].mxu0
        %v1996 = vadd.f32 0.0, %v1995
        %v1997 = vpop.f32.mrb[0].mxu0
        %1998 = vmatprep.mubr.f32.mxu0 0.0
        %1999 = vmatmul.mubr.f32.gmra.mrb[0].mxu0 %v1782
        %v2000 = vpop.f32.mrb[0].mxu0
        %v2001 = vadd.f32 0.0, %v2000
        %v2002 = vpop.f32.mrb[0].mxu0
        %2003 = vmatprep.mubr.f32.mxu0 0.0
        %2004 = vmatmul.mubr.f32.gmra.mrb[0].mxu0 %v1785
        %v2005 = vpop.f32.mrb[0].mxu0
        %v2006 = vadd.f32 0.0, %v2005
        %v2007 = vpop.f32.mrb[0].mxu0
        %2008 = vmatprep.mubr.f32.mxu0 0.0
        %2009 = vmatmul.mubr.f32.gmra.mrb[0].mxu0 %v1788
        %v2010 = vpop.f32.mrb[0].mxu0
        %v2011 = vadd.f32 0.0, %v2010
        %v2012 = vpop.f32.mrb[0].mxu0
        %2013 = vmatprep.mubr.f32.mxu0 0.0
        %2014 = vmatmul.mubr.f32.gmra.mrb[0].mxu0 %v1791
        %v2015 = vpop.f32.mrb[0].mxu0
        %v2016 = vadd.f32 0.0, %v2015
        %v2017 = vpop.f32.mrb[0].mxu0
        %2018 = vmatprep.mubr.f32.mxu0 0.0
        %2019 = vmatmul.mubr.f32.gmra.mrb[0].mxu0 %v1794
        %v2020 = vpop.f32.mrb[0].mxu0
        %v2021 = vadd.f32 0.0, %v2020
        %v2022 = vpop.f32.mrb[0].mxu0
        %2023 = vdwg.mxu0
        %v2024 = vadd.f32 %v1634, %v1866
        %v2025 = vadd.f32 %v1635, %v1871
        %v2026 = vadd.f32 %v1636, %v1876
        %v2027 = vadd.f32 %v1637, %v1881
        %v2028 = vadd.f32 %v1638, %v1886
        %v2029 = vadd.f32 %v1639, %v1891
        %v2030 = vadd.f32 %v1640, %v1896
        %v2031 = vadd.f32 %v1641, %v1901
        %v2032 = vadd.f32 %v1642, %v1906
        %v2033 = vadd.f32 %v1643, %v1911
        %v2034 = vadd.f32 %v1644, %v1916
        %v2035 = vadd.f32 %v1645, %v1921
        %v2036 = vadd.f32 %v1646, %v1926
        %v2037 = vadd.f32 %v1647, %v1931
        %v2038 = vadd.f32 %v1648, %v1936
        %v2039 = vadd.f32 %v1649, %v1941
        %v2040 = vadd.f32 %v1650, %v1946
        %v2041 = vadd.f32 %v1651, %v1951
        %v2042 = vadd.f32 %v1652, %v1956
        %v2043 = vadd.f32 %v1653, %v1961
        %v2044 = vadd.f32 %v1654, %v1966
        %v2045 = vadd.f32 %v1655, %v1971
        %v2046 = vadd.f32 %v1656, %v1976
        %v2047 = vadd.f32 %v1657, %v1981
        %v2048 = vadd.f32 %v1658, %v1986
        %v2049 = vadd.f32 %v1659, %v1991
        %v2050 = vadd.f32 %v1660, %v1996
        %v2051 = vadd.f32 %v1661, %v2001
        %v2052 = vadd.f32 %v1662, %v2006
        %v2053 = vadd.f32 %v1663, %v2011
        %v2054 = vadd.f32 %v1664, %v2016
        %v2055 = vadd.f32 %v1665, %v2021
        %v2056 = vld [vmem:[%s455 + $0x1] sm:$0xff]
        %v2057 = vld [vmem:[%s455 + $0x9] sm:$0xff]
        %v2058 = vld [vmem:[%s455 + $0x19] sm:$0xff]
        %v2059 = vld [vmem:[%s455 + $0x21] sm:$0xff]
        %v2060 = vld [vmem:[%s455 + $0x31] sm:$0xff]
        %v2061 = vld [vmem:[%s455 + $0x39] sm:$0xff]
        %v2062 = vld [vmem:[%s455 + $0x49] sm:$0xff]
        %v2063 = vld [vmem:[%s455 + $0x51] sm:$0xff]
        %v2064 = vld [vmem:[%s455 + $0x61] sm:$0xff]
        %v2065 = vld [vmem:[%s455 + $0x69] sm:$0xff]
        %v2066 = vld [vmem:[%s455 + $0x79] sm:$0xff]
        %v2067 = vld [vmem:[%s455 + $0x81] sm:$0xff]
        %v2068 = vld [vmem:[%s455 + $0x91] sm:$0xff]
        %v2069 = vld [vmem:[%s455 + $0x99] sm:$0xff]
        %v2070 = vld [vmem:[%s455 + $0xa9] sm:$0xff]
        %v2071 = vld [vmem:[%s455 + $0xb1] sm:$0xff]
        %v2072 = vld [vmem:[%s455 + $0xc1] sm:$0xff]
        %v2073 = vld [vmem:[%s455 + $0xc9] sm:$0xff]
        %v2074 = vld [vmem:[%s455 + $0xd9] sm:$0xff]
        %v2075 = vld [vmem:[%s455 + $0xe1] sm:$0xff]
        %v2076 = vld [vmem:[%s455 + $0xf1] sm:$0xff]
        %v2077 = vld [vmem:[%s455 + $0xf9] sm:$0xff]
        %v2078 = vld [vmem:[%s455 + $0x109] sm:$0xff]
        %v2079 = vld [vmem:[%s455 + $0x111] sm:$0xff]
        %v2080 = vld [vmem:[%s455 + $0x121] sm:$0xff]
        %v2081 = vld [vmem:[%s455 + $0x129] sm:$0xff]
        %v2082 = vld [vmem:[%s455 + $0x139] sm:$0xff]
        %v2083 = vld [vmem:[%s455 + $0x141] sm:$0xff]
        %v2084 = vld [vmem:[%s455 + $0x151] sm:$0xff]
        %v2085 = vld [vmem:[%s455 + $0x159] sm:$0xff]
        %v2086 = vld [vmem:[%s455 + $0x169] sm:$0xff]
        %v2087 = vld [vmem:[%s455 + $0x171] sm:$0xff]
        %s2088 = scalar_lea.vmem %s3, 16
        %v2089 = vld [vmem:[%s2088] sm:$0xf]
        %v2091 = vsel %vm456, %v2056, 0
        %v2094 = vsel %vm456, %v2057, 0
        %v2097 = vsel %vm456, %v2058, 0
        %v2100 = vsel %vm456, %v2059, 0
        %v2103 = vsel %vm456, %v2060, 0
        %v2106 = vsel %vm456, %v2061, 0
        %v2109 = vsel %vm456, %v2062, 0
        %v2112 = vsel %vm456, %v2063, 0
        %v2115 = vsel %vm456, %v2064, 0
        %v2118 = vsel %vm456, %v2065, 0
        %v2121 = vsel %vm456, %v2066, 0
        %v2124 = vsel %vm456, %v2067, 0
        %v2127 = vsel %vm456, %v2068, 0
        %v2130 = vsel %vm456, %v2069, 0
        %v2133 = vsel %vm456, %v2070, 0
        %v2136 = vsel %vm456, %v2071, 0
        %v2139 = vsel %vm456, %v2072, 0
        %v2142 = vsel %vm456, %v2073, 0
        %v2145 = vsel %vm456, %v2074, 0
        %v2148 = vsel %vm456, %v2075, 0
        %v2151 = vsel %vm456, %v2076, 0
        %v2154 = vsel %vm456, %v2077, 0
        %v2157 = vsel %vm456, %v2078, 0
        %v2160 = vsel %vm456, %v2079, 0
        %v2163 = vsel %vm456, %v2080, 0
        %v2166 = vsel %vm456, %v2081, 0
        %v2169 = vsel %vm456, %v2082, 0
        %v2172 = vsel %vm456, %v2083, 0
        %v2175 = vsel %vm456, %v2084, 0
        %v2178 = vsel %vm456, %v2085, 0
        %v2181 = vsel %vm456, %v2086, 0
        %v2184 = vsel %vm456, %v2087, 0
        %v2187 = vsel %vm625, %v2089, 0
        %2189 = vmatprep.subr.mxu0 0.0
        %2190 = vmatpush1.msra.mxu0 %v2187
        %2191 = vmatprep.subr.mxu0 0.0
        %2192 = vmatpush1.msra.mxu0 0.0
        %2193 = vmatprep.subr.mxu0 0.0
        %2194 = vmatpush1.msra.mxu0 0.0
        %2195 = vmatprep.subr.mxu0 0.0
        %2196 = vmatpush1.msra.mxu0 0.0
        %2197 = vmatprep.subr.mxu0 0.0
        %2198 = vmatpush1.msra.mxu0 0.0
        %2199 = vmatprep.subr.mxu0 0.0
        %2200 = vmatpush1.msra.mxu0 0.0
        %2201 = vmatprep.subr.mxu0 0.0
        %2202 = vmatpush1.msra.mxu0 0.0
        %2203 = vmatprep.subr.mxu0 0.0
        %2204 = vmatpush1.msra.mxu0 0.0
        %2205 = vmatprep.subr.mxu0 0.0
        %2206 = vmatpush1.msra.mxu0 0.0
        %2207 = vmatprep.subr.mxu0 0.0
        %2208 = vmatpush1.msra.mxu0 0.0
        %2209 = vmatprep.subr.mxu0 0.0
        %2210 = vmatpush1.msra.mxu0 0.0
        %2211 = vmatprep.subr.mxu0 0.0
        %2212 = vmatpush1.msra.mxu0 0.0
        %2213 = vmatprep.subr.mxu0 0.0
        %2214 = vmatpush1.msra.mxu0 0.0
        %2215 = vmatprep.subr.mxu0 0.0
        %2216 = vmatpush1.msra.mxu0 0.0
        %2217 = vmatprep.subr.mxu0 0.0
        %2218 = vmatpush1.msra.mxu0 0.0
        %2219 = vmatprep.subr.mxu0 0.0
        %2220 = vmatpush1.msra.mxu0 0.0
        %2221 = vmatprep.subr.mxu0 0.0
        %2222 = vmatpush1.msra.mxu0 0.0
        %2223 = vmatprep.subr.mxu0 0.0
        %2224 = vmatpush1.msra.mxu0 0.0
        %2225 = vmatprep.subr.mxu0 0.0
        %2226 = vmatpush1.msra.mxu0 0.0
        %2227 = vmatprep.subr.mxu0 0.0
        %2228 = vmatpush1.msra.mxu0 0.0
        %2229 = vmatprep.subr.mxu0 0.0
        %2230 = vmatpush1.msra.mxu0 0.0
        %2231 = vmatprep.subr.mxu0 0.0
        %2232 = vmatpush1.msra.mxu0 0.0
        %2233 = vmatprep.subr.mxu0 0.0
        %2234 = vmatpush1.msra.mxu0 0.0
        %2235 = vmatprep.subr.mxu0 0.0
        %2236 = vmatpush1.msra.mxu0 0.0
        %2237 = vmatprep.subr.mxu0 0.0
        %2238 = vmatpush1.msra.mxu0 0.0
        %2239 = vmatprep.subr.mxu0 0.0
        %2240 = vmatpush1.msra.mxu0 0.0
        %2241 = vmatprep.subr.mxu0 0.0
        %2242 = vmatpush1.msra.mxu0 0.0
        %2243 = vmatprep.subr.mxu0 0.0
        %2244 = vmatpush1.msra.mxu0 0.0
        %2245 = vmatprep.subr.mxu0 0.0
        %2246 = vmatpush1.msra.mxu0 0.0
        %2247 = vmatprep.subr.mxu0 0.0
        %2248 = vmatpush1.msra.mxu0 0.0
        %2249 = vmatprep.subr.mxu0 0.0
        %2250 = vmatpush1.msra.mxu0 0.0
        %2251 = vmatprep.subr.mxu0 0.0
        %2252 = vmatpush1.msra.mxu0 0.0
        %2253 = vmatprep.mubr.f32.mxu0 0.0
        %2254 = vmatmul.mubr.f32.gmra.mrb[0].mxu0 %v2091
        %v2255 = vpop.f32.mrb[0].mxu0
        %v2256 = vadd.f32 0.0, %v2255
        %v2257 = vpop.f32.mrb[0].mxu0
        %2258 = vmatprep.mubr.f32.mxu0 0.0
        %2259 = vmatmul.mubr.f32.gmra.mrb[0].mxu0 %v2094
        %v2260 = vpop.f32.mrb[0].mxu0
        %v2261 = vadd.f32 0.0, %v2260
        %v2262 = vpop.f32.mrb[0].mxu0
        %2263 = vmatprep.mubr.f32.mxu0 0.0
        %2264 = vmatmul.mubr.f32.gmra.mrb[0].mxu0 %v2097
        %v2265 = vpop.f32.mrb[0].mxu0
        %v2266 = vadd.f32 0.0, %v2265
        %v2267 = vpop.f32.mrb[0].mxu0
        %2268 = vmatprep.mubr.f32.mxu0 0.0
        %2269 = vmatmul.mubr.f32.gmra.mrb[0].mxu0 %v2100
        %v2270 = vpop.f32.mrb[0].mxu0
        %v2271 = vadd.f32 0.0, %v2270
        %v2272 = vpop.f32.mrb[0].mxu0
        %2273 = vmatprep.mubr.f32.mxu0 0.0
        %2274 = vmatmul.mubr.f32.gmra.mrb[0].mxu0 %v2103
        %v2275 = vpop.f32.mrb[0].mxu0
        %v2276 = vadd.f32 0.0, %v2275
        %v2277 = vpop.f32.mrb[0].mxu0
        %2278 = vmatprep.mubr.f32.mxu0 0.0
        %2279 = vmatmul.mubr.f32.gmra.mrb[0].mxu0 %v2106
        %v2280 = vpop.f32.mrb[0].mxu0
        %v2281 = vadd.f32 0.0, %v2280
        %v2282 = vpop.f32.mrb[0].mxu0
        %2283 = vmatprep.mubr.f32.mxu0 0.0
        %2284 = vmatmul.mubr.f32.gmra.mrb[0].mxu0 %v2109
        %v2285 = vpop.f32.mrb[0].mxu0
        %v2286 = vadd.f32 0.0, %v2285
        %v2287 = vpop.f32.mrb[0].mxu0
        %2288 = vmatprep.mubr.f32.mxu0 0.0
        %2289 = vmatmul.mubr.f32.gmra.mrb[0].mxu0 %v2112
        %v2290 = vpop.f32.mrb[0].mxu0
        %v2291 = vadd.f32 0.0, %v2290
        %v2292 = vpop.f32.mrb[0].mxu0
        %2293 = vmatprep.mubr.f32.mxu0 0.0
        %2294 = vmatmul.mubr.f32.gmra.mrb[0].mxu0 %v2115
        %v2295 = vpop.f32.mrb[0].mxu0
        %v2296 = vadd.f32 0.0, %v2295
        %v2297 = vpop.f32.mrb[0].mxu0
        %2298 = vmatprep.mubr.f32.mxu0 0.0
        %2299 = vmatmul.mubr.f32.gmra.mrb[0].mxu0 %v2118
        %v2300 = vpop.f32.mrb[0].mxu0
        %v2301 = vadd.f32 0.0, %v2300
        %v2302 = vpop.f32.mrb[0].mxu0
        %2303 = vmatprep.mubr.f32.mxu0 0.0
        %2304 = vmatmul.mubr.f32.gmra.mrb[0].mxu0 %v2121
        %v2305 = vpop.f32.mrb[0].mxu0
        %v2306 = vadd.f32 0.0, %v2305
        %v2307 = vpop.f32.mrb[0].mxu0
        %2308 = vmatprep.mubr.f32.mxu0 0.0
        %2309 = vmatmul.mubr.f32.gmra.mrb[0].mxu0 %v2124
        %v2310 = vpop.f32.mrb[0].mxu0
        %v2311 = vadd.f32 0.0, %v2310
        %v2312 = vpop.f32.mrb[0].mxu0
        %2313 = vmatprep.mubr.f32.mxu0 0.0
        %2314 = vmatmul.mubr.f32.gmra.mrb[0].mxu0 %v2127
        %v2315 = vpop.f32.mrb[0].mxu0
        %v2316 = vadd.f32 0.0, %v2315
        %v2317 = vpop.f32.mrb[0].mxu0
        %2318 = vmatprep.mubr.f32.mxu0 0.0
        %2319 = vmatmul.mubr.f32.gmra.mrb[0].mxu0 %v2130
        %v2320 = vpop.f32.mrb[0].mxu0
        %v2321 = vadd.f32 0.0, %v2320
        %v2322 = vpop.f32.mrb[0].mxu0
        %2323 = vmatprep.mubr.f32.mxu0 0.0
        %2324 = vmatmul.mubr.f32.gmra.mrb[0].mxu0 %v2133
        %v2325 = vpop.f32.mrb[0].mxu0
        %v2326 = vadd.f32 0.0, %v2325
        %v2327 = vpop.f32.mrb[0].mxu0
        %2328 = vmatprep.mubr.f32.mxu0 0.0
        %2329 = vmatmul.mubr.f32.gmra.mrb[0].mxu0 %v2136
        %v2330 = vpop.f32.mrb[0].mxu0
        %v2331 = vadd.f32 0.0, %v2330
        %v2332 = vpop.f32.mrb[0].mxu0
        %2333 = vmatprep.mubr.f32.mxu0 0.0
        %2334 = vmatmul.mubr.f32.gmra.mrb[0].mxu0 %v2139
        %v2335 = vpop.f32.mrb[0].mxu0
        %v2336 = vadd.f32 0.0, %v2335
        %v2337 = vpop.f32.mrb[0].mxu0
        %2338 = vmatprep.mubr.f32.mxu0 0.0
        %2339 = vmatmul.mubr.f32.gmra.mrb[0].mxu0 %v2142
        %v2340 = vpop.f32.mrb[0].mxu0
        %v2341 = vadd.f32 0.0, %v2340
        %v2342 = vpop.f32.mrb[0].mxu0
        %2343 = vmatprep.mubr.f32.mxu0 0.0
        %2344 = vmatmul.mubr.f32.gmra.mrb[0].mxu0 %v2145
        %v2345 = vpop.f32.mrb[0].mxu0
        %v2346 = vadd.f32 0.0, %v2345
        %v2347 = vpop.f32.mrb[0].mxu0
        %2348 = vmatprep.mubr.f32.mxu0 0.0
        %2349 = vmatmul.mubr.f32.gmra.mrb[0].mxu0 %v2148
        %v2350 = vpop.f32.mrb[0].mxu0
        %v2351 = vadd.f32 0.0, %v2350
        %v2352 = vpop.f32.mrb[0].mxu0
        %2353 = vmatprep.mubr.f32.mxu0 0.0
        %2354 = vmatmul.mubr.f32.gmra.mrb[0].mxu0 %v2151
        %v2355 = vpop.f32.mrb[0].mxu0
        %v2356 = vadd.f32 0.0, %v2355
        %v2357 = vpop.f32.mrb[0].mxu0
        %2358 = vmatprep.mubr.f32.mxu0 0.0
        %2359 = vmatmul.mubr.f32.gmra.mrb[0].mxu0 %v2154
        %v2360 = vpop.f32.mrb[0].mxu0
        %v2361 = vadd.f32 0.0, %v2360
        %v2362 = vpop.f32.mrb[0].mxu0
        %2363 = vmatprep.mubr.f32.mxu0 0.0
        %2364 = vmatmul.mubr.f32.gmra.mrb[0].mxu0 %v2157
        %v2365 = vpop.f32.mrb[0].mxu0
        %v2366 = vadd.f32 0.0, %v2365
        %v2367 = vpop.f32.mrb[0].mxu0
        %2368 = vmatprep.mubr.f32.mxu0 0.0
        %2369 = vmatmul.mubr.f32.gmra.mrb[0].mxu0 %v2160
        %v2370 = vpop.f32.mrb[0].mxu0
        %v2371 = vadd.f32 0.0, %v2370
        %v2372 = vpop.f32.mrb[0].mxu0
        %2373 = vmatprep.mubr.f32.mxu0 0.0
        %2374 = vmatmul.mubr.f32.gmra.mrb[0].mxu0 %v2163
        %v2375 = vpop.f32.mrb[0].mxu0
        %v2376 = vadd.f32 0.0, %v2375
        %v2377 = vpop.f32.mrb[0].mxu0
        %2378 = vmatprep.mubr.f32.mxu0 0.0
        %2379 = vmatmul.mubr.f32.gmra.mrb[0].mxu0 %v2166
        %v2380 = vpop.f32.mrb[0].mxu0
        %v2381 = vadd.f32 0.0, %v2380
        %v2382 = vpop.f32.mrb[0].mxu0
        %2383 = vmatprep.mubr.f32.mxu0 0.0
        %2384 = vmatmul.mubr.f32.gmra.mrb[0].mxu0 %v2169
        %v2385 = vpop.f32.mrb[0].mxu0
        %v2386 = vadd.f32 0.0, %v2385
        %v2387 = vpop.f32.mrb[0].mxu0
        %2388 = vmatprep.mubr.f32.mxu0 0.0
        %2389 = vmatmul.mubr.f32.gmra.mrb[0].mxu0 %v2172
        %v2390 = vpop.f32.mrb[0].mxu0
        %v2391 = vadd.f32 0.0, %v2390
        %v2392 = vpop.f32.mrb[0].mxu0
        %2393 = vmatprep.mubr.f32.mxu0 0.0
        %2394 = vmatmul.mubr.f32.gmra.mrb[0].mxu0 %v2175
        %v2395 = vpop.f32.mrb[0].mxu0
        %v2396 = vadd.f32 0.0, %v2395
        %v2397 = vpop.f32.mrb[0].mxu0
        %2398 = vmatprep.mubr.f32.mxu0 0.0
        %2399 = vmatmul.mubr.f32.gmra.mrb[0].mxu0 %v2178
        %v2400 = vpop.f32.mrb[0].mxu0
        %v2401 = vadd.f32 0.0, %v2400
        %v2402 = vpop.f32.mrb[0].mxu0
        %2403 = vmatprep.mubr.f32.mxu0 0.0
        %2404 = vmatmul.mubr.f32.gmra.mrb[0].mxu0 %v2181
        %v2405 = vpop.f32.mrb[0].mxu0
        %v2406 = vadd.f32 0.0, %v2405
        %v2407 = vpop.f32.mrb[0].mxu0
        %2408 = vmatprep.mubr.f32.mxu0 0.0
        %2409 = vmatmul.mubr.f32.gmra.mrb[0].mxu0 %v2184
        %v2410 = vpop.f32.mrb[0].mxu0
        %v2411 = vadd.f32 0.0, %v2410
        %v2412 = vpop.f32.mrb[0].mxu0
        %2413 = vdwg.mxu0
        %v2414 = vadd.f32 %v2024, %v2256
        %v2415 = vadd.f32 %v2025, %v2261
        %v2416 = vadd.f32 %v2026, %v2266
        %v2417 = vadd.f32 %v2027, %v2271
        %v2418 = vadd.f32 %v2028, %v2276
        %v2419 = vadd.f32 %v2029, %v2281
        %v2420 = vadd.f32 %v2030, %v2286
        %v2421 = vadd.f32 %v2031, %v2291
        %v2422 = vadd.f32 %v2032, %v2296
        %v2423 = vadd.f32 %v2033, %v2301
        %v2424 = vadd.f32 %v2034, %v2306
        %v2425 = vadd.f32 %v2035, %v2311
        %v2426 = vadd.f32 %v2036, %v2316
        %v2427 = vadd.f32 %v2037, %v2321
        %v2428 = vadd.f32 %v2038, %v2326
        %v2429 = vadd.f32 %v2039, %v2331
        %v2430 = vadd.f32 %v2040, %v2336
        %v2431 = vadd.f32 %v2041, %v2341
        %v2432 = vadd.f32 %v2042, %v2346
        %v2433 = vadd.f32 %v2043, %v2351
        %v2434 = vadd.f32 %v2044, %v2356
        %v2435 = vadd.f32 %v2045, %v2361
        %v2436 = vadd.f32 %v2046, %v2366
        %v2437 = vadd.f32 %v2047, %v2371
        %v2438 = vadd.f32 %v2048, %v2376
        %v2439 = vadd.f32 %v2049, %v2381
        %v2440 = vadd.f32 %v2050, %v2386
        %v2441 = vadd.f32 %v2051, %v2391
        %v2442 = vadd.f32 %v2052, %v2396
        %v2443 = vadd.f32 %v2053, %v2401
        %v2444 = vadd.f32 %v2054, %v2406
        %v2445 = vadd.f32 %v2055, %v2411
        %v2446 = vld [vmem:[%s455 + $0x2] sm:$0xff]
        %v2447 = vld [vmem:[%s455 + $0xa] sm:$0xff]
        %v2448 = vld [vmem:[%s455 + $0x1a] sm:$0xff]
        %v2449 = vld [vmem:[%s455 + $0x22] sm:$0xff]
        %v2450 = vld [vmem:[%s455 + $0x32] sm:$0xff]
        %v2451 = vld [vmem:[%s455 + $0x3a] sm:$0xff]
        %v2452 = vld [vmem:[%s455 + $0x4a] sm:$0xff]
        %v2453 = vld [vmem:[%s455 + $0x52] sm:$0xff]
        %v2454 = vld [vmem:[%s455 + $0x62] sm:$0xff]
        %v2455 = vld [vmem:[%s455 + $0x6a] sm:$0xff]
        %v2456 = vld [vmem:[%s455 + $0x7a] sm:$0xff]
        %v2457 = vld [vmem:[%s455 + $0x82] sm:$0xff]
        %v2458 = vld [vmem:[%s455 + $0x92] sm:$0xff]
        %v2459 = vld [vmem:[%s455 + $0x9a] sm:$0xff]
        %v2460 = vld [vmem:[%s455 + $0xaa] sm:$0xff]
        %v2461 = vld [vmem:[%s455 + $0xb2] sm:$0xff]
        %v2462 = vld [vmem:[%s455 + $0xc2] sm:$0xff]
        %v2463 = vld [vmem:[%s455 + $0xca] sm:$0xff]
        %v2464 = vld [vmem:[%s455 + $0xda] sm:$0xff]
        %v2465 = vld [vmem:[%s455 + $0xe2] sm:$0xff]
        %v2466 = vld [vmem:[%s455 + $0xf2] sm:$0xff]
        %v2467 = vld [vmem:[%s455 + $0xfa] sm:$0xff]
        %v2468 = vld [vmem:[%s455 + $0x10a] sm:$0xff]
        %v2469 = vld [vmem:[%s455 + $0x112] sm:$0xff]
        %v2470 = vld [vmem:[%s455 + $0x122] sm:$0xff]
        %v2471 = vld [vmem:[%s455 + $0x12a] sm:$0xff]
        %v2472 = vld [vmem:[%s455 + $0x13a] sm:$0xff]
        %v2473 = vld [vmem:[%s455 + $0x142] sm:$0xff]
        %v2474 = vld [vmem:[%s455 + $0x152] sm:$0xff]
        %v2475 = vld [vmem:[%s455 + $0x15a] sm:$0xff]
        %v2476 = vld [vmem:[%s455 + $0x16a] sm:$0xff]
        %v2477 = vld [vmem:[%s455 + $0x172] sm:$0xff]
        %s2478 = scalar_lea.vmem %s3, 20
        %v2479 = vld [vmem:[%s2478] sm:$0xf]
        %v2481 = vsel %vm456, %v2446, 0
        %v2484 = vsel %vm456, %v2447, 0
        %v2487 = vsel %vm456, %v2448, 0
        %v2490 = vsel %vm456, %v2449, 0
        %v2493 = vsel %vm456, %v2450, 0
        %v2496 = vsel %vm456, %v2451, 0
        %v2499 = vsel %vm456, %v2452, 0
        %v2502 = vsel %vm456, %v2453, 0
        %v2505 = vsel %vm456, %v2454, 0
        %v2508 = vsel %vm456, %v2455, 0
        %v2511 = vsel %vm456, %v2456, 0
        %v2514 = vsel %vm456, %v2457, 0
        %v2517 = vsel %vm456, %v2458, 0
        %v2520 = vsel %vm456, %v2459, 0
        %v2523 = vsel %vm456, %v2460, 0
        %v2526 = vsel %vm456, %v2461, 0
        %v2529 = vsel %vm456, %v2462, 0
        %v2532 = vsel %vm456, %v2463, 0
        %v2535 = vsel %vm456, %v2464, 0
        %v2538 = vsel %vm456, %v2465, 0
        %v2541 = vsel %vm456, %v2466, 0
        %v2544 = vsel %vm456, %v2467, 0
        %v2547 = vsel %vm456, %v2468, 0
        %v2550 = vsel %vm456, %v2469, 0
        %v2553 = vsel %vm456, %v2470, 0
        %v2556 = vsel %vm456, %v2471, 0
        %v2559 = vsel %vm456, %v2472, 0
        %v2562 = vsel %vm456, %v2473, 0
        %v2565 = vsel %vm456, %v2474, 0
        %v2568 = vsel %vm456, %v2475, 0
        %v2571 = vsel %vm456, %v2476, 0
        %v2574 = vsel %vm456, %v2477, 0
        %v2577 = vsel %vm625, %v2479, 0
        %2579 = vmatprep.subr.mxu0 0.0
        %2580 = vmatpush1.msra.mxu0 %v2577
        %2581 = vmatprep.subr.mxu0 0.0
        %2582 = vmatpush1.msra.mxu0 0.0
        %2583 = vmatprep.subr.mxu0 0.0
        %2584 = vmatpush1.msra.mxu0 0.0
        %2585 = vmatprep.subr.mxu0 0.0
        %2586 = vmatpush1.msra.mxu0 0.0
        %2587 = vmatprep.subr.mxu0 0.0
        %2588 = vmatpush1.msra.mxu0 0.0
        %2589 = vmatprep.subr.mxu0 0.0
        %2590 = vmatpush1.msra.mxu0 0.0
        %2591 = vmatprep.subr.mxu0 0.0
        %2592 = vmatpush1.msra.mxu0 0.0
        %2593 = vmatprep.subr.mxu0 0.0
        %2594 = vmatpush1.msra.mxu0 0.0
        %2595 = vmatprep.subr.mxu0 0.0
        %2596 = vmatpush1.msra.mxu0 0.0
        %2597 = vmatprep.subr.mxu0 0.0
        %2598 = vmatpush1.msra.mxu0 0.0
        %2599 = vmatprep.subr.mxu0 0.0
        %2600 = vmatpush1.msra.mxu0 0.0
        %2601 = vmatprep.subr.mxu0 0.0
        %2602 = vmatpush1.msra.mxu0 0.0
        %2603 = vmatprep.subr.mxu0 0.0
        %2604 = vmatpush1.msra.mxu0 0.0
        %2605 = vmatprep.subr.mxu0 0.0
        %2606 = vmatpush1.msra.mxu0 0.0
        %2607 = vmatprep.subr.mxu0 0.0
        %2608 = vmatpush1.msra.mxu0 0.0
        %2609 = vmatprep.subr.mxu0 0.0
        %2610 = vmatpush1.msra.mxu0 0.0
        %2611 = vmatprep.subr.mxu0 0.0
        %2612 = vmatpush1.msra.mxu0 0.0
        %2613 = vmatprep.subr.mxu0 0.0
        %2614 = vmatpush1.msra.mxu0 0.0
        %2615 = vmatprep.subr.mxu0 0.0
        %2616 = vmatpush1.msra.mxu0 0.0
        %2617 = vmatprep.subr.mxu0 0.0
        %2618 = vmatpush1.msra.mxu0 0.0
        %2619 = vmatprep.subr.mxu0 0.0
        %2620 = vmatpush1.msra.mxu0 0.0
        %2621 = vmatprep.subr.mxu0 0.0
        %2622 = vmatpush1.msra.mxu0 0.0
        %2623 = vmatprep.subr.mxu0 0.0
        %2624 = vmatpush1.msra.mxu0 0.0
        %2625 = vmatprep.subr.mxu0 0.0
        %2626 = vmatpush1.msra.mxu0 0.0
        %2627 = vmatprep.subr.mxu0 0.0
        %2628 = vmatpush1.msra.mxu0 0.0
        %2629 = vmatprep.subr.mxu0 0.0
        %2630 = vmatpush1.msra.mxu0 0.0
        %2631 = vmatprep.subr.mxu0 0.0
        %2632 = vmatpush1.msra.mxu0 0.0
        %2633 = vmatprep.subr.mxu0 0.0
        %2634 = vmatpush1.msra.mxu0 0.0
        %2635 = vmatprep.subr.mxu0 0.0
        %2636 = vmatpush1.msra.mxu0 0.0
        %2637 = vmatprep.subr.mxu0 0.0
        %2638 = vmatpush1.msra.mxu0 0.0
        %2639 = vmatprep.subr.mxu0 0.0
        %2640 = vmatpush1.msra.mxu0 0.0
        %2641 = vmatprep.subr.mxu0 0.0
        %2642 = vmatpush1.msra.mxu0 0.0
        %2643 = vmatprep.mubr.f32.mxu0 0.0
        %2644 = vmatmul.mubr.f32.gmra.mrb[0].mxu0 %v2481
        %v2645 = vpop.f32.mrb[0].mxu0
        %v2646 = vadd.f32 0.0, %v2645
        %v2647 = vpop.f32.mrb[0].mxu0
        %2648 = vmatprep.mubr.f32.mxu0 0.0
        %2649 = vmatmul.mubr.f32.gmra.mrb[0].mxu0 %v2484
        %v2650 = vpop.f32.mrb[0].mxu0
        %v2651 = vadd.f32 0.0, %v2650
        %v2652 = vpop.f32.mrb[0].mxu0
        %2653 = vmatprep.mubr.f32.mxu0 0.0
        %2654 = vmatmul.mubr.f32.gmra.mrb[0].mxu0 %v2487
        %v2655 = vpop.f32.mrb[0].mxu0
        %v2656 = vadd.f32 0.0, %v2655
        %v2657 = vpop.f32.mrb[0].mxu0
        %2658 = vmatprep.mubr.f32.mxu0 0.0
        %2659 = vmatmul.mubr.f32.gmra.mrb[0].mxu0 %v2490
        %v2660 = vpop.f32.mrb[0].mxu0
        %v2661 = vadd.f32 0.0, %v2660
        %v2662 = vpop.f32.mrb[0].mxu0
        %2663 = vmatprep.mubr.f32.mxu0 0.0
        %2664 = vmatmul.mubr.f32.gmra.mrb[0].mxu0 %v2493
        %v2665 = vpop.f32.mrb[0].mxu0
        %v2666 = vadd.f32 0.0, %v2665
        %v2667 = vpop.f32.mrb[0].mxu0
        %2668 = vmatprep.mubr.f32.mxu0 0.0
        %2669 = vmatmul.mubr.f32.gmra.mrb[0].mxu0 %v2496
        %v2670 = vpop.f32.mrb[0].mxu0
        %v2671 = vadd.f32 0.0, %v2670
        %v2672 = vpop.f32.mrb[0].mxu0
        %2673 = vmatprep.mubr.f32.mxu0 0.0
        %2674 = vmatmul.mubr.f32.gmra.mrb[0].mxu0 %v2499
        %v2675 = vpop.f32.mrb[0].mxu0
        %v2676 = vadd.f32 0.0, %v2675
        %v2677 = vpop.f32.mrb[0].mxu0
        %2678 = vmatprep.mubr.f32.mxu0 0.0
        %2679 = vmatmul.mubr.f32.gmra.mrb[0].mxu0 %v2502
        %v2680 = vpop.f32.mrb[0].mxu0
        %v2681 = vadd.f32 0.0, %v2680
        %v2682 = vpop.f32.mrb[0].mxu0
        %2683 = vmatprep.mubr.f32.mxu0 0.0
        %2684 = vmatmul.mubr.f32.gmra.mrb[0].mxu0 %v2505
        %v2685 = vpop.f32.mrb[0].mxu0
        %v2686 = vadd.f32 0.0, %v2685
        %v2687 = vpop.f32.mrb[0].mxu0
        %2688 = vmatprep.mubr.f32.mxu0 0.0
        %2689 = vmatmul.mubr.f32.gmra.mrb[0].mxu0 %v2508
        %v2690 = vpop.f32.mrb[0].mxu0
        %v2691 = vadd.f32 0.0, %v2690
        %v2692 = vpop.f32.mrb[0].mxu0
        %2693 = vmatprep.mubr.f32.mxu0 0.0
        %2694 = vmatmul.mubr.f32.gmra.mrb[0].mxu0 %v2511
        %v2695 = vpop.f32.mrb[0].mxu0
        %v2696 = vadd.f32 0.0, %v2695
        %v2697 = vpop.f32.mrb[0].mxu0
        %2698 = vmatprep.mubr.f32.mxu0 0.0
        %2699 = vmatmul.mubr.f32.gmra.mrb[0].mxu0 %v2514
        %v2700 = vpop.f32.mrb[0].mxu0
        %v2701 = vadd.f32 0.0, %v2700
        %v2702 = vpop.f32.mrb[0].mxu0
        %2703 = vmatprep.mubr.f32.mxu0 0.0
        %2704 = vmatmul.mubr.f32.gmra.mrb[0].mxu0 %v2517
        %v2705 = vpop.f32.mrb[0].mxu0
        %v2706 = vadd.f32 0.0, %v2705
        %v2707 = vpop.f32.mrb[0].mxu0
        %2708 = vmatprep.mubr.f32.mxu0 0.0
        %2709 = vmatmul.mubr.f32.gmra.mrb[0].mxu0 %v2520
        %v2710 = vpop.f32.mrb[0].mxu0
        %v2711 = vadd.f32 0.0, %v2710
        %v2712 = vpop.f32.mrb[0].mxu0
        %2713 = vmatprep.mubr.f32.mxu0 0.0
        %2714 = vmatmul.mubr.f32.gmra.mrb[0].mxu0 %v2523
        %v2715 = vpop.f32.mrb[0].mxu0
        %v2716 = vadd.f32 0.0, %v2715
        %v2717 = vpop.f32.mrb[0].mxu0
        %2718 = vmatprep.mubr.f32.mxu0 0.0
        %2719 = vmatmul.mubr.f32.gmra.mrb[0].mxu0 %v2526
        %v2720 = vpop.f32.mrb[0].mxu0
        %v2721 = vadd.f32 0.0, %v2720
        %v2722 = vpop.f32.mrb[0].mxu0
        %2723 = vmatprep.mubr.f32.mxu0 0.0
        %2724 = vmatmul.mubr.f32.gmra.mrb[0].mxu0 %v2529
        %v2725 = vpop.f32.mrb[0].mxu0
        %v2726 = vadd.f32 0.0, %v2725
        %v2727 = vpop.f32.mrb[0].mxu0
        %2728 = vmatprep.mubr.f32.mxu0 0.0
        %2729 = vmatmul.mubr.f32.gmra.mrb[0].mxu0 %v2532
        %v2730 = vpop.f32.mrb[0].mxu0
        %v2731 = vadd.f32 0.0, %v2730
        %v2732 = vpop.f32.mrb[0].mxu0
        %2733 = vmatprep.mubr.f32.mxu0 0.0
        %2734 = vmatmul.mubr.f32.gmra.mrb[0].mxu0 %v2535
        %v2735 = vpop.f32.mrb[0].mxu0
        %v2736 = vadd.f32 0.0, %v2735
        %v2737 = vpop.f32.mrb[0].mxu0
        %2738 = vmatprep.mubr.f32.mxu0 0.0
        %2739 = vmatmul.mubr.f32.gmra.mrb[0].mxu0 %v2538
        %v2740 = vpop.f32.mrb[0].mxu0
        %v2741 = vadd.f32 0.0, %v2740
        %v2742 = vpop.f32.mrb[0].mxu0
        %2743 = vmatprep.mubr.f32.mxu0 0.0
        %2744 = vmatmul.mubr.f32.gmra.mrb[0].mxu0 %v2541
        %v2745 = vpop.f32.mrb[0].mxu0
        %v2746 = vadd.f32 0.0, %v2745
        %v2747 = vpop.f32.mrb[0].mxu0
        %2748 = vmatprep.mubr.f32.mxu0 0.0
        %2749 = vmatmul.mubr.f32.gmra.mrb[0].mxu0 %v2544
        %v2750 = vpop.f32.mrb[0].mxu0
        %v2751 = vadd.f32 0.0, %v2750
        %v2752 = vpop.f32.mrb[0].mxu0
        %2753 = vmatprep.mubr.f32.mxu0 0.0
        %2754 = vmatmul.mubr.f32.gmra.mrb[0].mxu0 %v2547
        %v2755 = vpop.f32.mrb[0].mxu0
        %v2756 = vadd.f32 0.0, %v2755
        %v2757 = vpop.f32.mrb[0].mxu0
        %2758 = vmatprep.mubr.f32.mxu0 0.0
        %2759 = vmatmul.mubr.f32.gmra.mrb[0].mxu0 %v2550
        %v2760 = vpop.f32.mrb[0].mxu0
        %v2761 = vadd.f32 0.0, %v2760
        %v2762 = vpop.f32.mrb[0].mxu0
        %2763 = vmatprep.mubr.f32.mxu0 0.0
        %2764 = vmatmul.mubr.f32.gmra.mrb[0].mxu0 %v2553
        %v2765 = vpop.f32.mrb[0].mxu0
        %v2766 = vadd.f32 0.0, %v2765
        %v2767 = vpop.f32.mrb[0].mxu0
        %2768 = vmatprep.mubr.f32.mxu0 0.0
        %2769 = vmatmul.mubr.f32.gmra.mrb[0].mxu0 %v2556
        %v2770 = vpop.f32.mrb[0].mxu0
        %v2771 = vadd.f32 0.0, %v2770
        %v2772 = vpop.f32.mrb[0].mxu0
        %2773 = vmatprep.mubr.f32.mxu0 0.0
        %2774 = vmatmul.mubr.f32.gmra.mrb[0].mxu0 %v2559
        %v2775 = vpop.f32.mrb[0].mxu0
        %v2776 = vadd.f32 0.0, %v2775
        %v2777 = vpop.f32.mrb[0].mxu0
        %2778 = vmatprep.mubr.f32.mxu0 0.0
        %2779 = vmatmul.mubr.f32.gmra.mrb[0].mxu0 %v2562
        %v2780 = vpop.f32.mrb[0].mxu0
        %v2781 = vadd.f32 0.0, %v2780
        %v2782 = vpop.f32.mrb[0].mxu0
        %2783 = vmatprep.mubr.f32.mxu0 0.0
        %2784 = vmatmul.mubr.f32.gmra.mrb[0].mxu0 %v2565
        %v2785 = vpop.f32.mrb[0].mxu0
        %v2786 = vadd.f32 0.0, %v2785
        %v2787 = vpop.f32.mrb[0].mxu0
        %2788 = vmatprep.mubr.f32.mxu0 0.0
        %2789 = vmatmul.mubr.f32.gmra.mrb[0].mxu0 %v2568
        %v2790 = vpop.f32.mrb[0].mxu0
        %v2791 = vadd.f32 0.0, %v2790
        %v2792 = vpop.f32.mrb[0].mxu0
        %2793 = vmatprep.mubr.f32.mxu0 0.0
        %2794 = vmatmul.mubr.f32.gmra.mrb[0].mxu0 %v2571
        %v2795 = vpop.f32.mrb[0].mxu0
        %v2796 = vadd.f32 0.0, %v2795
        %v2797 = vpop.f32.mrb[0].mxu0
        %2798 = vmatprep.mubr.f32.mxu0 0.0
        %2799 = vmatmul.mubr.f32.gmra.mrb[0].mxu0 %v2574
        %v2800 = vpop.f32.mrb[0].mxu0
        %v2801 = vadd.f32 0.0, %v2800
        %v2802 = vpop.f32.mrb[0].mxu0
        %2803 = vdwg.mxu0
        %v2804 = vadd.f32 %v2414, %v2646
        %v2805 = vadd.f32 %v2415, %v2651
        %v2806 = vadd.f32 %v2416, %v2656
        %v2807 = vadd.f32 %v2417, %v2661
        %v2808 = vadd.f32 %v2418, %v2666
        %v2809 = vadd.f32 %v2419, %v2671
        %v2810 = vadd.f32 %v2420, %v2676
        %v2811 = vadd.f32 %v2421, %v2681
        %v2812 = vadd.f32 %v2422, %v2686
        %v2813 = vadd.f32 %v2423, %v2691
        %v2814 = vadd.f32 %v2424, %v2696
        %v2815 = vadd.f32 %v2425, %v2701
        %v2816 = vadd.f32 %v2426, %v2706
        %v2817 = vadd.f32 %v2427, %v2711
        %v2818 = vadd.f32 %v2428, %v2716
        %v2819 = vadd.f32 %v2429, %v2721
        %v2820 = vadd.f32 %v2430, %v2726
        %v2821 = vadd.f32 %v2431, %v2731
        %v2822 = vadd.f32 %v2432, %v2736
        %v2823 = vadd.f32 %v2433, %v2741
        %v2824 = vadd.f32 %v2434, %v2746
        %v2825 = vadd.f32 %v2435, %v2751
        %v2826 = vadd.f32 %v2436, %v2756
        %v2827 = vadd.f32 %v2437, %v2761
        %v2828 = vadd.f32 %v2438, %v2766
        %v2829 = vadd.f32 %v2439, %v2771
        %v2830 = vadd.f32 %v2440, %v2776
        %v2831 = vadd.f32 %v2441, %v2781
        %v2832 = vadd.f32 %v2442, %v2786
        %v2833 = vadd.f32 %v2443, %v2791
        %v2834 = vadd.f32 %v2444, %v2796
        %v2835 = vadd.f32 %v2445, %v2801
        %s2836 = scalar_lea.vmem [#allocation2], 48
        %v2837 = vld [vmem:[%s2836] sm:$0xff]
        %v2838 = vld [vmem:[%s2836 + $0x8] sm:$0xff]
        %v2839 = vld [vmem:[%s2836 + $0x18] sm:$0xff]
        %v2840 = vld [vmem:[%s2836 + $0x20] sm:$0xff]
        %v2841 = vld [vmem:[%s2836 + $0x30] sm:$0xff]
        %v2842 = vld [vmem:[%s2836 + $0x38] sm:$0xff]
        %v2843 = vld [vmem:[%s2836 + $0x48] sm:$0xff]
        %v2844 = vld [vmem:[%s2836 + $0x50] sm:$0xff]
        %v2845 = vld [vmem:[%s2836 + $0x60] sm:$0xff]
        %v2846 = vld [vmem:[%s2836 + $0x68] sm:$0xff]
        %v2847 = vld [vmem:[%s2836 + $0x78] sm:$0xff]
        %v2848 = vld [vmem:[%s2836 + $0x80] sm:$0xff]
        %v2849 = vld [vmem:[%s2836 + $0x90] sm:$0xff]
        %v2850 = vld [vmem:[%s2836 + $0x98] sm:$0xff]
        %v2851 = vld [vmem:[%s2836 + $0xa8] sm:$0xff]
        %v2852 = vld [vmem:[%s2836 + $0xb0] sm:$0xff]
        %v2853 = vld [vmem:[%s2836 + $0xc0] sm:$0xff]
        %v2854 = vld [vmem:[%s2836 + $0xc8] sm:$0xff]
        %v2855 = vld [vmem:[%s2836 + $0xd8] sm:$0xff]
        %v2856 = vld [vmem:[%s2836 + $0xe0] sm:$0xff]
        %v2857 = vld [vmem:[%s2836 + $0xf0] sm:$0xff]
        %v2858 = vld [vmem:[%s2836 + $0xf8] sm:$0xff]
        %v2859 = vld [vmem:[%s2836 + $0x108] sm:$0xff]
        %v2860 = vld [vmem:[%s2836 + $0x110] sm:$0xff]
        %v2861 = vld [vmem:[%s2836 + $0x120] sm:$0xff]
        %v2862 = vld [vmem:[%s2836 + $0x128] sm:$0xff]
        %v2863 = vld [vmem:[%s2836 + $0x138] sm:$0xff]
        %v2864 = vld [vmem:[%s2836 + $0x140] sm:$0xff]
        %v2865 = vld [vmem:[%s2836 + $0x150] sm:$0xff]
        %v2866 = vld [vmem:[%s2836 + $0x158] sm:$0xff]
        %v2867 = vld [vmem:[%s2836 + $0x168] sm:$0xff]
        %v2868 = vld [vmem:[%s2836 + $0x170] sm:$0xff]
        %s2869 = scalar_lea.vmem %s3, 24
        %v2870 = vld [vmem:[%s2869] sm:$0xf]
        %v2872 = vsel %vm456, %v2837, 0
        %v2875 = vsel %vm456, %v2838, 0
        %v2878 = vsel %vm456, %v2839, 0
        %v2881 = vsel %vm456, %v2840, 0
        %v2884 = vsel %vm456, %v2841, 0
        %v2887 = vsel %vm456, %v2842, 0
        %v2890 = vsel %vm456, %v2843, 0
        %v2893 = vsel %vm456, %v2844, 0
        %v2896 = vsel %vm456, %v2845, 0
        %v2899 = vsel %vm456, %v2846, 0
        %v2902 = vsel %vm456, %v2847, 0
        %v2905 = vsel %vm456, %v2848, 0
        %v2908 = vsel %vm456, %v2849, 0
        %v2911 = vsel %vm456, %v2850, 0
        %v2914 = vsel %vm456, %v2851, 0
        %v2917 = vsel %vm456, %v2852, 0
        %v2920 = vsel %vm456, %v2853, 0
        %v2923 = vsel %vm456, %v2854, 0
        %v2926 = vsel %vm456, %v2855, 0
        %v2929 = vsel %vm456, %v2856, 0
        %v2932 = vsel %vm456, %v2857, 0
        %v2935 = vsel %vm456, %v2858, 0
        %v2938 = vsel %vm456, %v2859, 0
        %v2941 = vsel %vm456, %v2860, 0
        %v2944 = vsel %vm456, %v2861, 0
        %v2947 = vsel %vm456, %v2862, 0
        %v2950 = vsel %vm456, %v2863, 0
        %v2953 = vsel %vm456, %v2864, 0
        %v2956 = vsel %vm456, %v2865, 0
        %v2959 = vsel %vm456, %v2866, 0
        %v2962 = vsel %vm456, %v2867, 0
        %v2965 = vsel %vm456, %v2868, 0
        %v2968 = vsel %vm625, %v2870, 0
        %2970 = vmatprep.subr.mxu0 0.0
        %2971 = vmatpush1.msra.mxu0 %v2968
        %2972 = vmatprep.subr.mxu0 0.0
        %2973 = vmatpush1.msra.mxu0 0.0
        %2974 = vmatprep.subr.mxu0 0.0
        %2975 = vmatpush1.msra.mxu0 0.0
        %2976 = vmatprep.subr.mxu0 0.0
        %2977 = vmatpush1.msra.mxu0 0.0
        %2978 = vmatprep.subr.mxu0 0.0
        %2979 = vmatpush1.msra.mxu0 0.0
        %2980 = vmatprep.subr.mxu0 0.0
        %2981 = vmatpush1.msra.mxu0 0.0
        %2982 = vmatprep.subr.mxu0 0.0
        %2983 = vmatpush1.msra.mxu0 0.0
        %2984 = vmatprep.subr.mxu0 0.0
        %2985 = vmatpush1.msra.mxu0 0.0
        %2986 = vmatprep.subr.mxu0 0.0
        %2987 = vmatpush1.msra.mxu0 0.0
        %2988 = vmatprep.subr.mxu0 0.0
        %2989 = vmatpush1.msra.mxu0 0.0
        %2990 = vmatprep.subr.mxu0 0.0
        %2991 = vmatpush1.msra.mxu0 0.0
        %2992 = vmatprep.subr.mxu0 0.0
        %2993 = vmatpush1.msra.mxu0 0.0
        %2994 = vmatprep.subr.mxu0 0.0
        %2995 = vmatpush1.msra.mxu0 0.0
        %2996 = vmatprep.subr.mxu0 0.0
        %2997 = vmatpush1.msra.mxu0 0.0
        %2998 = vmatprep.subr.mxu0 0.0
        %2999 = vmatpush1.msra.mxu0 0.0
        %3000 = vmatprep.subr.mxu0 0.0
        %3001 = vmatpush1.msra.mxu0 0.0
        %3002 = vmatprep.subr.mxu0 0.0
        %3003 = vmatpush1.msra.mxu0 0.0
        %3004 = vmatprep.subr.mxu0 0.0
        %3005 = vmatpush1.msra.mxu0 0.0
        %3006 = vmatprep.subr.mxu0 0.0
        %3007 = vmatpush1.msra.mxu0 0.0
        %3008 = vmatprep.subr.mxu0 0.0
        %3009 = vmatpush1.msra.mxu0 0.0
        %3010 = vmatprep.subr.mxu0 0.0
        %3011 = vmatpush1.msra.mxu0 0.0
        %3012 = vmatprep.subr.mxu0 0.0
        %3013 = vmatpush1.msra.mxu0 0.0
        %3014 = vmatprep.subr.mxu0 0.0
        %3015 = vmatpush1.msra.mxu0 0.0
        %3016 = vmatprep.subr.mxu0 0.0
        %3017 = vmatpush1.msra.mxu0 0.0
        %3018 = vmatprep.subr.mxu0 0.0
        %3019 = vmatpush1.msra.mxu0 0.0
        %3020 = vmatprep.subr.mxu0 0.0
        %3021 = vmatpush1.msra.mxu0 0.0
        %3022 = vmatprep.subr.mxu0 0.0
        %3023 = vmatpush1.msra.mxu0 0.0
        %3024 = vmatprep.subr.mxu0 0.0
        %3025 = vmatpush1.msra.mxu0 0.0
        %3026 = vmatprep.subr.mxu0 0.0
        %3027 = vmatpush1.msra.mxu0 0.0
        %3028 = vmatprep.subr.mxu0 0.0
        %3029 = vmatpush1.msra.mxu0 0.0
        %3030 = vmatprep.subr.mxu0 0.0
        %3031 = vmatpush1.msra.mxu0 0.0
        %3032 = vmatprep.subr.mxu0 0.0
        %3033 = vmatpush1.msra.mxu0 0.0
        %3034 = vmatprep.mubr.f32.mxu0 0.0
        %3035 = vmatmul.mubr.f32.gmra.mrb[0].mxu0 %v2872
        %v3036 = vpop.f32.mrb[0].mxu0
        %v3037 = vadd.f32 0.0, %v3036
        %v3038 = vpop.f32.mrb[0].mxu0
        %3039 = vmatprep.mubr.f32.mxu0 0.0
        %3040 = vmatmul.mubr.f32.gmra.mrb[0].mxu0 %v2875
        %v3041 = vpop.f32.mrb[0].mxu0
        %v3042 = vadd.f32 0.0, %v3041
        %v3043 = vpop.f32.mrb[0].mxu0
        %3044 = vmatprep.mubr.f32.mxu0 0.0
        %3045 = vmatmul.mubr.f32.gmra.mrb[0].mxu0 %v2878
        %v3046 = vpop.f32.mrb[0].mxu0
        %v3047 = vadd.f32 0.0, %v3046
        %v3048 = vpop.f32.mrb[0].mxu0
        %3049 = vmatprep.mubr.f32.mxu0 0.0
        %3050 = vmatmul.mubr.f32.gmra.mrb[0].mxu0 %v2881
        %v3051 = vpop.f32.mrb[0].mxu0
        %v3052 = vadd.f32 0.0, %v3051
        %v3053 = vpop.f32.mrb[0].mxu0
        %3054 = vmatprep.mubr.f32.mxu0 0.0
        %3055 = vmatmul.mubr.f32.gmra.mrb[0].mxu0 %v2884
        %v3056 = vpop.f32.mrb[0].mxu0
        %v3057 = vadd.f32 0.0, %v3056
        %v3058 = vpop.f32.mrb[0].mxu0
        %3059 = vmatprep.mubr.f32.mxu0 0.0
        %3060 = vmatmul.mubr.f32.gmra.mrb[0].mxu0 %v2887
        %v3061 = vpop.f32.mrb[0].mxu0
        %v3062 = vadd.f32 0.0, %v3061
        %v3063 = vpop.f32.mrb[0].mxu0
        %3064 = vmatprep.mubr.f32.mxu0 0.0
        %3065 = vmatmul.mubr.f32.gmra.mrb[0].mxu0 %v2890
        %v3066 = vpop.f32.mrb[0].mxu0
        %v3067 = vadd.f32 0.0, %v3066
        %v3068 = vpop.f32.mrb[0].mxu0
        %3069 = vmatprep.mubr.f32.mxu0 0.0
        %3070 = vmatmul.mubr.f32.gmra.mrb[0].mxu0 %v2893
        %v3071 = vpop.f32.mrb[0].mxu0
        %v3072 = vadd.f32 0.0, %v3071
        %v3073 = vpop.f32.mrb[0].mxu0
        %3074 = vmatprep.mubr.f32.mxu0 0.0
        %3075 = vmatmul.mubr.f32.gmra.mrb[0].mxu0 %v2896
        %v3076 = vpop.f32.mrb[0].mxu0
        %v3077 = vadd.f32 0.0, %v3076
        %v3078 = vpop.f32.mrb[0].mxu0
        %3079 = vmatprep.mubr.f32.mxu0 0.0
        %3080 = vmatmul.mubr.f32.gmra.mrb[0].mxu0 %v2899
        %v3081 = vpop.f32.mrb[0].mxu0
        %v3082 = vadd.f32 0.0, %v3081
        %v3083 = vpop.f32.mrb[0].mxu0
        %3084 = vmatprep.mubr.f32.mxu0 0.0
        %3085 = vmatmul.mubr.f32.gmra.mrb[0].mxu0 %v2902
        %v3086 = vpop.f32.mrb[0].mxu0
        %v3087 = vadd.f32 0.0, %v3086
        %v3088 = vpop.f32.mrb[0].mxu0
        %3089 = vmatprep.mubr.f32.mxu0 0.0
        %3090 = vmatmul.mubr.f32.gmra.mrb[0].mxu0 %v2905
        %v3091 = vpop.f32.mrb[0].mxu0
        %v3092 = vadd.f32 0.0, %v3091
        %v3093 = vpop.f32.mrb[0].mxu0
        %3094 = vmatprep.mubr.f32.mxu0 0.0
        %3095 = vmatmul.mubr.f32.gmra.mrb[0].mxu0 %v2908
        %v3096 = vpop.f32.mrb[0].mxu0
        %v3097 = vadd.f32 0.0, %v3096
        %v3098 = vpop.f32.mrb[0].mxu0
        %3099 = vmatprep.mubr.f32.mxu0 0.0
        %3100 = vmatmul.mubr.f32.gmra.mrb[0].mxu0 %v2911
        %v3101 = vpop.f32.mrb[0].mxu0
        %v3102 = vadd.f32 0.0, %v3101
        %v3103 = vpop.f32.mrb[0].mxu0
        %3104 = vmatprep.mubr.f32.mxu0 0.0
        %3105 = vmatmul.mubr.f32.gmra.mrb[0].mxu0 %v2914
        %v3106 = vpop.f32.mrb[0].mxu0
        %v3107 = vadd.f32 0.0, %v3106
        %v3108 = vpop.f32.mrb[0].mxu0
        %3109 = vmatprep.mubr.f32.mxu0 0.0
        %3110 = vmatmul.mubr.f32.gmra.mrb[0].mxu0 %v2917
        %v3111 = vpop.f32.mrb[0].mxu0
        %v3112 = vadd.f32 0.0, %v3111
        %v3113 = vpop.f32.mrb[0].mxu0
        %3114 = vmatprep.mubr.f32.mxu0 0.0
        %3115 = vmatmul.mubr.f32.gmra.mrb[0].mxu0 %v2920
        %v3116 = vpop.f32.mrb[0].mxu0
        %v3117 = vadd.f32 0.0, %v3116
        %v3118 = vpop.f32.mrb[0].mxu0
        %3119 = vmatprep.mubr.f32.mxu0 0.0
        %3120 = vmatmul.mubr.f32.gmra.mrb[0].mxu0 %v2923
        %v3121 = vpop.f32.mrb[0].mxu0
        %v3122 = vadd.f32 0.0, %v3121
        %v3123 = vpop.f32.mrb[0].mxu0
        %3124 = vmatprep.mubr.f32.mxu0 0.0
        %3125 = vmatmul.mubr.f32.gmra.mrb[0].mxu0 %v2926
        %v3126 = vpop.f32.mrb[0].mxu0
        %v3127 = vadd.f32 0.0, %v3126
        %v3128 = vpop.f32.mrb[0].mxu0
        %3129 = vmatprep.mubr.f32.mxu0 0.0
        %3130 = vmatmul.mubr.f32.gmra.mrb[0].mxu0 %v2929
        %v3131 = vpop.f32.mrb[0].mxu0
        %v3132 = vadd.f32 0.0, %v3131
        %v3133 = vpop.f32.mrb[0].mxu0
        %3134 = vmatprep.mubr.f32.mxu0 0.0
        %3135 = vmatmul.mubr.f32.gmra.mrb[0].mxu0 %v2932
        %v3136 = vpop.f32.mrb[0].mxu0
        %v3137 = vadd.f32 0.0, %v3136
        %v3138 = vpop.f32.mrb[0].mxu0
        %3139 = vmatprep.mubr.f32.mxu0 0.0
        %3140 = vmatmul.mubr.f32.gmra.mrb[0].mxu0 %v2935
        %v3141 = vpop.f32.mrb[0].mxu0
        %v3142 = vadd.f32 0.0, %v3141
        %v3143 = vpop.f32.mrb[0].mxu0
        %3144 = vmatprep.mubr.f32.mxu0 0.0
        %3145 = vmatmul.mubr.f32.gmra.mrb[0].mxu0 %v2938
        %v3146 = vpop.f32.mrb[0].mxu0
        %v3147 = vadd.f32 0.0, %v3146
        %v3148 = vpop.f32.mrb[0].mxu0
        %3149 = vmatprep.mubr.f32.mxu0 0.0
        %3150 = vmatmul.mubr.f32.gmra.mrb[0].mxu0 %v2941
        %v3151 = vpop.f32.mrb[0].mxu0
        %v3152 = vadd.f32 0.0, %v3151
        %v3153 = vpop.f32.mrb[0].mxu0
        %3154 = vmatprep.mubr.f32.mxu0 0.0
        %3155 = vmatmul.mubr.f32.gmra.mrb[0].mxu0 %v2944
        %v3156 = vpop.f32.mrb[0].mxu0
        %v3157 = vadd.f32 0.0, %v3156
        %v3158 = vpop.f32.mrb[0].mxu0
        %3159 = vmatprep.mubr.f32.mxu0 0.0
        %3160 = vmatmul.mubr.f32.gmra.mrb[0].mxu0 %v2947
        %v3161 = vpop.f32.mrb[0].mxu0
        %v3162 = vadd.f32 0.0, %v3161
        %v3163 = vpop.f32.mrb[0].mxu0
        %3164 = vmatprep.mubr.f32.mxu0 0.0
        %3165 = vmatmul.mubr.f32.gmra.mrb[0].mxu0 %v2950
        %v3166 = vpop.f32.mrb[0].mxu0
        %v3167 = vadd.f32 0.0, %v3166
        %v3168 = vpop.f32.mrb[0].mxu0
        %3169 = vmatprep.mubr.f32.mxu0 0.0
        %3170 = vmatmul.mubr.f32.gmra.mrb[0].mxu0 %v2953
        %v3171 = vpop.f32.mrb[0].mxu0
        %v3172 = vadd.f32 0.0, %v3171
        %v3173 = vpop.f32.mrb[0].mxu0
        %3174 = vmatprep.mubr.f32.mxu0 0.0
        %3175 = vmatmul.mubr.f32.gmra.mrb[0].mxu0 %v2956
        %v3176 = vpop.f32.mrb[0].mxu0
        %v3177 = vadd.f32 0.0, %v3176
        %v3178 = vpop.f32.mrb[0].mxu0
        %3179 = vmatprep.mubr.f32.mxu0 0.0
        %3180 = vmatmul.mubr.f32.gmra.mrb[0].mxu0 %v2959
        %v3181 = vpop.f32.mrb[0].mxu0
        %v3182 = vadd.f32 0.0, %v3181
        %v3183 = vpop.f32.mrb[0].mxu0
        %3184 = vmatprep.mubr.f32.mxu0 0.0
        %3185 = vmatmul.mubr.f32.gmra.mrb[0].mxu0 %v2962
        %v3186 = vpop.f32.mrb[0].mxu0
        %v3187 = vadd.f32 0.0, %v3186
        %v3188 = vpop.f32.mrb[0].mxu0
        %3189 = vmatprep.mubr.f32.mxu0 0.0
        %3190 = vmatmul.mubr.f32.gmra.mrb[0].mxu0 %v2965
        %v3191 = vpop.f32.mrb[0].mxu0
        %v3192 = vadd.f32 0.0, %v3191
        %v3193 = vpop.f32.mrb[0].mxu0
        %3194 = vdwg.mxu0
        %v3195 = vadd.f32 %v2804, %v3037
        %v3196 = vadd.f32 %v2805, %v3042
        %v3197 = vadd.f32 %v2806, %v3047
        %v3198 = vadd.f32 %v2807, %v3052
        %v3199 = vadd.f32 %v2808, %v3057
        %v3200 = vadd.f32 %v2809, %v3062
        %v3201 = vadd.f32 %v2810, %v3067
        %v3202 = vadd.f32 %v2811, %v3072
        %v3203 = vadd.f32 %v2812, %v3077
        %v3204 = vadd.f32 %v2813, %v3082
        %v3205 = vadd.f32 %v2814, %v3087
        %v3206 = vadd.f32 %v2815, %v3092
        %v3207 = vadd.f32 %v2816, %v3097
        %v3208 = vadd.f32 %v2817, %v3102
        %v3209 = vadd.f32 %v2818, %v3107
        %v3210 = vadd.f32 %v2819, %v3112
        %v3211 = vadd.f32 %v2820, %v3117
        %v3212 = vadd.f32 %v2821, %v3122
        %v3213 = vadd.f32 %v2822, %v3127
        %v3214 = vadd.f32 %v2823, %v3132
        %v3215 = vadd.f32 %v2824, %v3137
        %v3216 = vadd.f32 %v2825, %v3142
        %v3217 = vadd.f32 %v2826, %v3147
        %v3218 = vadd.f32 %v2827, %v3152
        %v3219 = vadd.f32 %v2828, %v3157
        %v3220 = vadd.f32 %v2829, %v3162
        %v3221 = vadd.f32 %v2830, %v3167
        %v3222 = vadd.f32 %v2831, %v3172
        %v3223 = vadd.f32 %v2832, %v3177
        %v3224 = vadd.f32 %v2833, %v3182
        %v3225 = vadd.f32 %v2834, %v3187
        %v3226 = vadd.f32 %v2835, %v3192
        %v3227 = vld [vmem:[%s2836 + $0x1] sm:$0xff]
        %v3228 = vld [vmem:[%s2836 + $0x9] sm:$0xff]
        %v3229 = vld [vmem:[%s2836 + $0x19] sm:$0xff]
        %v3230 = vld [vmem:[%s2836 + $0x21] sm:$0xff]
        %v3231 = vld [vmem:[%s2836 + $0x31] sm:$0xff]
        %v3232 = vld [vmem:[%s2836 + $0x39] sm:$0xff]
        %v3233 = vld [vmem:[%s2836 + $0x49] sm:$0xff]
        %v3234 = vld [vmem:[%s2836 + $0x51] sm:$0xff]
        %v3235 = vld [vmem:[%s2836 + $0x61] sm:$0xff]
        %v3236 = vld [vmem:[%s2836 + $0x69] sm:$0xff]
        %v3237 = vld [vmem:[%s2836 + $0x79] sm:$0xff]
        %v3238 = vld [vmem:[%s2836 + $0x81] sm:$0xff]
        %v3239 = vld [vmem:[%s2836 + $0x91] sm:$0xff]
        %v3240 = vld [vmem:[%s2836 + $0x99] sm:$0xff]
        %v3241 = vld [vmem:[%s2836 + $0xa9] sm:$0xff]
        %v3242 = vld [vmem:[%s2836 + $0xb1] sm:$0xff]
        %v3243 = vld [vmem:[%s2836 + $0xc1] sm:$0xff]
        %v3244 = vld [vmem:[%s2836 + $0xc9] sm:$0xff]
        %v3245 = vld [vmem:[%s2836 + $0xd9] sm:$0xff]
        %v3246 = vld [vmem:[%s2836 + $0xe1] sm:$0xff]
        %v3247 = vld [vmem:[%s2836 + $0xf1] sm:$0xff]
        %v3248 = vld [vmem:[%s2836 + $0xf9] sm:$0xff]
        %v3249 = vld [vmem:[%s2836 + $0x109] sm:$0xff]
        %v3250 = vld [vmem:[%s2836 + $0x111] sm:$0xff]
        %v3251 = vld [vmem:[%s2836 + $0x121] sm:$0xff]
        %v3252 = vld [vmem:[%s2836 + $0x129] sm:$0xff]
        %v3253 = vld [vmem:[%s2836 + $0x139] sm:$0xff]
        %v3254 = vld [vmem:[%s2836 + $0x141] sm:$0xff]
        %v3255 = vld [vmem:[%s2836 + $0x151] sm:$0xff]
        %v3256 = vld [vmem:[%s2836 + $0x159] sm:$0xff]
        %v3257 = vld [vmem:[%s2836 + $0x169] sm:$0xff]
        %v3258 = vld [vmem:[%s2836 + $0x171] sm:$0xff]
        %s3259 = scalar_lea.vmem %s3, 28
        %v3260 = vld [vmem:[%s3259] sm:$0xf]
        %v3262 = vsel %vm456, %v3227, 0
        %v3265 = vsel %vm456, %v3228, 0
        %v3268 = vsel %vm456, %v3229, 0
        %v3271 = vsel %vm456, %v3230, 0
        %v3274 = vsel %vm456, %v3231, 0
        %v3277 = vsel %vm456, %v3232, 0
        %v3280 = vsel %vm456, %v3233, 0
        %v3283 = vsel %vm456, %v3234, 0
        %v3286 = vsel %vm456, %v3235, 0
        %v3289 = vsel %vm456, %v3236, 0
        %v3292 = vsel %vm456, %v3237, 0
        %v3295 = vsel %vm456, %v3238, 0
        %v3298 = vsel %vm456, %v3239, 0
        %v3301 = vsel %vm456, %v3240, 0
        %v3304 = vsel %vm456, %v3241, 0
        %v3307 = vsel %vm456, %v3242, 0
        %v3310 = vsel %vm456, %v3243, 0
        %v3313 = vsel %vm456, %v3244, 0
        %v3316 = vsel %vm456, %v3245, 0
        %v3319 = vsel %vm456, %v3246, 0
        %v3322 = vsel %vm456, %v3247, 0
        %v3325 = vsel %vm456, %v3248, 0
        %v3328 = vsel %vm456, %v3249, 0
        %v3331 = vsel %vm456, %v3250, 0
        %v3334 = vsel %vm456, %v3251, 0
        %v3337 = vsel %vm456, %v3252, 0
        %v3340 = vsel %vm456, %v3253, 0
        %v3343 = vsel %vm456, %v3254, 0
        %v3346 = vsel %vm456, %v3255, 0
        %v3349 = vsel %vm456, %v3256, 0
        %v3352 = vsel %vm456, %v3257, 0
        %v3355 = vsel %vm456, %v3258, 0
        %v3358 = vsel %vm625, %v3260, 0
        %3360 = vmatprep.subr.mxu0 0.0
        %3361 = vmatpush1.msra.mxu0 %v3358
        %3362 = vmatprep.subr.mxu0 0.0
        %3363 = vmatpush1.msra.mxu0 0.0
        %3364 = vmatprep.subr.mxu0 0.0
        %3365 = vmatpush1.msra.mxu0 0.0
        %3366 = vmatprep.subr.mxu0 0.0
        %3367 = vmatpush1.msra.mxu0 0.0
        %3368 = vmatprep.subr.mxu0 0.0
        %3369 = vmatpush1.msra.mxu0 0.0
        %3370 = vmatprep.subr.mxu0 0.0
        %3371 = vmatpush1.msra.mxu0 0.0
        %3372 = vmatprep.subr.mxu0 0.0
        %3373 = vmatpush1.msra.mxu0 0.0
        %3374 = vmatprep.subr.mxu0 0.0
        %3375 = vmatpush1.msra.mxu0 0.0
        %3376 = vmatprep.subr.mxu0 0.0
        %3377 = vmatpush1.msra.mxu0 0.0
        %3378 = vmatprep.subr.mxu0 0.0
        %3379 = vmatpush1.msra.mxu0 0.0
        %3380 = vmatprep.subr.mxu0 0.0
        %3381 = vmatpush1.msra.mxu0 0.0
        %3382 = vmatprep.subr.mxu0 0.0
        %3383 = vmatpush1.msra.mxu0 0.0
        %3384 = vmatprep.subr.mxu0 0.0
        %3385 = vmatpush1.msra.mxu0 0.0
        %3386 = vmatprep.subr.mxu0 0.0
        %3387 = vmatpush1.msra.mxu0 0.0
        %3388 = vmatprep.subr.mxu0 0.0
        %3389 = vmatpush1.msra.mxu0 0.0
        %3390 = vmatprep.subr.mxu0 0.0
        %3391 = vmatpush1.msra.mxu0 0.0
        %3392 = vmatprep.subr.mxu0 0.0
        %3393 = vmatpush1.msra.mxu0 0.0
        %3394 = vmatprep.subr.mxu0 0.0
        %3395 = vmatpush1.msra.mxu0 0.0
        %3396 = vmatprep.subr.mxu0 0.0
        %3397 = vmatpush1.msra.mxu0 0.0
        %3398 = vmatprep.subr.mxu0 0.0
        %3399 = vmatpush1.msra.mxu0 0.0
        %3400 = vmatprep.subr.mxu0 0.0
        %3401 = vmatpush1.msra.mxu0 0.0
        %3402 = vmatprep.subr.mxu0 0.0
        %3403 = vmatpush1.msra.mxu0 0.0
        %3404 = vmatprep.subr.mxu0 0.0
        %3405 = vmatpush1.msra.mxu0 0.0
        %3406 = vmatprep.subr.mxu0 0.0
        %3407 = vmatpush1.msra.mxu0 0.0
        %3408 = vmatprep.subr.mxu0 0.0
        %3409 = vmatpush1.msra.mxu0 0.0
        %3410 = vmatprep.subr.mxu0 0.0
        %3411 = vmatpush1.msra.mxu0 0.0
        %3412 = vmatprep.subr.mxu0 0.0
        %3413 = vmatpush1.msra.mxu0 0.0
        %3414 = vmatprep.subr.mxu0 0.0
        %3415 = vmatpush1.msra.mxu0 0.0
        %3416 = vmatprep.subr.mxu0 0.0
        %3417 = vmatpush1.msra.mxu0 0.0
        %3418 = vmatprep.subr.mxu0 0.0
        %3419 = vmatpush1.msra.mxu0 0.0
        %3420 = vmatprep.subr.mxu0 0.0
        %3421 = vmatpush1.msra.mxu0 0.0
        %3422 = vmatprep.subr.mxu0 0.0
        %3423 = vmatpush1.msra.mxu0 0.0
        %3424 = vmatprep.mubr.f32.mxu0 0.0
        %3425 = vmatmul.mubr.f32.gmra.mrb[0].mxu0 %v3262
        %v3426 = vpop.f32.mrb[0].mxu0
        %v3427 = vadd.f32 0.0, %v3426
        %v3428 = vpop.f32.mrb[0].mxu0
        %3429 = vmatprep.mubr.f32.mxu0 0.0
        %3430 = vmatmul.mubr.f32.gmra.mrb[0].mxu0 %v3265
        %v3431 = vpop.f32.mrb[0].mxu0
        %v3432 = vadd.f32 0.0, %v3431
        %v3433 = vpop.f32.mrb[0].mxu0
        %3434 = vmatprep.mubr.f32.mxu0 0.0
        %3435 = vmatmul.mubr.f32.gmra.mrb[0].mxu0 %v3268
        %v3436 = vpop.f32.mrb[0].mxu0
        %v3437 = vadd.f32 0.0, %v3436
        %v3438 = vpop.f32.mrb[0].mxu0
        %3439 = vmatprep.mubr.f32.mxu0 0.0
        %3440 = vmatmul.mubr.f32.gmra.mrb[0].mxu0 %v3271
        %v3441 = vpop.f32.mrb[0].mxu0
        %v3442 = vadd.f32 0.0, %v3441
        %v3443 = vpop.f32.mrb[0].mxu0
        %3444 = vmatprep.mubr.f32.mxu0 0.0
        %3445 = vmatmul.mubr.f32.gmra.mrb[0].mxu0 %v3274
        %v3446 = vpop.f32.mrb[0].mxu0
        %v3447 = vadd.f32 0.0, %v3446
        %v3448 = vpop.f32.mrb[0].mxu0
        %3449 = vmatprep.mubr.f32.mxu0 0.0
        %3450 = vmatmul.mubr.f32.gmra.mrb[0].mxu0 %v3277
        %v3451 = vpop.f32.mrb[0].mxu0
        %v3452 = vadd.f32 0.0, %v3451
        %v3453 = vpop.f32.mrb[0].mxu0
        %3454 = vmatprep.mubr.f32.mxu0 0.0
        %3455 = vmatmul.mubr.f32.gmra.mrb[0].mxu0 %v3280
        %v3456 = vpop.f32.mrb[0].mxu0
        %v3457 = vadd.f32 0.0, %v3456
        %v3458 = vpop.f32.mrb[0].mxu0
        %3459 = vmatprep.mubr.f32.mxu0 0.0
        %3460 = vmatmul.mubr.f32.gmra.mrb[0].mxu0 %v3283
        %v3461 = vpop.f32.mrb[0].mxu0
        %v3462 = vadd.f32 0.0, %v3461
        %v3463 = vpop.f32.mrb[0].mxu0
        %3464 = vmatprep.mubr.f32.mxu0 0.0
        %3465 = vmatmul.mubr.f32.gmra.mrb[0].mxu0 %v3286
        %v3466 = vpop.f32.mrb[0].mxu0
        %v3467 = vadd.f32 0.0, %v3466
        %v3468 = vpop.f32.mrb[0].mxu0
        %3469 = vmatprep.mubr.f32.mxu0 0.0
        %3470 = vmatmul.mubr.f32.gmra.mrb[0].mxu0 %v3289
        %v3471 = vpop.f32.mrb[0].mxu0
        %v3472 = vadd.f32 0.0, %v3471
        %v3473 = vpop.f32.mrb[0].mxu0
        %3474 = vmatprep.mubr.f32.mxu0 0.0
        %3475 = vmatmul.mubr.f32.gmra.mrb[0].mxu0 %v3292
        %v3476 = vpop.f32.mrb[0].mxu0
        %v3477 = vadd.f32 0.0, %v3476
        %v3478 = vpop.f32.mrb[0].mxu0
        %3479 = vmatprep.mubr.f32.mxu0 0.0
        %3480 = vmatmul.mubr.f32.gmra.mrb[0].mxu0 %v3295
        %v3481 = vpop.f32.mrb[0].mxu0
        %v3482 = vadd.f32 0.0, %v3481
        %v3483 = vpop.f32.mrb[0].mxu0
        %3484 = vmatprep.mubr.f32.mxu0 0.0
        %3485 = vmatmul.mubr.f32.gmra.mrb[0].mxu0 %v3298
        %v3486 = vpop.f32.mrb[0].mxu0
        %v3487 = vadd.f32 0.0, %v3486
        %v3488 = vpop.f32.mrb[0].mxu0
        %3489 = vmatprep.mubr.f32.mxu0 0.0
        %3490 = vmatmul.mubr.f32.gmra.mrb[0].mxu0 %v3301
        %v3491 = vpop.f32.mrb[0].mxu0
        %v3492 = vadd.f32 0.0, %v3491
        %v3493 = vpop.f32.mrb[0].mxu0
        %3494 = vmatprep.mubr.f32.mxu0 0.0
        %3495 = vmatmul.mubr.f32.gmra.mrb[0].mxu0 %v3304
        %v3496 = vpop.f32.mrb[0].mxu0
        %v3497 = vadd.f32 0.0, %v3496
        %v3498 = vpop.f32.mrb[0].mxu0
        %3499 = vmatprep.mubr.f32.mxu0 0.0
        %3500 = vmatmul.mubr.f32.gmra.mrb[0].mxu0 %v3307
        %v3501 = vpop.f32.mrb[0].mxu0
        %v3502 = vadd.f32 0.0, %v3501
        %v3503 = vpop.f32.mrb[0].mxu0
        %3504 = vmatprep.mubr.f32.mxu0 0.0
        %3505 = vmatmul.mubr.f32.gmra.mrb[0].mxu0 %v3310
        %v3506 = vpop.f32.mrb[0].mxu0
        %v3507 = vadd.f32 0.0, %v3506
        %v3508 = vpop.f32.mrb[0].mxu0
        %3509 = vmatprep.mubr.f32.mxu0 0.0
        %3510 = vmatmul.mubr.f32.gmra.mrb[0].mxu0 %v3313
        %v3511 = vpop.f32.mrb[0].mxu0
        %v3512 = vadd.f32 0.0, %v3511
        %v3513 = vpop.f32.mrb[0].mxu0
        %3514 = vmatprep.mubr.f32.mxu0 0.0
        %3515 = vmatmul.mubr.f32.gmra.mrb[0].mxu0 %v3316
        %v3516 = vpop.f32.mrb[0].mxu0
        %v3517 = vadd.f32 0.0, %v3516
        %v3518 = vpop.f32.mrb[0].mxu0
        %3519 = vmatprep.mubr.f32.mxu0 0.0
        %3520 = vmatmul.mubr.f32.gmra.mrb[0].mxu0 %v3319
        %v3521 = vpop.f32.mrb[0].mxu0
        %v3522 = vadd.f32 0.0, %v3521
        %v3523 = vpop.f32.mrb[0].mxu0
        %3524 = vmatprep.mubr.f32.mxu0 0.0
        %3525 = vmatmul.mubr.f32.gmra.mrb[0].mxu0 %v3322
        %v3526 = vpop.f32.mrb[0].mxu0
        %v3527 = vadd.f32 0.0, %v3526
        %v3528 = vpop.f32.mrb[0].mxu0
        %3529 = vmatprep.mubr.f32.mxu0 0.0
        %3530 = vmatmul.mubr.f32.gmra.mrb[0].mxu0 %v3325
        %v3531 = vpop.f32.mrb[0].mxu0
        %v3532 = vadd.f32 0.0, %v3531
        %v3533 = vpop.f32.mrb[0].mxu0
        %3534 = vmatprep.mubr.f32.mxu0 0.0
        %3535 = vmatmul.mubr.f32.gmra.mrb[0].mxu0 %v3328
        %v3536 = vpop.f32.mrb[0].mxu0
        %v3537 = vadd.f32 0.0, %v3536
        %v3538 = vpop.f32.mrb[0].mxu0
        %3539 = vmatprep.mubr.f32.mxu0 0.0
        %3540 = vmatmul.mubr.f32.gmra.mrb[0].mxu0 %v3331
        %v3541 = vpop.f32.mrb[0].mxu0
        %v3542 = vadd.f32 0.0, %v3541
        %v3543 = vpop.f32.mrb[0].mxu0
        %3544 = vmatprep.mubr.f32.mxu0 0.0
        %3545 = vmatmul.mubr.f32.gmra.mrb[0].mxu0 %v3334
        %v3546 = vpop.f32.mrb[0].mxu0
        %v3547 = vadd.f32 0.0, %v3546
        %v3548 = vpop.f32.mrb[0].mxu0
        %3549 = vmatprep.mubr.f32.mxu0 0.0
        %3550 = vmatmul.mubr.f32.gmra.mrb[0].mxu0 %v3337
        %v3551 = vpop.f32.mrb[0].mxu0
        %v3552 = vadd.f32 0.0, %v3551
        %v3553 = vpop.f32.mrb[0].mxu0
        %3554 = vmatprep.mubr.f32.mxu0 0.0
        %3555 = vmatmul.mubr.f32.gmra.mrb[0].mxu0 %v3340
        %v3556 = vpop.f32.mrb[0].mxu0
        %v3557 = vadd.f32 0.0, %v3556
        %v3558 = vpop.f32.mrb[0].mxu0
        %3559 = vmatprep.mubr.f32.mxu0 0.0
        %3560 = vmatmul.mubr.f32.gmra.mrb[0].mxu0 %v3343
        %v3561 = vpop.f32.mrb[0].mxu0
        %v3562 = vadd.f32 0.0, %v3561
        %v3563 = vpop.f32.mrb[0].mxu0
        %3564 = vmatprep.mubr.f32.mxu0 0.0
        %3565 = vmatmul.mubr.f32.gmra.mrb[0].mxu0 %v3346
        %v3566 = vpop.f32.mrb[0].mxu0
        %v3567 = vadd.f32 0.0, %v3566
        %v3568 = vpop.f32.mrb[0].mxu0
        %3569 = vmatprep.mubr.f32.mxu0 0.0
        %3570 = vmatmul.mubr.f32.gmra.mrb[0].mxu0 %v3349
        %v3571 = vpop.f32.mrb[0].mxu0
        %v3572 = vadd.f32 0.0, %v3571
        %v3573 = vpop.f32.mrb[0].mxu0
        %3574 = vmatprep.mubr.f32.mxu0 0.0
        %3575 = vmatmul.mubr.f32.gmra.mrb[0].mxu0 %v3352
        %v3576 = vpop.f32.mrb[0].mxu0
        %v3577 = vadd.f32 0.0, %v3576
        %v3578 = vpop.f32.mrb[0].mxu0
        %3579 = vmatprep.mubr.f32.mxu0 0.0
        %3580 = vmatmul.mubr.f32.gmra.mrb[0].mxu0 %v3355
        %v3581 = vpop.f32.mrb[0].mxu0
        %v3582 = vadd.f32 0.0, %v3581
        %v3583 = vpop.f32.mrb[0].mxu0
        %3584 = vdwg.mxu0
        %v3585 = vadd.f32 %v3195, %v3427
        %v3586 = vadd.f32 %v3196, %v3432
        %v3587 = vadd.f32 %v3197, %v3437
        %v3588 = vadd.f32 %v3198, %v3442
        %v3589 = vadd.f32 %v3199, %v3447
        %v3590 = vadd.f32 %v3200, %v3452
        %v3591 = vadd.f32 %v3201, %v3457
        %v3592 = vadd.f32 %v3202, %v3462
        %v3593 = vadd.f32 %v3203, %v3467
        %v3594 = vadd.f32 %v3204, %v3472
        %v3595 = vadd.f32 %v3205, %v3477
        %v3596 = vadd.f32 %v3206, %v3482
        %v3597 = vadd.f32 %v3207, %v3487
        %v3598 = vadd.f32 %v3208, %v3492
        %v3599 = vadd.f32 %v3209, %v3497
        %v3600 = vadd.f32 %v3210, %v3502
        %v3601 = vadd.f32 %v3211, %v3507
        %v3602 = vadd.f32 %v3212, %v3512
        %v3603 = vadd.f32 %v3213, %v3517
        %v3604 = vadd.f32 %v3214, %v3522
        %v3605 = vadd.f32 %v3215, %v3527
        %v3606 = vadd.f32 %v3216, %v3532
        %v3607 = vadd.f32 %v3217, %v3537
        %v3608 = vadd.f32 %v3218, %v3542
        %v3609 = vadd.f32 %v3219, %v3547
        %v3610 = vadd.f32 %v3220, %v3552
        %v3611 = vadd.f32 %v3221, %v3557
        %v3612 = vadd.f32 %v3222, %v3562
        %v3613 = vadd.f32 %v3223, %v3567
        %v3614 = vadd.f32 %v3224, %v3572
        %v3615 = vadd.f32 %v3225, %v3577
        %v3616 = vadd.f32 %v3226, %v3582
        %v3617 = vld [vmem:[%s2836 + $0x2] sm:$0xff]
        %v3618 = vld [vmem:[%s2836 + $0xa] sm:$0xff]
        %v3619 = vld [vmem:[%s2836 + $0x1a] sm:$0xff]
        %v3620 = vld [vmem:[%s2836 + $0x22] sm:$0xff]
        %v3621 = vld [vmem:[%s2836 + $0x32] sm:$0xff]
        %v3622 = vld [vmem:[%s2836 + $0x3a] sm:$0xff]
        %v3623 = vld [vmem:[%s2836 + $0x4a] sm:$0xff]
        %v3624 = vld [vmem:[%s2836 + $0x52] sm:$0xff]
        %v3625 = vld [vmem:[%s2836 + $0x62] sm:$0xff]
        %v3626 = vld [vmem:[%s2836 + $0x6a] sm:$0xff]
        %v3627 = vld [vmem:[%s2836 + $0x7a] sm:$0xff]
        %v3628 = vld [vmem:[%s2836 + $0x82] sm:$0xff]
        %v3629 = vld [vmem:[%s2836 + $0x92] sm:$0xff]
        %v3630 = vld [vmem:[%s2836 + $0x9a] sm:$0xff]
        %v3631 = vld [vmem:[%s2836 + $0xaa] sm:$0xff]
        %v3632 = vld [vmem:[%s2836 + $0xb2] sm:$0xff]
        %v3633 = vld [vmem:[%s2836 + $0xc2] sm:$0xff]
        %v3634 = vld [vmem:[%s2836 + $0xca] sm:$0xff]
        %v3635 = vld [vmem:[%s2836 + $0xda] sm:$0xff]
        %v3636 = vld [vmem:[%s2836 + $0xe2] sm:$0xff]
        %v3637 = vld [vmem:[%s2836 + $0xf2] sm:$0xff]
        %v3638 = vld [vmem:[%s2836 + $0xfa] sm:$0xff]
        %v3639 = vld [vmem:[%s2836 + $0x10a] sm:$0xff]
        %v3640 = vld [vmem:[%s2836 + $0x112] sm:$0xff]
        %v3641 = vld [vmem:[%s2836 + $0x122] sm:$0xff]
        %v3642 = vld [vmem:[%s2836 + $0x12a] sm:$0xff]
        %v3643 = vld [vmem:[%s2836 + $0x13a] sm:$0xff]
        %v3644 = vld [vmem:[%s2836 + $0x142] sm:$0xff]
        %v3645 = vld [vmem:[%s2836 + $0x152] sm:$0xff]
        %v3646 = vld [vmem:[%s2836 + $0x15a] sm:$0xff]
        %v3647 = vld [vmem:[%s2836 + $0x16a] sm:$0xff]
        %v3648 = vld [vmem:[%s2836 + $0x172] sm:$0xff]
        %s3649 = scalar_lea.vmem %s3, 32
        %v3650 = vld [vmem:[%s3649] sm:$0xf]
        %v3652 = vsel %vm456, %v3617, 0
        %v3655 = vsel %vm456, %v3618, 0
        %v3658 = vsel %vm456, %v3619, 0
        %v3661 = vsel %vm456, %v3620, 0
        %v3664 = vsel %vm456, %v3621, 0
        %v3667 = vsel %vm456, %v3622, 0
        %v3670 = vsel %vm456, %v3623, 0
        %v3673 = vsel %vm456, %v3624, 0
        %v3676 = vsel %vm456, %v3625, 0
        %v3679 = vsel %vm456, %v3626, 0
        %v3682 = vsel %vm456, %v3627, 0
        %v3685 = vsel %vm456, %v3628, 0
        %v3688 = vsel %vm456, %v3629, 0
        %v3691 = vsel %vm456, %v3630, 0
        %v3694 = vsel %vm456, %v3631, 0
        %v3697 = vsel %vm456, %v3632, 0
        %v3700 = vsel %vm456, %v3633, 0
        %v3703 = vsel %vm456, %v3634, 0
        %v3706 = vsel %vm456, %v3635, 0
        %v3709 = vsel %vm456, %v3636, 0
        %v3712 = vsel %vm456, %v3637, 0
        %v3715 = vsel %vm456, %v3638, 0
        %v3718 = vsel %vm456, %v3639, 0
        %v3721 = vsel %vm456, %v3640, 0
        %v3724 = vsel %vm456, %v3641, 0
        %v3727 = vsel %vm456, %v3642, 0
        %v3730 = vsel %vm456, %v3643, 0
        %v3733 = vsel %vm456, %v3644, 0
        %v3736 = vsel %vm456, %v3645, 0
        %v3739 = vsel %vm456, %v3646, 0
        %v3742 = vsel %vm456, %v3647, 0
        %v3745 = vsel %vm456, %v3648, 0
        %v3748 = vsel %vm625, %v3650, 0
        %3750 = vmatprep.subr.mxu0 0.0
        %3751 = vmatpush1.msra.mxu0 %v3748
        %3752 = vmatprep.subr.mxu0 0.0
        %3753 = vmatpush1.msra.mxu0 0.0
        %3754 = vmatprep.subr.mxu0 0.0
        %3755 = vmatpush1.msra.mxu0 0.0
        %3756 = vmatprep.subr.mxu0 0.0
        %3757 = vmatpush1.msra.mxu0 0.0
        %3758 = vmatprep.subr.mxu0 0.0
        %3759 = vmatpush1.msra.mxu0 0.0
        %3760 = vmatprep.subr.mxu0 0.0
        %3761 = vmatpush1.msra.mxu0 0.0
        %3762 = vmatprep.subr.mxu0 0.0
        %3763 = vmatpush1.msra.mxu0 0.0
        %3764 = vmatprep.subr.mxu0 0.0
        %3765 = vmatpush1.msra.mxu0 0.0
        %3766 = vmatprep.subr.mxu0 0.0
        %3767 = vmatpush1.msra.mxu0 0.0
        %3768 = vmatprep.subr.mxu0 0.0
        %3769 = vmatpush1.msra.mxu0 0.0
        %3770 = vmatprep.subr.mxu0 0.0
        %3771 = vmatpush1.msra.mxu0 0.0
        %3772 = vmatprep.subr.mxu0 0.0
        %3773 = vmatpush1.msra.mxu0 0.0
        %3774 = vmatprep.subr.mxu0 0.0
        %3775 = vmatpush1.msra.mxu0 0.0
        %3776 = vmatprep.subr.mxu0 0.0
        %3777 = vmatpush1.msra.mxu0 0.0
        %3778 = vmatprep.subr.mxu0 0.0
        %3779 = vmatpush1.msra.mxu0 0.0
        %3780 = vmatprep.subr.mxu0 0.0
        %3781 = vmatpush1.msra.mxu0 0.0
        %3782 = vmatprep.subr.mxu0 0.0
        %3783 = vmatpush1.msra.mxu0 0.0
        %3784 = vmatprep.subr.mxu0 0.0
        %3785 = vmatpush1.msra.mxu0 0.0
        %3786 = vmatprep.subr.mxu0 0.0
        %3787 = vmatpush1.msra.mxu0 0.0
        %3788 = vmatprep.subr.mxu0 0.0
        %3789 = vmatpush1.msra.mxu0 0.0
        %3790 = vmatprep.subr.mxu0 0.0
        %3791 = vmatpush1.msra.mxu0 0.0
        %3792 = vmatprep.subr.mxu0 0.0
        %3793 = vmatpush1.msra.mxu0 0.0
        %3794 = vmatprep.subr.mxu0 0.0
        %3795 = vmatpush1.msra.mxu0 0.0
        %3796 = vmatprep.subr.mxu0 0.0
        %3797 = vmatpush1.msra.mxu0 0.0
        %3798 = vmatprep.subr.mxu0 0.0
        %3799 = vmatpush1.msra.mxu0 0.0
        %3800 = vmatprep.subr.mxu0 0.0
        %3801 = vmatpush1.msra.mxu0 0.0
        %3802 = vmatprep.subr.mxu0 0.0
        %3803 = vmatpush1.msra.mxu0 0.0
        %3804 = vmatprep.subr.mxu0 0.0
        %3805 = vmatpush1.msra.mxu0 0.0
        %3806 = vmatprep.subr.mxu0 0.0
        %3807 = vmatpush1.msra.mxu0 0.0
        %3808 = vmatprep.subr.mxu0 0.0
        %3809 = vmatpush1.msra.mxu0 0.0
        %3810 = vmatprep.subr.mxu0 0.0
        %3811 = vmatpush1.msra.mxu0 0.0
        %3812 = vmatprep.subr.mxu0 0.0
        %3813 = vmatpush1.msra.mxu0 0.0
        %3814 = vmatprep.mubr.f32.mxu0 0.0
        %3815 = vmatmul.mubr.f32.gmra.mrb[0].mxu0 %v3652
        %v3816 = vpop.f32.mrb[0].mxu0
        %v3817 = vadd.f32 0.0, %v3816
        %v3818 = vpop.f32.mrb[0].mxu0
        %3819 = vmatprep.mubr.f32.mxu0 0.0
        %3820 = vmatmul.mubr.f32.gmra.mrb[0].mxu0 %v3655
        %v3821 = vpop.f32.mrb[0].mxu0
        %v3822 = vadd.f32 0.0, %v3821
        %v3823 = vpop.f32.mrb[0].mxu0
        %3824 = vmatprep.mubr.f32.mxu0 0.0
        %3825 = vmatmul.mubr.f32.gmra.mrb[0].mxu0 %v3658
        %v3826 = vpop.f32.mrb[0].mxu0
        %v3827 = vadd.f32 0.0, %v3826
        %v3828 = vpop.f32.mrb[0].mxu0
        %3829 = vmatprep.mubr.f32.mxu0 0.0
        %3830 = vmatmul.mubr.f32.gmra.mrb[0].mxu0 %v3661
        %v3831 = vpop.f32.mrb[0].mxu0
        %v3832 = vadd.f32 0.0, %v3831
        %v3833 = vpop.f32.mrb[0].mxu0
        %3834 = vmatprep.mubr.f32.mxu0 0.0
        %3835 = vmatmul.mubr.f32.gmra.mrb[0].mxu0 %v3664
        %v3836 = vpop.f32.mrb[0].mxu0
        %v3837 = vadd.f32 0.0, %v3836
        %v3838 = vpop.f32.mrb[0].mxu0
        %3839 = vmatprep.mubr.f32.mxu0 0.0
        %3840 = vmatmul.mubr.f32.gmra.mrb[0].mxu0 %v3667
        %v3841 = vpop.f32.mrb[0].mxu0
        %v3842 = vadd.f32 0.0, %v3841
        %v3843 = vpop.f32.mrb[0].mxu0
        %3844 = vmatprep.mubr.f32.mxu0 0.0
        %3845 = vmatmul.mubr.f32.gmra.mrb[0].mxu0 %v3670
        %v3846 = vpop.f32.mrb[0].mxu0
        %v3847 = vadd.f32 0.0, %v3846
        %v3848 = vpop.f32.mrb[0].mxu0
        %3849 = vmatprep.mubr.f32.mxu0 0.0
        %3850 = vmatmul.mubr.f32.gmra.mrb[0].mxu0 %v3673
        %v3851 = vpop.f32.mrb[0].mxu0
        %v3852 = vadd.f32 0.0, %v3851
        %v3853 = vpop.f32.mrb[0].mxu0
        %3854 = vmatprep.mubr.f32.mxu0 0.0
        %3855 = vmatmul.mubr.f32.gmra.mrb[0].mxu0 %v3676
        %v3856 = vpop.f32.mrb[0].mxu0
        %v3857 = vadd.f32 0.0, %v3856
        %v3858 = vpop.f32.mrb[0].mxu0
        %3859 = vmatprep.mubr.f32.mxu0 0.0
        %3860 = vmatmul.mubr.f32.gmra.mrb[0].mxu0 %v3679
        %v3861 = vpop.f32.mrb[0].mxu0
        %v3862 = vadd.f32 0.0, %v3861
        %v3863 = vpop.f32.mrb[0].mxu0
        %3864 = vmatprep.mubr.f32.mxu0 0.0
        %3865 = vmatmul.mubr.f32.gmra.mrb[0].mxu0 %v3682
        %v3866 = vpop.f32.mrb[0].mxu0
        %v3867 = vadd.f32 0.0, %v3866
        %v3868 = vpop.f32.mrb[0].mxu0
        %3869 = vmatprep.mubr.f32.mxu0 0.0
        %3870 = vmatmul.mubr.f32.gmra.mrb[0].mxu0 %v3685
        %v3871 = vpop.f32.mrb[0].mxu0
        %v3872 = vadd.f32 0.0, %v3871
        %v3873 = vpop.f32.mrb[0].mxu0
        %3874 = vmatprep.mubr.f32.mxu0 0.0
        %3875 = vmatmul.mubr.f32.gmra.mrb[0].mxu0 %v3688
        %v3876 = vpop.f32.mrb[0].mxu0
        %v3877 = vadd.f32 0.0, %v3876
        %v3878 = vpop.f32.mrb[0].mxu0
        %3879 = vmatprep.mubr.f32.mxu0 0.0
        %3880 = vmatmul.mubr.f32.gmra.mrb[0].mxu0 %v3691
        %v3881 = vpop.f32.mrb[0].mxu0
        %v3882 = vadd.f32 0.0, %v3881
        %v3883 = vpop.f32.mrb[0].mxu0
        %3884 = vmatprep.mubr.f32.mxu0 0.0
        %3885 = vmatmul.mubr.f32.gmra.mrb[0].mxu0 %v3694
        %v3886 = vpop.f32.mrb[0].mxu0
        %v3887 = vadd.f32 0.0, %v3886
        %v3888 = vpop.f32.mrb[0].mxu0
        %3889 = vmatprep.mubr.f32.mxu0 0.0
        %3890 = vmatmul.mubr.f32.gmra.mrb[0].mxu0 %v3697
        %v3891 = vpop.f32.mrb[0].mxu0
        %v3892 = vadd.f32 0.0, %v3891
        %v3893 = vpop.f32.mrb[0].mxu0
        %3894 = vmatprep.mubr.f32.mxu0 0.0
        %3895 = vmatmul.mubr.f32.gmra.mrb[0].mxu0 %v3700
        %v3896 = vpop.f32.mrb[0].mxu0
        %v3897 = vadd.f32 0.0, %v3896
        %v3898 = vpop.f32.mrb[0].mxu0
        %3899 = vmatprep.mubr.f32.mxu0 0.0
        %3900 = vmatmul.mubr.f32.gmra.mrb[0].mxu0 %v3703
        %v3901 = vpop.f32.mrb[0].mxu0
        %v3902 = vadd.f32 0.0, %v3901
        %v3903 = vpop.f32.mrb[0].mxu0
        %3904 = vmatprep.mubr.f32.mxu0 0.0
        %3905 = vmatmul.mubr.f32.gmra.mrb[0].mxu0 %v3706
        %v3906 = vpop.f32.mrb[0].mxu0
        %v3907 = vadd.f32 0.0, %v3906
        %v3908 = vpop.f32.mrb[0].mxu0
        %3909 = vmatprep.mubr.f32.mxu0 0.0
        %3910 = vmatmul.mubr.f32.gmra.mrb[0].mxu0 %v3709
        %v3911 = vpop.f32.mrb[0].mxu0
        %v3912 = vadd.f32 0.0, %v3911
        %v3913 = vpop.f32.mrb[0].mxu0
        %3914 = vmatprep.mubr.f32.mxu0 0.0
        %3915 = vmatmul.mubr.f32.gmra.mrb[0].mxu0 %v3712
        %v3916 = vpop.f32.mrb[0].mxu0
        %v3917 = vadd.f32 0.0, %v3916
        %v3918 = vpop.f32.mrb[0].mxu0
        %3919 = vmatprep.mubr.f32.mxu0 0.0
        %3920 = vmatmul.mubr.f32.gmra.mrb[0].mxu0 %v3715
        %v3921 = vpop.f32.mrb[0].mxu0
        %v3922 = vadd.f32 0.0, %v3921
        %v3923 = vpop.f32.mrb[0].mxu0
        %3924 = vmatprep.mubr.f32.mxu0 0.0
        %3925 = vmatmul.mubr.f32.gmra.mrb[0].mxu0 %v3718
        %v3926 = vpop.f32.mrb[0].mxu0
        %v3927 = vadd.f32 0.0, %v3926
        %v3928 = vpop.f32.mrb[0].mxu0
        %3929 = vmatprep.mubr.f32.mxu0 0.0
        %3930 = vmatmul.mubr.f32.gmra.mrb[0].mxu0 %v3721
        %v3931 = vpop.f32.mrb[0].mxu0
        %v3932 = vadd.f32 0.0, %v3931
        %v3933 = vpop.f32.mrb[0].mxu0
        %3934 = vmatprep.mubr.f32.mxu0 0.0
        %3935 = vmatmul.mubr.f32.gmra.mrb[0].mxu0 %v3724
        %v3936 = vpop.f32.mrb[0].mxu0
        %v3937 = vadd.f32 0.0, %v3936
        %v3938 = vpop.f32.mrb[0].mxu0
        %3939 = vmatprep.mubr.f32.mxu0 0.0
        %3940 = vmatmul.mubr.f32.gmra.mrb[0].mxu0 %v3727
        %v3941 = vpop.f32.mrb[0].mxu0
        %v3942 = vadd.f32 0.0, %v3941
        %v3943 = vpop.f32.mrb[0].mxu0
        %3944 = vmatprep.mubr.f32.mxu0 0.0
        %3945 = vmatmul.mubr.f32.gmra.mrb[0].mxu0 %v3730
        %v3946 = vpop.f32.mrb[0].mxu0
        %v3947 = vadd.f32 0.0, %v3946
        %v3948 = vpop.f32.mrb[0].mxu0
        %3949 = vmatprep.mubr.f32.mxu0 0.0
        %3950 = vmatmul.mubr.f32.gmra.mrb[0].mxu0 %v3733
        %v3951 = vpop.f32.mrb[0].mxu0
        %v3952 = vadd.f32 0.0, %v3951
        %v3953 = vpop.f32.mrb[0].mxu0
        %3954 = vmatprep.mubr.f32.mxu0 0.0
        %3955 = vmatmul.mubr.f32.gmra.mrb[0].mxu0 %v3736
        %v3956 = vpop.f32.mrb[0].mxu0
        %v3957 = vadd.f32 0.0, %v3956
        %v3958 = vpop.f32.mrb[0].mxu0
        %3959 = vmatprep.mubr.f32.mxu0 0.0
        %3960 = vmatmul.mubr.f32.gmra.mrb[0].mxu0 %v3739
        %v3961 = vpop.f32.mrb[0].mxu0
        %v3962 = vadd.f32 0.0, %v3961
        %v3963 = vpop.f32.mrb[0].mxu0
        %3964 = vmatprep.mubr.f32.mxu0 0.0
        %3965 = vmatmul.mubr.f32.gmra.mrb[0].mxu0 %v3742
        %v3966 = vpop.f32.mrb[0].mxu0
        %v3967 = vadd.f32 0.0, %v3966
        %v3968 = vpop.f32.mrb[0].mxu0
        %3969 = vmatprep.mubr.f32.mxu0 0.0
        %3970 = vmatmul.mubr.f32.gmra.mrb[0].mxu0 %v3745
        %v3971 = vpop.f32.mrb[0].mxu0
        %v3972 = vadd.f32 0.0, %v3971
        %v3973 = vpop.f32.mrb[0].mxu0
        %3974 = vdwg.mxu0
        %v3975 = vadd.f32 %v3585, %v3817
        %v3976 = vadd.f32 %v3586, %v3822
        %v3977 = vadd.f32 %v3587, %v3827
        %v3978 = vadd.f32 %v3588, %v3832
        %v3979 = vadd.f32 %v3589, %v3837
        %v3980 = vadd.f32 %v3590, %v3842
        %v3981 = vadd.f32 %v3591, %v3847
        %v3982 = vadd.f32 %v3592, %v3852
        %v3983 = vadd.f32 %v3593, %v3857
        %v3984 = vadd.f32 %v3594, %v3862
        %v3985 = vadd.f32 %v3595, %v3867
        %v3986 = vadd.f32 %v3596, %v3872
        %v3987 = vadd.f32 %v3597, %v3877
        %v3988 = vadd.f32 %v3598, %v3882
        %v3989 = vadd.f32 %v3599, %v3887
        %v3990 = vadd.f32 %v3600, %v3892
        %v3991 = vadd.f32 %v3601, %v3897
        %v3992 = vadd.f32 %v3602, %v3902
        %v3993 = vadd.f32 %v3603, %v3907
        %v3994 = vadd.f32 %v3604, %v3912
        %v3995 = vadd.f32 %v3605, %v3917
        %v3996 = vadd.f32 %v3606, %v3922
        %v3997 = vadd.f32 %v3607, %v3927
        %v3998 = vadd.f32 %v3608, %v3932
        %v3999 = vadd.f32 %v3609, %v3937
        %v4000 = vadd.f32 %v3610, %v3942
        %v4001 = vadd.f32 %v3611, %v3947
        %v4002 = vadd.f32 %v3612, %v3952
        %v4003 = vadd.f32 %v3613, %v3957
        %v4004 = vadd.f32 %v3614, %v3962
        %v4005 = vadd.f32 %v3615, %v3967
        %v4006 = vadd.f32 %v3616, %v3972
        %vm4007 = vcmask 64512
        %4008 = vst.msk [vmem:[%s250] sm:$0xff] %vm4007, %v3975
        %4009 = vst.msk [vmem:[%s250 + $0x8] sm:$0xff] %vm4007, %v3976
        %4010 = vst.msk [vmem:[%s250 + $0x10] sm:$0xff] %vm4007, %v3977
        %4011 = vst.msk [vmem:[%s250 + $0x18] sm:$0xff] %vm4007, %v3978
        %4012 = vst.msk [vmem:[%s250 + $0x20] sm:$0xff] %vm4007, %v3979
        %4013 = vst.msk [vmem:[%s250 + $0x28] sm:$0xff] %vm4007, %v3980
        %4014 = vst.msk [vmem:[%s250 + $0x30] sm:$0xff] %vm4007, %v3981
        %4015 = vst.msk [vmem:[%s250 + $0x38] sm:$0xff] %vm4007, %v3982
        %4016 = vst.msk [vmem:[%s250 + $0x40] sm:$0xff] %vm4007, %v3983
        %4017 = vst.msk [vmem:[%s250 + $0x48] sm:$0xff] %vm4007, %v3984
        %4018 = vst.msk [vmem:[%s250 + $0x50] sm:$0xff] %vm4007, %v3985
        %4019 = vst.msk [vmem:[%s250 + $0x58] sm:$0xff] %vm4007, %v3986
        %4020 = vst.msk [vmem:[%s250 + $0x60] sm:$0xff] %vm4007, %v3987
        %4021 = vst.msk [vmem:[%s250 + $0x68] sm:$0xff] %vm4007, %v3988
        %4022 = vst.msk [vmem:[%s250 + $0x70] sm:$0xff] %vm4007, %v3989
        %4023 = vst.msk [vmem:[%s250 + $0x78] sm:$0xff] %vm4007, %v3990
        %4024 = vst.msk [vmem:[%s250 + $0x80] sm:$0xff] %vm4007, %v3991
        %4025 = vst.msk [vmem:[%s250 + $0x88] sm:$0xff] %vm4007, %v3992
        %4026 = vst.msk [vmem:[%s250 + $0x90] sm:$0xff] %vm4007, %v3993
        %4027 = vst.msk [vmem:[%s250 + $0x98] sm:$0xff] %vm4007, %v3994
        %4028 = vst.msk [vmem:[%s250 + $0xa0] sm:$0xff] %vm4007, %v3995
        %4029 = vst.msk [vmem:[%s250 + $0xa8] sm:$0xff] %vm4007, %v3996
        %4030 = vst.msk [vmem:[%s250 + $0xb0] sm:$0xff] %vm4007, %v3997
        %4031 = vst.msk [vmem:[%s250 + $0xb8] sm:$0xff] %vm4007, %v3998
        %4032 = vst.msk [vmem:[%s250 + $0xc0] sm:$0xff] %vm4007, %v3999
        %4033 = vst.msk [vmem:[%s250 + $0xc8] sm:$0xff] %vm4007, %v4000
        %4034 = vst.msk [vmem:[%s250 + $0xd0] sm:$0xff] %vm4007, %v4001
        %4035 = vst.msk [vmem:[%s250 + $0xd8] sm:$0xff] %vm4007, %v4002
        %4036 = vst.msk [vmem:[%s250 + $0xe0] sm:$0xff] %vm4007, %v4003
        %4037 = vst.msk [vmem:[%s250 + $0xe8] sm:$0xff] %vm4007, %v4004
        %4038 = vst.msk [vmem:[%s250 + $0xf0] sm:$0xff] %vm4007, %v4005
        %4039 = vst.msk [vmem:[%s250 + $0xf8] sm:$0xff] %vm4007, %v4006
        %v4040 = vsel %vm4007, %v3975, 0.0
        %v4041 = vsel %vm4007, %v3976, 0.0
        %v4042 = vadd.f32 %v4040, %v4041
        %v4043 = vsel %vm4007, %v3977, 0.0
        %v4044 = vadd.f32 %v4042, %v4043
        %v4045 = vsel %vm4007, %v3978, 0.0
        %v4046 = vadd.f32 %v4044, %v4045
        %v4047 = vsel %vm4007, %v3979, 0.0
        %v4048 = vadd.f32 %v4046, %v4047
        %v4049 = vsel %vm4007, %v3980, 0.0
        %v4050 = vadd.f32 %v4048, %v4049
        %v4051 = vsel %vm4007, %v3981, 0.0
        %v4052 = vadd.f32 %v4050, %v4051
        %v4053 = vsel %vm4007, %v3982, 0.0
        %v4054 = vadd.f32 %v4052, %v4053
        %v4055 = vsel %vm4007, %v3983, 0.0
        %v4056 = vadd.f32 %v4054, %v4055
        %v4057 = vsel %vm4007, %v3984, 0.0
        %v4058 = vadd.f32 %v4056, %v4057
        %v4059 = vsel %vm4007, %v3985, 0.0
        %v4060 = vadd.f32 %v4058, %v4059
        %v4061 = vsel %vm4007, %v3986, 0.0
        %v4062 = vadd.f32 %v4060, %v4061
        %v4063 = vsel %vm4007, %v3987, 0.0
        %v4064 = vadd.f32 %v4062, %v4063
        %v4065 = vsel %vm4007, %v3988, 0.0
        %v4066 = vadd.f32 %v4064, %v4065
        %v4067 = vsel %vm4007, %v3989, 0.0
        %v4068 = vadd.f32 %v4066, %v4067
        %v4069 = vsel %vm4007, %v3990, 0.0
        %v4070 = vadd.f32 %v4068, %v4069
        %v4071 = vsel %vm4007, %v3991, 0.0
        %v4072 = vadd.f32 %v4070, %v4071
        %v4073 = vsel %vm4007, %v3992, 0.0
        %v4074 = vadd.f32 %v4072, %v4073
        %v4075 = vsel %vm4007, %v3993, 0.0
        %v4076 = vadd.f32 %v4074, %v4075
        %v4077 = vsel %vm4007, %v3994, 0.0
        %v4078 = vadd.f32 %v4076, %v4077
        %v4079 = vsel %vm4007, %v3995, 0.0
        %v4080 = vadd.f32 %v4078, %v4079
        %v4081 = vsel %vm4007, %v3996, 0.0
        %v4082 = vadd.f32 %v4080, %v4081
        %v4083 = vsel %vm4007, %v3997, 0.0
        %v4084 = vadd.f32 %v4082, %v4083
        %v4085 = vsel %vm4007, %v3998, 0.0
        %v4086 = vadd.f32 %v4084, %v4085
        %v4087 = vsel %vm4007, %v3999, 0.0
        %v4088 = vadd.f32 %v4086, %v4087
        %v4089 = vsel %vm4007, %v4000, 0.0
        %v4090 = vadd.f32 %v4088, %v4089
        %v4091 = vsel %vm4007, %v4001, 0.0
        %v4092 = vadd.f32 %v4090, %v4091
        %v4093 = vsel %vm4007, %v4002, 0.0
        %v4094 = vadd.f32 %v4092, %v4093
        %v4095 = vsel %vm4007, %v4003, 0.0
        %v4096 = vadd.f32 %v4094, %v4095
        %v4097 = vsel %vm4007, %v4004, 0.0
        %v4098 = vadd.f32 %v4096, %v4097
        %v4099 = vsel %vm4007, %v4005, 0.0
        %v4100 = vadd.f32 %v4098, %v4099
        %v4101 = vsel %vm4007, %v4006, 0.0
        %v4102 = vadd.f32 %v4100, %v4101
        %v4103 = vrot.slane %v4102, 4
        %v4104 = vadd.f32 %v4102, %v4103
        %v4105 = vrot.slane %v4104, 2
        %v4106 = vadd.f32 %v4104, %v4105
        %v4107 = vrot.slane %v4106, 1
        %v4108 = vadd.f32 %v4106, %v4107
        %v4109 = vmul.f32 %v3975, %v3975
        %v4110 = vmul.f32 %v3976, %v3976
        %v4111 = vmul.f32 %v3977, %v3977
        %v4112 = vmul.f32 %v3978, %v3978
        %v4113 = vmul.f32 %v3979, %v3979
        %v4114 = vmul.f32 %v3980, %v3980
        %v4115 = vmul.f32 %v3981, %v3981
        %v4116 = vmul.f32 %v3982, %v3982
        %v4117 = vmul.f32 %v3983, %v3983
        %v4118 = vmul.f32 %v3984, %v3984
        %v4119 = vmul.f32 %v3985, %v3985
        %v4120 = vmul.f32 %v3986, %v3986
        %v4121 = vmul.f32 %v3987, %v3987
        %v4122 = vmul.f32 %v3988, %v3988
        %v4123 = vmul.f32 %v3989, %v3989
        %v4124 = vmul.f32 %v3990, %v3990
        %v4125 = vmul.f32 %v3991, %v3991
        %v4126 = vmul.f32 %v3992, %v3992
        %v4127 = vmul.f32 %v3993, %v3993
        %v4128 = vmul.f32 %v3994, %v3994
        %v4129 = vmul.f32 %v3995, %v3995
        %v4130 = vmul.f32 %v3996, %v3996
        %v4131 = vmul.f32 %v3997, %v3997
        %v4132 = vmul.f32 %v3998, %v3998
        %v4133 = vmul.f32 %v3999, %v3999
        %v4134 = vmul.f32 %v4000, %v4000
        %v4135 = vmul.f32 %v4001, %v4001
        %v4136 = vmul.f32 %v4002, %v4002
        %v4137 = vmul.f32 %v4003, %v4003
        %v4138 = vmul.f32 %v4004, %v4004
        %v4139 = vmul.f32 %v4005, %v4005
        %v4140 = vmul.f32 %v4006, %v4006
        %v4141 = vsel %vm4007, %v4109, 0.0
        %v4142 = vsel %vm4007, %v4110, 0.0
        %v4143 = vadd.f32 %v4141, %v4142
        %v4144 = vsel %vm4007, %v4111, 0.0
        %v4145 = vadd.f32 %v4143, %v4144
        %v4146 = vsel %vm4007, %v4112, 0.0
        %v4147 = vadd.f32 %v4145, %v4146
        %v4148 = vsel %vm4007, %v4113, 0.0
        %v4149 = vadd.f32 %v4147, %v4148
        %v4150 = vsel %vm4007, %v4114, 0.0
        %v4151 = vadd.f32 %v4149, %v4150
        %v4152 = vsel %vm4007, %v4115, 0.0
        %v4153 = vadd.f32 %v4151, %v4152
        %v4154 = vsel %vm4007, %v4116, 0.0
        %v4155 = vadd.f32 %v4153, %v4154
        %v4156 = vsel %vm4007, %v4117, 0.0
        %v4157 = vadd.f32 %v4155, %v4156
        %v4158 = vsel %vm4007, %v4118, 0.0
        %v4159 = vadd.f32 %v4157, %v4158
        %v4160 = vsel %vm4007, %v4119, 0.0
        %v4161 = vadd.f32 %v4159, %v4160
        %v4162 = vsel %vm4007, %v4120, 0.0
        %v4163 = vadd.f32 %v4161, %v4162
        %v4164 = vsel %vm4007, %v4121, 0.0
        %v4165 = vadd.f32 %v4163, %v4164
        %v4166 = vsel %vm4007, %v4122, 0.0
        %v4167 = vadd.f32 %v4165, %v4166
        %v4168 = vsel %vm4007, %v4123, 0.0
        %v4169 = vadd.f32 %v4167, %v4168
        %v4170 = vsel %vm4007, %v4124, 0.0
        %v4171 = vadd.f32 %v4169, %v4170
        %v4172 = vsel %vm4007, %v4125, 0.0
        %v4173 = vadd.f32 %v4171, %v4172
        %v4174 = vsel %vm4007, %v4126, 0.0
        %v4175 = vadd.f32 %v4173, %v4174
        %v4176 = vsel %vm4007, %v4127, 0.0
        %v4177 = vadd.f32 %v4175, %v4176
        %v4178 = vsel %vm4007, %v4128, 0.0
        %v4179 = vadd.f32 %v4177, %v4178
        %v4180 = vsel %vm4007, %v4129, 0.0
        %v4181 = vadd.f32 %v4179, %v4180
        %v4182 = vsel %vm4007, %v4130, 0.0
        %v4183 = vadd.f32 %v4181, %v4182
        %v4184 = vsel %vm4007, %v4131, 0.0
        %v4185 = vadd.f32 %v4183, %v4184
        %v4186 = vsel %vm4007, %v4132, 0.0
        %v4187 = vadd.f32 %v4185, %v4186
        %v4188 = vsel %vm4007, %v4133, 0.0
        %v4189 = vadd.f32 %v4187, %v4188
        %v4190 = vsel %vm4007, %v4134, 0.0
        %v4191 = vadd.f32 %v4189, %v4190
        %v4192 = vsel %vm4007, %v4135, 0.0
        %v4193 = vadd.f32 %v4191, %v4192
        %v4194 = vsel %vm4007, %v4136, 0.0
        %v4195 = vadd.f32 %v4193, %v4194
        %v4196 = vsel %vm4007, %v4137, 0.0
        %v4197 = vadd.f32 %v4195, %v4196
        %v4198 = vsel %vm4007, %v4138, 0.0
        %v4199 = vadd.f32 %v4197, %v4198
        %v4200 = vsel %vm4007, %v4139, 0.0
        %v4201 = vadd.f32 %v4199, %v4200
        %v4202 = vsel %vm4007, %v4140, 0.0
        %v4203 = vadd.f32 %v4201, %v4202
        %v4204 = vrot.slane %v4203, 4
        %v4205 = vadd.f32 %v4203, %v4204
        %v4206 = vrot.slane %v4205, 2
        %v4207 = vadd.f32 %v4205, %v4206
        %v4208 = vrot.slane %v4207, 1
        %v4209 = vadd.f32 %v4207, %v4208
        %v4210 = vld [vmem:[#allocation3] sm:$0x1]
        %v4211 = vadd.f32 %v4210, %v4108
        %vm4212 = vcmask 57344
        %4213 = vst.msk [vmem:[#allocation3] sm:$0x1] %vm4212, %v4211
        %v4214 = vld [vmem:[#allocation3 + $0x1] sm:$0x1]
        %v4215 = vadd.f32 %v4214, %v4209
        %4216 = vst.msk [vmem:[#allocation3 + $0x1] sm:$0x1] %vm4212, %v4215
        %p4217 = scmp.lt.s32.totalorder %s19, 1
        %s4218 = scalar_select %p4217, %s19, 1
        %s4219 = smul.addr %s4218, 32
        %s4220 = smul.addr %s4219, 8
        %s4221 = scalar_lea.vmem %s5, %s4220
        // Predicated region
        $region45: #{tpu_custom_call.1} parent=39 // pred_check
          %p4222 = pneg %p147
        $region46: #{tpu_custom_call.1} parent=39 // pred_check_branch
          %4224 = sbr.rel (%p4222) target = $region48
        $region47: #{tpu_custom_call.1} parent=39 // pred_region
          _
        $region48: #{tpu_custom_call.1} parent=39 // pred_fallthru
          _
        // Predicated region
        $region49: #{tpu_custom_call.1} parent=39 // pred_check
          %p4225 = pneg %p168
        $region50: #{tpu_custom_call.1} parent=39 // pred_check_branch
          %4227 = sbr.rel (%p4225) target = $region52
        $region51: #{tpu_custom_call.1} parent=39 // pred_region
          %s4229 = ssub.s32 32, 32
          %4230 = vsyncadd [#allocation4], %s4229
          %s4232 = sshll.u32 [#allocation3], 4
          %s4233 = int_to_ptr.vmem [resolvable:$true] %s4232
          %4235 = dma.vmem_to_hbm [thread:$0]  %s4233, 32, %s6, [#allocation4]
        $region52: #{tpu_custom_call.1} parent=39 // pred_fallthru
          _
        // Predicated region
        $region53: #{tpu_custom_call.1} parent=39 // pred_check
          %p4236 = pneg %p168
        $region54: #{tpu_custom_call.1} parent=39 // pred_check_branch
          %4238 = sbr.rel (%p4236) target = $region56
        $region55: #{tpu_custom_call.1} parent=39 // pred_region
          %4239 = dma.done [#allocation4], 32
        $region56: #{tpu_custom_call.1} parent=39 // pred_fallthru
          _
      $region40: #{tpu_custom_call.1} parent=5 // pred_fallthru
        _
      %p4240 = scmp.le.s32.totalorder 2, %s14
      // Predicated region
      $region57: #{tpu_custom_call.1} parent=5 // pred_check
        %p4241 = pneg %p4240
      $region58: #{tpu_custom_call.1} parent=5 // pred_check_branch
        %4243 = sbr.rel (%p4241) target = $region60
      $region59: #{tpu_custom_call.1} parent=5 // pred_region
        %s4244 = ssub.s32 %s14, 2
        // Predicated region
        $region61: #{tpu_custom_call.1} parent=59 // pred_check
          %p4245 = pneg %p153
        $region62: #{tpu_custom_call.1} parent=59 // pred_check_branch
          %4247 = sbr.rel (%p4245) target = $region64
        $region63: #{tpu_custom_call.1} parent=59 // pred_region
          %p4248 = scmp.lt.s32.totalorder %s20, 1
          %s4249 = scalar_select %p4248, %s20, 1
          %s4250 = smul.addr %s4249, 32
          %s4251 = smul.addr %s4250, 8
          %s4252 = scalar_lea.vmem %s5, %s4251
        $region64: #{tpu_custom_call.1} parent=59 // pred_fallthru
          _
      $region60: #{tpu_custom_call.1} parent=5 // pred_fallthru
        _
    $region6: #{tpu_custom_call.1} parent=1 // loop_footer
      %s18 = sadd.s32 1, %s14
    $region7: #{tpu_custom_call.1} parent=1 // loop_footer_branch
      %13 = sbr.rel target = $region3
    $region8: #{tpu_custom_call.1} parent=1 // loop_exit
      _
    %4253 = vsyncpa [#allocation4], 1
    %s4254 = scalar_lea.sflag [#allocation4], 1
    %4255 = vsyncpa %s4254, 1

</llo_original>
